<compile_context>
chip_gen: v5e
topology: v5e:2x2
jax: 0.10.0
libtpu: 0.0.40
codegen_flags: <defaults>
</compile_context>

<pallas_src>
import functools
import math

import jax
import jax.numpy as jnp
from jax import lax
from jax.experimental import pallas as pl
from jax.experimental.pallas import tpu as pltpu


# ------------------------------ fused kernel -------------------------------- #

def _transformer_kernel(x_ref, pe_ref, embw_ref, embb_ref,
                        ln1g_ref, ln1b_ref, wqkv_ref, bqkv_ref,
                        wo_ref, bo_ref, ln2g_ref, ln2b_ref,
                        w1_ref, b1_ref, w2_ref, b2_ref,
                        outw_ref, outb_ref, pred_ref,
                        *, num_layers, num_heads, causal, b):
    # One batch element per grid step; everything else lives in vregs/VMEM.
    x = x_ref[0]                                           # (N, d_in) f32
    n = x.shape[0]
    D = pe_ref.shape[1]
    dh = D // num_heads
    scale = 1.0 / math.sqrt(dh)

    # embedding + positional encoding
    h0 = (jnp.dot(x, embw_ref[...], preferred_element_type=jnp.float32)
          + embb_ref[...] + pe_ref[...])                   # (N, D) f32

    if causal:
        row = lax.broadcasted_iota(jnp.int32, (n, n), 0)
        col = lax.broadcasted_iota(jnp.int32, (n, n), 1)
        neg_mask = jnp.where(col <= row, 0.0, -1e30).astype(jnp.float32)

    def layernorm(v, g, bias):
        mu = jnp.mean(v, axis=-1, keepdims=True)
        var = jnp.mean((v - mu) ** 2, axis=-1, keepdims=True)
        return (v - mu) * lax.rsqrt(var + 1e-5) * g + bias

    output = jnp.zeros_like(h0)
    for bi in range(b):                                    # static unroll (b is small)
        output = output + h0
        for l in range(num_layers):                        # static unroll over layers
            # ----- pre-norm multi-head self-attention + residual -----
            hln = layernorm(output, ln1g_ref[l], ln1b_ref[l])
            qkv = (jnp.dot(hln.astype(wqkv_ref.dtype), wqkv_ref[l],
                           preferred_element_type=jnp.float32) + bqkv_ref[l])
            q = qkv[:, 0:D] * scale                        # fold 1/sqrt(dh) into Q
            k = qkv[:, D:2 * D]
            v = qkv[:, 2 * D:3 * D]

            heads = []
            for h in range(num_heads):                     # static unroll over heads
                sl = slice(h * dh, (h + 1) * dh)
                qh = q[:, sl].astype(jnp.bfloat16)
                kh = k[:, sl].astype(jnp.bfloat16)
                vh = v[:, sl].astype(jnp.bfloat16)
                # s = q @ k.T without materializing a transpose
                s = lax.dot_general(qh, kh, (((1,), (1,)), ((), ())),
                                    preferred_element_type=jnp.float32)
                if causal:
                    s = s + neg_mask
                m = jnp.max(s, axis=-1, keepdims=True)
                p = jnp.exp(s - m)
                p = p * pl.reciprocal(jnp.sum(p, axis=-1, keepdims=True), approx=True)
                heads.append(jnp.dot(p.astype(jnp.bfloat16), vh,
                                     preferred_element_type=jnp.float32))
            ctx = jnp.concatenate(heads, axis=-1)          # (N, D)
            proj = (jnp.dot(ctx.astype(wo_ref.dtype), wo_ref[l],
                            preferred_element_type=jnp.float32) + bo_ref[l])
            output = output + proj

            # ----- pre-norm GELU MLP + residual -----
            hln2 = layernorm(output, ln2g_ref[l], ln2b_ref[l])
            h1 = (jnp.dot(hln2.astype(w1_ref.dtype), w1_ref[l],
                          preferred_element_type=jnp.float32) + b1_ref[l])
            h1 = jax.nn.gelu(h1, approximate=True)         # TODO(synk): erf vs tanh GELU
            h2 = (jnp.dot(h1.astype(w2_ref.dtype), w2_ref[l],
                          preferred_element_type=jnp.float32) + b2_ref[l])
            output = output + h2

        # output projection for this b-iteration
        pred = (jnp.dot(output, outw_ref[...], preferred_element_type=jnp.float32)
                + outb_ref[...])                           # (N, n_out)
        pred_ref[bi, 0] = pred


# ------------------------------ wrapper -------------------------------------- #

@functools.partial(jax.jit, static_argnames=("b", "method", "num_heads"))
def transformer_forward(params, x, b=1, method="softmax", num_heads=4):
    if x.ndim < 3:
        x = x[None]
    B, N, d_in = x.shape
    causal = method == "softmax"

    D = params["emb_wt"].shape[1]
    n_out = params["out_wt"].shape[1]
    L = params["wqkv_t"].shape[0]
    H = params["w1_t"].shape[2]
    pe = params["pe"][:N]

    full2 = lambda i: (0, 0)       # noqa: E731  (weight blocks are grid-invariant)
    full3 = lambda i: (0, 0, 0)    # noqa: E731

    preds_full = pl.pallas_call(
        functools.partial(_transformer_kernel, num_layers=L, num_heads=num_heads,
                          causal=causal, b=b),
        out_shape=jax.ShapeDtypeStruct((b, B, N, n_out), jnp.float32),
        grid=(B,),
        in_specs=[
            pl.BlockSpec((1, N, d_in), lambda i: (i, 0, 0)),   # x
            pl.BlockSpec((N, D), full2),                       # pe
            pl.BlockSpec((d_in, D), full2),                    # emb weight (in,out)
            pl.BlockSpec((1, D), full2),                       # emb bias
            pl.BlockSpec((L, 1, D), full3),                    # ln1 gamma
            pl.BlockSpec((L, 1, D), full3),                    # ln1 beta
            pl.BlockSpec((L, D, 3 * D), full3),                # qkv weight
            pl.BlockSpec((L, 1, 3 * D), full3),                # qkv bias
            pl.BlockSpec((L, D, D), full3),                    # out-proj weight
            pl.BlockSpec((L, 1, D), full3),                    # out-proj bias
            pl.BlockSpec((L, 1, D), full3),                    # ln2 gamma
            pl.BlockSpec((L, 1, D), full3),                    # ln2 beta
            pl.BlockSpec((L, D, H), full3),                    # fc1 weight
            pl.BlockSpec((L, 1, H), full3),                    # fc1 bias
            pl.BlockSpec((L, H, D), full3),                    # fc2 weight
            pl.BlockSpec((L, 1, D), full3),                    # fc2 bias
            pl.BlockSpec((D, n_out), full2),                   # final out weight
            pl.BlockSpec((1, n_out), full2),                   # final out bias
        ],
        out_specs=pl.BlockSpec((b, 1, N, n_out), lambda i: (0, i, 0, 0)),
        compiler_params=pltpu.CompilerParams(dimension_semantics=("parallel",)),
    )(x, pe, params["emb_wt"], params["emb_b"].reshape(1, D),
      params["ln1_g"], params["ln1_b"], params["wqkv_t"], params["bqkv"],
      params["wo_t"], params["bo"], params["ln2_g"], params["ln2_b"],
      params["w1_t"], params["b1"], params["w2_t"], params["b2"],
      params["out_wt"], params["out_b"].reshape(1, n_out))

    # reference: prediction = out(output)[:, ::2, 0]   (cheap XLA slice on tiny array)
    return [preds_full[i][:, ::2, 0] for i in range(b)]


# ------------------------------ param init ----------------------------------- #

def init_params(key, n_dims, hidden_dim, context, num_layers):
    def nrm(k, shape, scale=0.02):
        return scale * jax.random.normal(k, shape, dtype=jnp.float32)

    D = hidden_dim
    keys = jax.random.split(key, 3 + 4 * num_layers)
    params = {
        "emb_wt": nrm(keys[0], (n_dims, D)),                 # (in, out) f32
        "emb_b": jnp.zeros((D,), jnp.float32),
        "pe": nrm(keys[1], (context, D)),
        "out_wt": nrm(keys[2], (D, n_dims)),                 # (in, out) f32
        "out_b": jnp.zeros((n_dims,), jnp.float32),
        # per-layer params stacked along a leading layer axis
        "ln1_g": jnp.ones((num_layers, 1, D), jnp.float32),
        "ln1_b": jnp.zeros((num_layers, 1, D), jnp.float32),
        "ln2_g": jnp.ones((num_layers, 1, D), jnp.float32),
        "ln2_b": jnp.zeros((num_layers, 1, D), jnp.float32),
        "wqkv_t": jnp.stack([nrm(keys[3 + 4 * i + 0], (D, 3 * D))
                             for i in range(num_layers)]).astype(jnp.bfloat16),
        "bqkv": jnp.zeros((num_layers, 1, 3 * D), jnp.float32),
        "wo_t": jnp.stack([nrm(keys[3 + 4 * i + 1], (D, D))
                           for i in range(num_layers)]).astype(jnp.bfloat16),
        "bo": jnp.zeros((num_layers, 1, D), jnp.float32),
        "w1_t": jnp.stack([nrm(keys[3 + 4 * i + 2], (D, 4 * D))
                           for i in range(num_layers)]).astype(jnp.bfloat16),
        "b1": jnp.zeros((num_layers, 1, 4 * D), jnp.float32),
        "w2_t": jnp.stack([nrm(keys[3 + 4 * i + 3], (4 * D, D))
                           for i in range(num_layers)]).astype(jnp.bfloat16),
        "b2": jnp.zeros((num_layers, 1, D), jnp.float32),
    }
    return params


# --------------------------------- main --------------------------------------- #

if __name__ == "__main__":
    # config: n_dims=4, hidden_dim=32, context=16, num_layers=2, num_heads=4, method='softmax'
    n_dims, hidden_dim, context, num_layers, num_heads = 4, 32, 16, 2, 4
    B, N = 2, 8

    key = jax.random.PRNGKey(0)
    pkey, xkey = jax.random.split(key)
    params = init_params(pkey, n_dims, hidden_dim, context, num_layers)
    x = jax.random.normal(xkey, (B, N, n_dims), dtype=jnp.float32)

    preds = transformer_forward(params, x, b=2, method="softmax", num_heads=num_heads)
    for p in preds:
        jax.block_until_ready(p)

    assert len(preds) == 2 and preds[0].shape == (B, (N + 1) // 2)
    assert all(bool(jnp.all(jnp.isfinite(p))) for p in preds)
    print("KERNEL_OK")
</pallas_src>

<mosaic_0001>
module attributes {stable_mosaic.version = 11 : i64} {
  func.func @_transformer_kernel(%arg0: i32, %arg1: memref<1x8x4xf32, #tpu.memory_space<vmem>>, %arg2: memref<8x32xf32, #tpu.memory_space<vmem>>, %arg3: memref<4x32xf32, #tpu.memory_space<vmem>>, %arg4: memref<1x32xf32, #tpu.memory_space<vmem>>, %arg5: memref<2x1x32xf32, #tpu.memory_space<vmem>>, %arg6: memref<2x1x32xf32, #tpu.memory_space<vmem>>, %arg7: memref<2x32x96xbf16, #tpu.memory_space<vmem>>, %arg8: memref<2x1x96xf32, #tpu.memory_space<vmem>>, %arg9: memref<2x32x32xbf16, #tpu.memory_space<vmem>>, %arg10: memref<2x1x32xf32, #tpu.memory_space<vmem>>, %arg11: memref<2x1x32xf32, #tpu.memory_space<vmem>>, %arg12: memref<2x1x32xf32, #tpu.memory_space<vmem>>, %arg13: memref<2x32x128xbf16, #tpu.memory_space<vmem>>, %arg14: memref<2x1x128xf32, #tpu.memory_space<vmem>>, %arg15: memref<2x128x32xbf16, #tpu.memory_space<vmem>>, %arg16: memref<2x1x32xf32, #tpu.memory_space<vmem>>, %arg17: memref<32x4xf32, #tpu.memory_space<vmem>>, %arg18: memref<1x4xf32, #tpu.memory_space<vmem>>, %arg19: memref<2x1x8x4xf32, #tpu.memory_space<vmem>>) attributes {dimension_semantics = [#tpu.dimension_semantics<parallel>], iteration_bounds = array<i64: 2>, scalar_prefetch = 0 : i64, scratch_operands = 0 : i64, tpu.core_type = #tpu.core_type<tc>, window_params = [{transform_indices = @transform_0, window_bounds = array<i64: 1, 8, 4>}, {pipeline_mode = #tpu.pipeline_mode<synchronous>, transform_indices = @transform_1, window_bounds = array<i64: 8, 32>}, {pipeline_mode = #tpu.pipeline_mode<synchronous>, transform_indices = @transform_2, window_bounds = array<i64: 4, 32>}, {pipeline_mode = #tpu.pipeline_mode<synchronous>, transform_indices = @transform_3, window_bounds = array<i64: 1, 32>}, {pipeline_mode = #tpu.pipeline_mode<synchronous>, transform_indices = @transform_4, window_bounds = array<i64: 2, 1, 32>}, {pipeline_mode = #tpu.pipeline_mode<synchronous>, transform_indices = @transform_5, window_bounds = array<i64: 2, 1, 32>}, {pipeline_mode = #tpu.pipeline_mode<synchronous>, transform_indices = @transform_6, window_bounds = array<i64: 2, 32, 96>}, {pipeline_mode = #tpu.pipeline_mode<synchronous>, transform_indices = @transform_7, window_bounds = array<i64: 2, 1, 96>}, {pipeline_mode = #tpu.pipeline_mode<synchronous>, transform_indices = @transform_8, window_bounds = array<i64: 2, 32, 32>}, {pipeline_mode = #tpu.pipeline_mode<synchronous>, transform_indices = @transform_9, window_bounds = array<i64: 2, 1, 32>}, {pipeline_mode = #tpu.pipeline_mode<synchronous>, transform_indices = @transform_10, window_bounds = array<i64: 2, 1, 32>}, {pipeline_mode = #tpu.pipeline_mode<synchronous>, transform_indices = @transform_11, window_bounds = array<i64: 2, 1, 32>}, {pipeline_mode = #tpu.pipeline_mode<synchronous>, transform_indices = @transform_12, window_bounds = array<i64: 2, 32, 128>}, {pipeline_mode = #tpu.pipeline_mode<synchronous>, transform_indices = @transform_13, window_bounds = array<i64: 2, 1, 128>}, {pipeline_mode = #tpu.pipeline_mode<synchronous>, transform_indices = @transform_14, window_bounds = array<i64: 2, 128, 32>}, {pipeline_mode = #tpu.pipeline_mode<synchronous>, transform_indices = @transform_15, window_bounds = array<i64: 2, 1, 32>}, {pipeline_mode = #tpu.pipeline_mode<synchronous>, transform_indices = @transform_16, window_bounds = array<i64: 32, 4>}, {pipeline_mode = #tpu.pipeline_mode<synchronous>, transform_indices = @transform_17, window_bounds = array<i64: 1, 4>}, {transform_indices = @transform_18, window_bounds = array<i64: 2, 1, 8, 4>}]} {
    %c0 = arith.constant 0 : index
    %c0_0 = arith.constant 0 : index
    %c0_1 = arith.constant 0 : index
    %0 = vector.load %arg1[%c0, %c0_0, %c0_1] : memref<1x8x4xf32, #tpu.memory_space<vmem>>, vector<1x8x4xf32>
    %1 = vector.shape_cast %0 : vector<1x8x4xf32> to vector<8x4xf32>
    %c0_2 = arith.constant 0 : index
    %c0_3 = arith.constant 0 : index
    %2 = vector.load %arg3[%c0_2, %c0_3] : memref<4x32xf32, #tpu.memory_space<vmem>>, vector<4x32xf32>
    %cst = arith.constant dense<0.000000e+00> : vector<8x32xf32>
    %3 = tpu.matmul %1, %2, %cst {dimension_numbers = #tpu.dot_dimension_numbers<[1], [0], [0], [1], [0, 0, 1, 1], [], []>} : vector<8x4xf32>, vector<4x32xf32>, vector<8x32xf32> -> vector<8x32xf32>
    %c0_4 = arith.constant 0 : index
    %c0_5 = arith.constant 0 : index
    %4 = vector.load %arg4[%c0_4, %c0_5] : memref<1x32xf32, #tpu.memory_space<vmem>>, vector<1x32xf32>
    %5 = vector.broadcast %4 : vector<1x32xf32> to vector<8x32xf32>
    %6 = arith.addf %3, %5 : vector<8x32xf32>
    %c0_6 = arith.constant 0 : index
    %c0_7 = arith.constant 0 : index
    %7 = vector.load %arg2[%c0_6, %c0_7] : memref<8x32xf32, #tpu.memory_space<vmem>>, vector<8x32xf32>
    %8 = arith.addf %6, %7 : vector<8x32xf32>
    %9 = tpu.iota {dimensions = array<i32: 0>} : vector<8x8xi32>
    %10 = tpu.iota {dimensions = array<i32: 1>} : vector<8x8xi32>
    %11 = arith.cmpi sle, %10, %9 : vector<8x8xi32>
    %cst_8 = arith.constant 0.000000e+00 : f32
    %cst_9 = arith.constant -1.000000e+30 : f32
    %12 = vector.broadcast %cst_8 : f32 to vector<8x8xf32>
    %13 = vector.broadcast %cst_9 : f32 to vector<8x8xf32>
    %14 = arith.select %11, %12, %13 : vector<8x8xi1>, vector<8x8xf32>
    %cst_10 = arith.constant 0.000000e+00 : f32
    %15 = vector.broadcast %cst_10 : f32 to vector<8x32xf32>
    %16 = arith.addf %15, %8 : vector<8x32xf32>
    %c0_11 = arith.constant 0 : index
    %c0_12 = arith.constant 0 : index
    %c0_13 = arith.constant 0 : index
    %17 = vector.load %arg5[%c0_11, %c0_12, %c0_13] : memref<2x1x32xf32, #tpu.memory_space<vmem>>, vector<1x1x32xf32>
    %18 = vector.shape_cast %17 : vector<1x1x32xf32> to vector<1x32xf32>
    %c0_14 = arith.constant 0 : index
    %c0_15 = arith.constant 0 : index
    %c0_16 = arith.constant 0 : index
    %19 = vector.load %arg6[%c0_14, %c0_15, %c0_16] : memref<2x1x32xf32, #tpu.memory_space<vmem>>, vector<1x1x32xf32>
    %20 = vector.shape_cast %19 : vector<1x1x32xf32> to vector<1x32xf32>
    %cst_17 = arith.constant dense<0.000000e+00> : vector<8xf32>
    %21 = vector.multi_reduction <add>, %16, %cst_17 [1] : vector<8x32xf32> to vector<8xf32>
    %22 = vector.shape_cast %21 : vector<8xf32> to vector<8x1xf32>
    %cst_18 = arith.constant 3.200000e+01 : f32
    %23 = vector.broadcast %cst_18 : f32 to vector<8x1xf32>
    %24 = arith.divf %22, %23 : vector<8x1xf32>
    %25 = vector.broadcast %24 : vector<8x1xf32> to vector<8x32xf32>
    %26 = arith.subf %16, %25 : vector<8x32xf32>
    %27 = arith.mulf %26, %26 : vector<8x32xf32>
    %cst_19 = arith.constant dense<0.000000e+00> : vector<8xf32>
    %28 = vector.multi_reduction <add>, %27, %cst_19 [1] : vector<8x32xf32> to vector<8xf32>
    %29 = vector.shape_cast %28 : vector<8xf32> to vector<8x1xf32>
    %cst_20 = arith.constant 3.200000e+01 : f32
    %30 = vector.broadcast %cst_20 : f32 to vector<8x1xf32>
    %31 = arith.divf %29, %30 : vector<8x1xf32>
    %32 = vector.broadcast %24 : vector<8x1xf32> to vector<8x32xf32>
    %33 = arith.subf %16, %32 : vector<8x32xf32>
    %cst_21 = arith.constant 9.99999974E-6 : f32
    %34 = vector.broadcast %cst_21 : f32 to vector<8x1xf32>
    %35 = arith.addf %31, %34 : vector<8x1xf32>
    %36 = math.rsqrt %35 : vector<8x1xf32>
    %37 = vector.broadcast %36 : vector<8x1xf32> to vector<8x32xf32>
    %38 = arith.mulf %33, %37 : vector<8x32xf32>
    %39 = vector.broadcast %18 : vector<1x32xf32> to vector<8x32xf32>
    %40 = arith.mulf %38, %39 : vector<8x32xf32>
    %41 = vector.broadcast %20 : vector<1x32xf32> to vector<8x32xf32>
    %42 = arith.addf %40, %41 : vector<8x32xf32>
    %43 = arith.truncf %42 : vector<8x32xf32> to vector<8x32xbf16>
    %c0_22 = arith.constant 0 : index
    %c0_23 = arith.constant 0 : index
    %c0_24 = arith.constant 0 : index
    %44 = vector.load %arg7[%c0_22, %c0_23, %c0_24] : memref<2x32x96xbf16, #tpu.memory_space<vmem>>, vector<1x32x96xbf16>
    %45 = vector.shape_cast %44 : vector<1x32x96xbf16> to vector<32x96xbf16>
    %cst_25 = arith.constant dense<0.000000e+00> : vector<8x96xf32>
    %46 = tpu.matmul %43, %45, %cst_25 {dimension_numbers = #tpu.dot_dimension_numbers<[1], [0], [0], [1], [0, 0, 1, 1], [], []>} : vector<8x32xbf16>, vector<32x96xbf16>, vector<8x96xf32> -> vector<8x96xf32>
    %c0_26 = arith.constant 0 : index
    %c0_27 = arith.constant 0 : index
    %c0_28 = arith.constant 0 : index
    %47 = vector.load %arg8[%c0_26, %c0_27, %c0_28] : memref<2x1x96xf32, #tpu.memory_space<vmem>>, vector<1x1x96xf32>
    %48 = vector.shape_cast %47 : vector<1x1x96xf32> to vector<1x96xf32>
    %49 = vector.broadcast %48 : vector<1x96xf32> to vector<8x96xf32>
    %50 = arith.addf %46, %49 : vector<8x96xf32>
    %51 = vector.extract_strided_slice %50 {offsets = [0, 0], sizes = [8, 32], strides = [1, 1]} : vector<8x96xf32> to vector<8x32xf32>
    %cst_29 = arith.constant 0.353553385 : f32
    %52 = vector.broadcast %cst_29 : f32 to vector<8x32xf32>
    %53 = arith.mulf %51, %52 : vector<8x32xf32>
    %54 = vector.extract_strided_slice %50 {offsets = [0, 32], sizes = [8, 32], strides = [1, 1]} : vector<8x96xf32> to vector<8x32xf32>
    %55 = vector.extract_strided_slice %50 {offsets = [0, 64], sizes = [8, 32], strides = [1, 1]} : vector<8x96xf32> to vector<8x32xf32>
    %56 = vector.extract_strided_slice %53 {offsets = [0, 0], sizes = [8, 8], strides = [1, 1]} : vector<8x32xf32> to vector<8x8xf32>
    %57 = arith.truncf %56 : vector<8x8xf32> to vector<8x8xbf16>
    %58 = vector.extract_strided_slice %54 {offsets = [0, 0], sizes = [8, 8], strides = [1, 1]} : vector<8x32xf32> to vector<8x8xf32>
    %59 = arith.truncf %58 : vector<8x8xf32> to vector<8x8xbf16>
    %60 = vector.extract_strided_slice %55 {offsets = [0, 0], sizes = [8, 8], strides = [1, 1]} : vector<8x32xf32> to vector<8x8xf32>
    %61 = arith.truncf %60 : vector<8x8xf32> to vector<8x8xbf16>
    %cst_30 = arith.constant dense<0.000000e+00> : vector<8x8xf32>
    %62 = tpu.matmul %57, %59, %cst_30 {dimension_numbers = #tpu.dot_dimension_numbers<[1], [1], [0], [0], [0, 0, 1, 0], [], []>} : vector<8x8xbf16>, vector<8x8xbf16>, vector<8x8xf32> -> vector<8x8xf32>
    %63 = arith.addf %62, %14 : vector<8x8xf32>
    %cst_31 = arith.constant dense<0xFF800000> : vector<8xf32>
    %64 = vector.multi_reduction <maximumf>, %63, %cst_31 [1] : vector<8x8xf32> to vector<8xf32>
    %65 = vector.shape_cast %64 : vector<8xf32> to vector<8x1xf32>
    %66 = vector.broadcast %65 : vector<8x1xf32> to vector<8x8xf32>
    %67 = arith.subf %63, %66 : vector<8x8xf32>
    %68 = math.exp %67 : vector<8x8xf32>
    %cst_32 = arith.constant dense<0.000000e+00> : vector<8xf32>
    %69 = vector.multi_reduction <add>, %68, %cst_32 [1] : vector<8x8xf32> to vector<8xf32>
    %70 = vector.shape_cast %69 : vector<8xf32> to vector<8x1xf32>
    %71 = tpu.reciprocal %70 {approx = true} : vector<8x1xf32> -> vector<8x1xf32>
    %72 = vector.broadcast %71 : vector<8x1xf32> to vector<8x8xf32>
    %73 = arith.mulf %68, %72 : vector<8x8xf32>
    %74 = arith.truncf %73 : vector<8x8xf32> to vector<8x8xbf16>
    %cst_33 = arith.constant dense<0.000000e+00> : vector<8x8xf32>
    %75 = tpu.matmul %74, %61, %cst_33 {dimension_numbers = #tpu.dot_dimension_numbers<[1], [0], [0], [1], [0, 0, 1, 1], [], []>} : vector<8x8xbf16>, vector<8x8xbf16>, vector<8x8xf32> -> vector<8x8xf32>
    %76 = vector.extract_strided_slice %53 {offsets = [0, 8], sizes = [8, 8], strides = [1, 1]} : vector<8x32xf32> to vector<8x8xf32>
    %77 = arith.truncf %76 : vector<8x8xf32> to vector<8x8xbf16>
    %78 = vector.extract_strided_slice %54 {offsets = [0, 8], sizes = [8, 8], strides = [1, 1]} : vector<8x32xf32> to vector<8x8xf32>
    %79 = arith.truncf %78 : vector<8x8xf32> to vector<8x8xbf16>
    %80 = vector.extract_strided_slice %55 {offsets = [0, 8], sizes = [8, 8], strides = [1, 1]} : vector<8x32xf32> to vector<8x8xf32>
    %81 = arith.truncf %80 : vector<8x8xf32> to vector<8x8xbf16>
    %cst_34 = arith.constant dense<0.000000e+00> : vector<8x8xf32>
    %82 = tpu.matmul %77, %79, %cst_34 {dimension_numbers = #tpu.dot_dimension_numbers<[1], [1], [0], [0], [0, 0, 1, 0], [], []>} : vector<8x8xbf16>, vector<8x8xbf16>, vector<8x8xf32> -> vector<8x8xf32>
    %83 = arith.addf %82, %14 : vector<8x8xf32>
    %cst_35 = arith.constant dense<0xFF800000> : vector<8xf32>
    %84 = vector.multi_reduction <maximumf>, %83, %cst_35 [1] : vector<8x8xf32> to vector<8xf32>
    %85 = vector.shape_cast %84 : vector<8xf32> to vector<8x1xf32>
    %86 = vector.broadcast %85 : vector<8x1xf32> to vector<8x8xf32>
    %87 = arith.subf %83, %86 : vector<8x8xf32>
    %88 = math.exp %87 : vector<8x8xf32>
    %cst_36 = arith.constant dense<0.000000e+00> : vector<8xf32>
    %89 = vector.multi_reduction <add>, %88, %cst_36 [1] : vector<8x8xf32> to vector<8xf32>
    %90 = vector.shape_cast %89 : vector<8xf32> to vector<8x1xf32>
    %91 = tpu.reciprocal %90 {approx = true} : vector<8x1xf32> -> vector<8x1xf32>
    %92 = vector.broadcast %91 : vector<8x1xf32> to vector<8x8xf32>
    %93 = arith.mulf %88, %92 : vector<8x8xf32>
    %94 = arith.truncf %93 : vector<8x8xf32> to vector<8x8xbf16>
    %cst_37 = arith.constant dense<0.000000e+00> : vector<8x8xf32>
    %95 = tpu.matmul %94, %81, %cst_37 {dimension_numbers = #tpu.dot_dimension_numbers<[1], [0], [0], [1], [0, 0, 1, 1], [], []>} : vector<8x8xbf16>, vector<8x8xbf16>, vector<8x8xf32> -> vector<8x8xf32>
    %96 = vector.extract_strided_slice %53 {offsets = [0, 16], sizes = [8, 8], strides = [1, 1]} : vector<8x32xf32> to vector<8x8xf32>
    %97 = arith.truncf %96 : vector<8x8xf32> to vector<8x8xbf16>
    %98 = vector.extract_strided_slice %54 {offsets = [0, 16], sizes = [8, 8], strides = [1, 1]} : vector<8x32xf32> to vector<8x8xf32>
    %99 = arith.truncf %98 : vector<8x8xf32> to vector<8x8xbf16>
    %100 = vector.extract_strided_slice %55 {offsets = [0, 16], sizes = [8, 8], strides = [1, 1]} : vector<8x32xf32> to vector<8x8xf32>
    %101 = arith.truncf %100 : vector<8x8xf32> to vector<8x8xbf16>
    %cst_38 = arith.constant dense<0.000000e+00> : vector<8x8xf32>
    %102 = tpu.matmul %97, %99, %cst_38 {dimension_numbers = #tpu.dot_dimension_numbers<[1], [1], [0], [0], [0, 0, 1, 0], [], []>} : vector<8x8xbf16>, vector<8x8xbf16>, vector<8x8xf32> -> vector<8x8xf32>
    %103 = arith.addf %102, %14 : vector<8x8xf32>
    %cst_39 = arith.constant dense<0xFF800000> : vector<8xf32>
    %104 = vector.multi_reduction <maximumf>, %103, %cst_39 [1] : vector<8x8xf32> to vector<8xf32>
    %105 = vector.shape_cast %104 : vector<8xf32> to vector<8x1xf32>
    %106 = vector.broadcast %105 : vector<8x1xf32> to vector<8x8xf32>
    %107 = arith.subf %103, %106 : vector<8x8xf32>
    %108 = math.exp %107 : vector<8x8xf32>
    %cst_40 = arith.constant dense<0.000000e+00> : vector<8xf32>
    %109 = vector.multi_reduction <add>, %108, %cst_40 [1] : vector<8x8xf32> to vector<8xf32>
    %110 = vector.shape_cast %109 : vector<8xf32> to vector<8x1xf32>
    %111 = tpu.reciprocal %110 {approx = true} : vector<8x1xf32> -> vector<8x1xf32>
    %112 = vector.broadcast %111 : vector<8x1xf32> to vector<8x8xf32>
    %113 = arith.mulf %108, %112 : vector<8x8xf32>
    %114 = arith.truncf %113 : vector<8x8xf32> to vector<8x8xbf16>
    %cst_41 = arith.constant dense<0.000000e+00> : vector<8x8xf32>
    %115 = tpu.matmul %114, %101, %cst_41 {dimension_numbers = #tpu.dot_dimension_numbers<[1], [0], [0], [1], [0, 0, 1, 1], [], []>} : vector<8x8xbf16>, vector<8x8xbf16>, vector<8x8xf32> -> vector<8x8xf32>
    %116 = vector.extract_strided_slice %53 {offsets = [0, 24], sizes = [8, 8], strides = [1, 1]} : vector<8x32xf32> to vector<8x8xf32>
    %117 = arith.truncf %116 : vector<8x8xf32> to vector<8x8xbf16>
    %118 = vector.extract_strided_slice %54 {offsets = [0, 24], sizes = [8, 8], strides = [1, 1]} : vector<8x32xf32> to vector<8x8xf32>
    %119 = arith.truncf %118 : vector<8x8xf32> to vector<8x8xbf16>
    %120 = vector.extract_strided_slice %55 {offsets = [0, 24], sizes = [8, 8], strides = [1, 1]} : vector<8x32xf32> to vector<8x8xf32>
    %121 = arith.truncf %120 : vector<8x8xf32> to vector<8x8xbf16>
    %cst_42 = arith.constant dense<0.000000e+00> : vector<8x8xf32>
    %122 = tpu.matmul %117, %119, %cst_42 {dimension_numbers = #tpu.dot_dimension_numbers<[1], [1], [0], [0], [0, 0, 1, 0], [], []>} : vector<8x8xbf16>, vector<8x8xbf16>, vector<8x8xf32> -> vector<8x8xf32>
    %123 = arith.addf %122, %14 : vector<8x8xf32>
    %cst_43 = arith.constant dense<0xFF800000> : vector<8xf32>
    %124 = vector.multi_reduction <maximumf>, %123, %cst_43 [1] : vector<8x8xf32> to vector<8xf32>
    %125 = vector.shape_cast %124 : vector<8xf32> to vector<8x1xf32>
    %126 = vector.broadcast %125 : vector<8x1xf32> to vector<8x8xf32>
    %127 = arith.subf %123, %126 : vector<8x8xf32>
    %128 = math.exp %127 : vector<8x8xf32>
    %cst_44 = arith.constant dense<0.000000e+00> : vector<8xf32>
    %129 = vector.multi_reduction <add>, %128, %cst_44 [1] : vector<8x8xf32> to vector<8xf32>
    %130 = vector.shape_cast %129 : vector<8xf32> to vector<8x1xf32>
    %131 = tpu.reciprocal %130 {approx = true} : vector<8x1xf32> -> vector<8x1xf32>
    %132 = vector.broadcast %131 : vector<8x1xf32> to vector<8x8xf32>
    %133 = arith.mulf %128, %132 : vector<8x8xf32>
    %134 = arith.truncf %133 : vector<8x8xf32> to vector<8x8xbf16>
    %cst_45 = arith.constant dense<0.000000e+00> : vector<8x8xf32>
    %135 = tpu.matmul %134, %121, %cst_45 {dimension_numbers = #tpu.dot_dimension_numbers<[1], [0], [0], [1], [0, 0, 1, 1], [], []>} : vector<8x8xbf16>, vector<8x8xbf16>, vector<8x8xf32> -> vector<8x8xf32>
    %136 = tpu.concatenate %75, %95, %115, %135 in 1 : vector<8x8xf32>, vector<8x8xf32>, vector<8x8xf32>, vector<8x8xf32> -> vector<8x32xf32>
    %137 = arith.truncf %136 : vector<8x32xf32> to vector<8x32xbf16>
    %c0_46 = arith.constant 0 : index
    %c0_47 = arith.constant 0 : index
    %c0_48 = arith.constant 0 : index
    %138 = vector.load %arg9[%c0_46, %c0_47, %c0_48] : memref<2x32x32xbf16, #tpu.memory_space<vmem>>, vector<1x32x32xbf16>
    %139 = vector.shape_cast %138 : vector<1x32x32xbf16> to vector<32x32xbf16>
    %cst_49 = arith.constant dense<0.000000e+00> : vector<8x32xf32>
    %140 = tpu.matmul %137, %139, %cst_49 {dimension_numbers = #tpu.dot_dimension_numbers<[1], [0], [0], [1], [0, 0, 1, 1], [], []>} : vector<8x32xbf16>, vector<32x32xbf16>, vector<8x32xf32> -> vector<8x32xf32>
    %c0_50 = arith.constant 0 : index
    %c0_51 = arith.constant 0 : index
    %c0_52 = arith.constant 0 : index
    %141 = vector.load %arg10[%c0_50, %c0_51, %c0_52] : memref<2x1x32xf32, #tpu.memory_space<vmem>>, vector<1x1x32xf32>
    %142 = vector.shape_cast %141 : vector<1x1x32xf32> to vector<1x32xf32>
    %143 = vector.broadcast %142 : vector<1x32xf32> to vector<8x32xf32>
    %144 = arith.addf %140, %143 : vector<8x32xf32>
    %145 = arith.addf %16, %144 : vector<8x32xf32>
    %c0_53 = arith.constant 0 : index
    %c0_54 = arith.constant 0 : index
    %c0_55 = arith.constant 0 : index
    %146 = vector.load %arg11[%c0_53, %c0_54, %c0_55] : memref<2x1x32xf32, #tpu.memory_space<vmem>>, vector<1x1x32xf32>
    %147 = vector.shape_cast %146 : vector<1x1x32xf32> to vector<1x32xf32>
    %c0_56 = arith.constant 0 : index
    %c0_57 = arith.constant 0 : index
    %c0_58 = arith.constant 0 : index
    %148 = vector.load %arg12[%c0_56, %c0_57, %c0_58] : memref<2x1x32xf32, #tpu.memory_space<vmem>>, vector<1x1x32xf32>
    %149 = vector.shape_cast %148 : vector<1x1x32xf32> to vector<1x32xf32>
    %cst_59 = arith.constant dense<0.000000e+00> : vector<8xf32>
    %150 = vector.multi_reduction <add>, %145, %cst_59 [1] : vector<8x32xf32> to vector<8xf32>
    %151 = vector.shape_cast %150 : vector<8xf32> to vector<8x1xf32>
    %cst_60 = arith.constant 3.200000e+01 : f32
    %152 = vector.broadcast %cst_60 : f32 to vector<8x1xf32>
    %153 = arith.divf %151, %152 : vector<8x1xf32>
    %154 = vector.broadcast %153 : vector<8x1xf32> to vector<8x32xf32>
    %155 = arith.subf %145, %154 : vector<8x32xf32>
    %156 = arith.mulf %155, %155 : vector<8x32xf32>
    %cst_61 = arith.constant dense<0.000000e+00> : vector<8xf32>
    %157 = vector.multi_reduction <add>, %156, %cst_61 [1] : vector<8x32xf32> to vector<8xf32>
    %158 = vector.shape_cast %157 : vector<8xf32> to vector<8x1xf32>
    %cst_62 = arith.constant 3.200000e+01 : f32
    %159 = vector.broadcast %cst_62 : f32 to vector<8x1xf32>
    %160 = arith.divf %158, %159 : vector<8x1xf32>
    %161 = vector.broadcast %153 : vector<8x1xf32> to vector<8x32xf32>
    %162 = arith.subf %145, %161 : vector<8x32xf32>
    %cst_63 = arith.constant 9.99999974E-6 : f32
    %163 = vector.broadcast %cst_63 : f32 to vector<8x1xf32>
    %164 = arith.addf %160, %163 : vector<8x1xf32>
    %165 = math.rsqrt %164 : vector<8x1xf32>
    %166 = vector.broadcast %165 : vector<8x1xf32> to vector<8x32xf32>
    %167 = arith.mulf %162, %166 : vector<8x32xf32>
    %168 = vector.broadcast %147 : vector<1x32xf32> to vector<8x32xf32>
    %169 = arith.mulf %167, %168 : vector<8x32xf32>
    %170 = vector.broadcast %149 : vector<1x32xf32> to vector<8x32xf32>
    %171 = arith.addf %169, %170 : vector<8x32xf32>
    %172 = arith.truncf %171 : vector<8x32xf32> to vector<8x32xbf16>
    %c0_64 = arith.constant 0 : index
    %c0_65 = arith.constant 0 : index
    %c0_66 = arith.constant 0 : index
    %173 = vector.load %arg13[%c0_64, %c0_65, %c0_66] : memref<2x32x128xbf16, #tpu.memory_space<vmem>>, vector<1x32x128xbf16>
    %174 = vector.shape_cast %173 : vector<1x32x128xbf16> to vector<32x128xbf16>
    %cst_67 = arith.constant dense<0.000000e+00> : vector<8x128xf32>
    %175 = tpu.matmul %172, %174, %cst_67 {dimension_numbers = #tpu.dot_dimension_numbers<[1], [0], [0], [1], [0, 0, 1, 1], [], []>} : vector<8x32xbf16>, vector<32x128xbf16>, vector<8x128xf32> -> vector<8x128xf32>
    %c0_68 = arith.constant 0 : index
    %c0_69 = arith.constant 0 : index
    %c0_70 = arith.constant 0 : index
    %176 = vector.load %arg14[%c0_68, %c0_69, %c0_70] : memref<2x1x128xf32, #tpu.memory_space<vmem>>, vector<1x1x128xf32>
    %177 = vector.shape_cast %176 : vector<1x1x128xf32> to vector<1x128xf32>
    %178 = vector.broadcast %177 : vector<1x128xf32> to vector<8x128xf32>
    %179 = arith.addf %175, %178 : vector<8x128xf32>
    %180 = arith.mulf %179, %179 : vector<8x128xf32>
    %181 = arith.mulf %179, %180 : vector<8x128xf32>
    %cst_71 = arith.constant 4.471500e-02 : f32
    %182 = vector.broadcast %cst_71 : f32 to vector<8x128xf32>
    %183 = arith.mulf %182, %181 : vector<8x128xf32>
    %184 = arith.addf %179, %183 : vector<8x128xf32>
    %cst_72 = arith.constant 0.797884583 : f32
    %185 = vector.broadcast %cst_72 : f32 to vector<8x128xf32>
    %186 = arith.mulf %185, %184 : vector<8x128xf32>
    %187 = math.tanh %186 : vector<8x128xf32>
    %cst_73 = arith.constant 1.000000e+00 : f32
    %188 = vector.broadcast %cst_73 : f32 to vector<8x128xf32>
    %189 = arith.addf %188, %187 : vector<8x128xf32>
    %cst_74 = arith.constant 5.000000e-01 : f32
    %190 = vector.broadcast %cst_74 : f32 to vector<8x128xf32>
    %191 = arith.mulf %190, %189 : vector<8x128xf32>
    %192 = arith.mulf %179, %191 : vector<8x128xf32>
    %193 = arith.truncf %192 : vector<8x128xf32> to vector<8x128xbf16>
    %c0_75 = arith.constant 0 : index
    %c0_76 = arith.constant 0 : index
    %c0_77 = arith.constant 0 : index
    %194 = vector.load %arg15[%c0_75, %c0_76, %c0_77] : memref<2x128x32xbf16, #tpu.memory_space<vmem>>, vector<1x128x32xbf16>
    %195 = vector.shape_cast %194 : vector<1x128x32xbf16> to vector<128x32xbf16>
    %cst_78 = arith.constant dense<0.000000e+00> : vector<8x32xf32>
    %196 = tpu.matmul %193, %195, %cst_78 {dimension_numbers = #tpu.dot_dimension_numbers<[1], [0], [0], [1], [0, 0, 1, 1], [], []>} : vector<8x128xbf16>, vector<128x32xbf16>, vector<8x32xf32> -> vector<8x32xf32>
    %c0_79 = arith.constant 0 : index
    %c0_80 = arith.constant 0 : index
    %c0_81 = arith.constant 0 : index
    %197 = vector.load %arg16[%c0_79, %c0_80, %c0_81] : memref<2x1x32xf32, #tpu.memory_space<vmem>>, vector<1x1x32xf32>
    %198 = vector.shape_cast %197 : vector<1x1x32xf32> to vector<1x32xf32>
    %199 = vector.broadcast %198 : vector<1x32xf32> to vector<8x32xf32>
    %200 = arith.addf %196, %199 : vector<8x32xf32>
    %201 = arith.addf %145, %200 : vector<8x32xf32>
    %c1 = arith.constant 1 : index
    %c0_82 = arith.constant 0 : index
    %c0_83 = arith.constant 0 : index
    %202 = vector.load %arg5[%c1, %c0_82, %c0_83] : memref<2x1x32xf32, #tpu.memory_space<vmem>>, vector<1x1x32xf32>
    %203 = vector.shape_cast %202 : vector<1x1x32xf32> to vector<1x32xf32>
    %c1_84 = arith.constant 1 : index
    %c0_85 = arith.constant 0 : index
    %c0_86 = arith.constant 0 : index
    %204 = vector.load %arg6[%c1_84, %c0_85, %c0_86] : memref<2x1x32xf32, #tpu.memory_space<vmem>>, vector<1x1x32xf32>
    %205 = vector.shape_cast %204 : vector<1x1x32xf32> to vector<1x32xf32>
    %cst_87 = arith.constant dense<0.000000e+00> : vector<8xf32>
    %206 = vector.multi_reduction <add>, %201, %cst_87 [1] : vector<8x32xf32> to vector<8xf32>
    %207 = vector.shape_cast %206 : vector<8xf32> to vector<8x1xf32>
    %cst_88 = arith.constant 3.200000e+01 : f32
    %208 = vector.broadcast %cst_88 : f32 to vector<8x1xf32>
    %209 = arith.divf %207, %208 : vector<8x1xf32>
    %210 = vector.broadcast %209 : vector<8x1xf32> to vector<8x32xf32>
    %211 = arith.subf %201, %210 : vector<8x32xf32>
    %212 = arith.mulf %211, %211 : vector<8x32xf32>
    %cst_89 = arith.constant dense<0.000000e+00> : vector<8xf32>
    %213 = vector.multi_reduction <add>, %212, %cst_89 [1] : vector<8x32xf32> to vector<8xf32>
    %214 = vector.shape_cast %213 : vector<8xf32> to vector<8x1xf32>
    %cst_90 = arith.constant 3.200000e+01 : f32
    %215 = vector.broadcast %cst_90 : f32 to vector<8x1xf32>
    %216 = arith.divf %214, %215 : vector<8x1xf32>
    %217 = vector.broadcast %209 : vector<8x1xf32> to vector<8x32xf32>
    %218 = arith.subf %201, %217 : vector<8x32xf32>
    %cst_91 = arith.constant 9.99999974E-6 : f32
    %219 = vector.broadcast %cst_91 : f32 to vector<8x1xf32>
    %220 = arith.addf %216, %219 : vector<8x1xf32>
    %221 = math.rsqrt %220 : vector<8x1xf32>
    %222 = vector.broadcast %221 : vector<8x1xf32> to vector<8x32xf32>
    %223 = arith.mulf %218, %222 : vector<8x32xf32>
    %224 = vector.broadcast %203 : vector<1x32xf32> to vector<8x32xf32>
    %225 = arith.mulf %223, %224 : vector<8x32xf32>
    %226 = vector.broadcast %205 : vector<1x32xf32> to vector<8x32xf32>
    %227 = arith.addf %225, %226 : vector<8x32xf32>
    %228 = arith.truncf %227 : vector<8x32xf32> to vector<8x32xbf16>
    %c1_92 = arith.constant 1 : index
    %c0_93 = arith.constant 0 : index
    %c0_94 = arith.constant 0 : index
    %229 = vector.load %arg7[%c1_92, %c0_93, %c0_94] : memref<2x32x96xbf16, #tpu.memory_space<vmem>>, vector<1x32x96xbf16>
    %230 = vector.shape_cast %229 : vector<1x32x96xbf16> to vector<32x96xbf16>
    %cst_95 = arith.constant dense<0.000000e+00> : vector<8x96xf32>
    %231 = tpu.matmul %228, %230, %cst_95 {dimension_numbers = #tpu.dot_dimension_numbers<[1], [0], [0], [1], [0, 0, 1, 1], [], []>} : vector<8x32xbf16>, vector<32x96xbf16>, vector<8x96xf32> -> vector<8x96xf32>
    %c1_96 = arith.constant 1 : index
    %c0_97 = arith.constant 0 : index
    %c0_98 = arith.constant 0 : index
    %232 = vector.load %arg8[%c1_96, %c0_97, %c0_98] : memref<2x1x96xf32, #tpu.memory_space<vmem>>, vector<1x1x96xf32>
    %233 = vector.shape_cast %232 : vector<1x1x96xf32> to vector<1x96xf32>
    %234 = vector.broadcast %233 : vector<1x96xf32> to vector<8x96xf32>
    %235 = arith.addf %231, %234 : vector<8x96xf32>
    %236 = vector.extract_strided_slice %235 {offsets = [0, 0], sizes = [8, 32], strides = [1, 1]} : vector<8x96xf32> to vector<8x32xf32>
    %cst_99 = arith.constant 0.353553385 : f32
    %237 = vector.broadcast %cst_99 : f32 to vector<8x32xf32>
    %238 = arith.mulf %236, %237 : vector<8x32xf32>
    %239 = vector.extract_strided_slice %235 {offsets = [0, 32], sizes = [8, 32], strides = [1, 1]} : vector<8x96xf32> to vector<8x32xf32>
    %240 = vector.extract_strided_slice %235 {offsets = [0, 64], sizes = [8, 32], strides = [1, 1]} : vector<8x96xf32> to vector<8x32xf32>
    %241 = vector.extract_strided_slice %238 {offsets = [0, 0], sizes = [8, 8], strides = [1, 1]} : vector<8x32xf32> to vector<8x8xf32>
    %242 = arith.truncf %241 : vector<8x8xf32> to vector<8x8xbf16>
    %243 = vector.extract_strided_slice %239 {offsets = [0, 0], sizes = [8, 8], strides = [1, 1]} : vector<8x32xf32> to vector<8x8xf32>
    %244 = arith.truncf %243 : vector<8x8xf32> to vector<8x8xbf16>
    %245 = vector.extract_strided_slice %240 {offsets = [0, 0], sizes = [8, 8], strides = [1, 1]} : vector<8x32xf32> to vector<8x8xf32>
    %246 = arith.truncf %245 : vector<8x8xf32> to vector<8x8xbf16>
    %cst_100 = arith.constant dense<0.000000e+00> : vector<8x8xf32>
    %247 = tpu.matmul %242, %244, %cst_100 {dimension_numbers = #tpu.dot_dimension_numbers<[1], [1], [0], [0], [0, 0, 1, 0], [], []>} : vector<8x8xbf16>, vector<8x8xbf16>, vector<8x8xf32> -> vector<8x8xf32>
    %248 = arith.addf %247, %14 : vector<8x8xf32>
    %cst_101 = arith.constant dense<0xFF800000> : vector<8xf32>
    %249 = vector.multi_reduction <maximumf>, %248, %cst_101 [1] : vector<8x8xf32> to vector<8xf32>
    %250 = vector.shape_cast %249 : vector<8xf32> to vector<8x1xf32>
    %251 = vector.broadcast %250 : vector<8x1xf32> to vector<8x8xf32>
    %252 = arith.subf %248, %251 : vector<8x8xf32>
    %253 = math.exp %252 : vector<8x8xf32>
    %cst_102 = arith.constant dense<0.000000e+00> : vector<8xf32>
    %254 = vector.multi_reduction <add>, %253, %cst_102 [1] : vector<8x8xf32> to vector<8xf32>
    %255 = vector.shape_cast %254 : vector<8xf32> to vector<8x1xf32>
    %256 = tpu.reciprocal %255 {approx = true} : vector<8x1xf32> -> vector<8x1xf32>
    %257 = vector.broadcast %256 : vector<8x1xf32> to vector<8x8xf32>
    %258 = arith.mulf %253, %257 : vector<8x8xf32>
    %259 = arith.truncf %258 : vector<8x8xf32> to vector<8x8xbf16>
    %cst_103 = arith.constant dense<0.000000e+00> : vector<8x8xf32>
    %260 = tpu.matmul %259, %246, %cst_103 {dimension_numbers = #tpu.dot_dimension_numbers<[1], [0], [0], [1], [0, 0, 1, 1], [], []>} : vector<8x8xbf16>, vector<8x8xbf16>, vector<8x8xf32> -> vector<8x8xf32>
    %261 = vector.extract_strided_slice %238 {offsets = [0, 8], sizes = [8, 8], strides = [1, 1]} : vector<8x32xf32> to vector<8x8xf32>
    %262 = arith.truncf %261 : vector<8x8xf32> to vector<8x8xbf16>
    %263 = vector.extract_strided_slice %239 {offsets = [0, 8], sizes = [8, 8], strides = [1, 1]} : vector<8x32xf32> to vector<8x8xf32>
    %264 = arith.truncf %263 : vector<8x8xf32> to vector<8x8xbf16>
    %265 = vector.extract_strided_slice %240 {offsets = [0, 8], sizes = [8, 8], strides = [1, 1]} : vector<8x32xf32> to vector<8x8xf32>
    %266 = arith.truncf %265 : vector<8x8xf32> to vector<8x8xbf16>
    %cst_104 = arith.constant dense<0.000000e+00> : vector<8x8xf32>
    %267 = tpu.matmul %262, %264, %cst_104 {dimension_numbers = #tpu.dot_dimension_numbers<[1], [1], [0], [0], [0, 0, 1, 0], [], []>} : vector<8x8xbf16>, vector<8x8xbf16>, vector<8x8xf32> -> vector<8x8xf32>
    %268 = arith.addf %267, %14 : vector<8x8xf32>
    %cst_105 = arith.constant dense<0xFF800000> : vector<8xf32>
    %269 = vector.multi_reduction <maximumf>, %268, %cst_105 [1] : vector<8x8xf32> to vector<8xf32>
    %270 = vector.shape_cast %269 : vector<8xf32> to vector<8x1xf32>
    %271 = vector.broadcast %270 : vector<8x1xf32> to vector<8x8xf32>
    %272 = arith.subf %268, %271 : vector<8x8xf32>
    %273 = math.exp %272 : vector<8x8xf32>
    %cst_106 = arith.constant dense<0.000000e+00> : vector<8xf32>
    %274 = vector.multi_reduction <add>, %273, %cst_106 [1] : vector<8x8xf32> to vector<8xf32>
    %275 = vector.shape_cast %274 : vector<8xf32> to vector<8x1xf32>
    %276 = tpu.reciprocal %275 {approx = true} : vector<8x1xf32> -> vector<8x1xf32>
    %277 = vector.broadcast %276 : vector<8x1xf32> to vector<8x8xf32>
    %278 = arith.mulf %273, %277 : vector<8x8xf32>
    %279 = arith.truncf %278 : vector<8x8xf32> to vector<8x8xbf16>
    %cst_107 = arith.constant dense<0.000000e+00> : vector<8x8xf32>
    %280 = tpu.matmul %279, %266, %cst_107 {dimension_numbers = #tpu.dot_dimension_numbers<[1], [0], [0], [1], [0, 0, 1, 1], [], []>} : vector<8x8xbf16>, vector<8x8xbf16>, vector<8x8xf32> -> vector<8x8xf32>
    %281 = vector.extract_strided_slice %238 {offsets = [0, 16], sizes = [8, 8], strides = [1, 1]} : vector<8x32xf32> to vector<8x8xf32>
    %282 = arith.truncf %281 : vector<8x8xf32> to vector<8x8xbf16>
    %283 = vector.extract_strided_slice %239 {offsets = [0, 16], sizes = [8, 8], strides = [1, 1]} : vector<8x32xf32> to vector<8x8xf32>
    %284 = arith.truncf %283 : vector<8x8xf32> to vector<8x8xbf16>
    %285 = vector.extract_strided_slice %240 {offsets = [0, 16], sizes = [8, 8], strides = [1, 1]} : vector<8x32xf32> to vector<8x8xf32>
    %286 = arith.truncf %285 : vector<8x8xf32> to vector<8x8xbf16>
    %cst_108 = arith.constant dense<0.000000e+00> : vector<8x8xf32>
    %287 = tpu.matmul %282, %284, %cst_108 {dimension_numbers = #tpu.dot_dimension_numbers<[1], [1], [0], [0], [0, 0, 1, 0], [], []>} : vector<8x8xbf16>, vector<8x8xbf16>, vector<8x8xf32> -> vector<8x8xf32>
    %288 = arith.addf %287, %14 : vector<8x8xf32>
    %cst_109 = arith.constant dense<0xFF800000> : vector<8xf32>
    %289 = vector.multi_reduction <maximumf>, %288, %cst_109 [1] : vector<8x8xf32> to vector<8xf32>
    %290 = vector.shape_cast %289 : vector<8xf32> to vector<8x1xf32>
    %291 = vector.broadcast %290 : vector<8x1xf32> to vector<8x8xf32>
    %292 = arith.subf %288, %291 : vector<8x8xf32>
    %293 = math.exp %292 : vector<8x8xf32>
    %cst_110 = arith.constant dense<0.000000e+00> : vector<8xf32>
    %294 = vector.multi_reduction <add>, %293, %cst_110 [1] : vector<8x8xf32> to vector<8xf32>
    %295 = vector.shape_cast %294 : vector<8xf32> to vector<8x1xf32>
    %296 = tpu.reciprocal %295 {approx = true} : vector<8x1xf32> -> vector<8x1xf32>
    %297 = vector.broadcast %296 : vector<8x1xf32> to vector<8x8xf32>
    %298 = arith.mulf %293, %297 : vector<8x8xf32>
    %299 = arith.truncf %298 : vector<8x8xf32> to vector<8x8xbf16>
    %cst_111 = arith.constant dense<0.000000e+00> : vector<8x8xf32>
    %300 = tpu.matmul %299, %286, %cst_111 {dimension_numbers = #tpu.dot_dimension_numbers<[1], [0], [0], [1], [0, 0, 1, 1], [], []>} : vector<8x8xbf16>, vector<8x8xbf16>, vector<8x8xf32> -> vector<8x8xf32>
    %301 = vector.extract_strided_slice %238 {offsets = [0, 24], sizes = [8, 8], strides = [1, 1]} : vector<8x32xf32> to vector<8x8xf32>
    %302 = arith.truncf %301 : vector<8x8xf32> to vector<8x8xbf16>
    %303 = vector.extract_strided_slice %239 {offsets = [0, 24], sizes = [8, 8], strides = [1, 1]} : vector<8x32xf32> to vector<8x8xf32>
    %304 = arith.truncf %303 : vector<8x8xf32> to vector<8x8xbf16>
    %305 = vector.extract_strided_slice %240 {offsets = [0, 24], sizes = [8, 8], strides = [1, 1]} : vector<8x32xf32> to vector<8x8xf32>
    %306 = arith.truncf %305 : vector<8x8xf32> to vector<8x8xbf16>
    %cst_112 = arith.constant dense<0.000000e+00> : vector<8x8xf32>
    %307 = tpu.matmul %302, %304, %cst_112 {dimension_numbers = #tpu.dot_dimension_numbers<[1], [1], [0], [0], [0, 0, 1, 0], [], []>} : vector<8x8xbf16>, vector<8x8xbf16>, vector<8x8xf32> -> vector<8x8xf32>
    %308 = arith.addf %307, %14 : vector<8x8xf32>
    %cst_113 = arith.constant dense<0xFF800000> : vector<8xf32>
    %309 = vector.multi_reduction <maximumf>, %308, %cst_113 [1] : vector<8x8xf32> to vector<8xf32>
    %310 = vector.shape_cast %309 : vector<8xf32> to vector<8x1xf32>
    %311 = vector.broadcast %310 : vector<8x1xf32> to vector<8x8xf32>
    %312 = arith.subf %308, %311 : vector<8x8xf32>
    %313 = math.exp %312 : vector<8x8xf32>
    %cst_114 = arith.constant dense<0.000000e+00> : vector<8xf32>
    %314 = vector.multi_reduction <add>, %313, %cst_114 [1] : vector<8x8xf32> to vector<8xf32>
    %315 = vector.shape_cast %314 : vector<8xf32> to vector<8x1xf32>
    %316 = tpu.reciprocal %315 {approx = true} : vector<8x1xf32> -> vector<8x1xf32>
    %317 = vector.broadcast %316 : vector<8x1xf32> to vector<8x8xf32>
    %318 = arith.mulf %313, %317 : vector<8x8xf32>
    %319 = arith.truncf %318 : vector<8x8xf32> to vector<8x8xbf16>
    %cst_115 = arith.constant dense<0.000000e+00> : vector<8x8xf32>
    %320 = tpu.matmul %319, %306, %cst_115 {dimension_numbers = #tpu.dot_dimension_numbers<[1], [0], [0], [1], [0, 0, 1, 1], [], []>} : vector<8x8xbf16>, vector<8x8xbf16>, vector<8x8xf32> -> vector<8x8xf32>
    %321 = tpu.concatenate %260, %280, %300, %320 in 1 : vector<8x8xf32>, vector<8x8xf32>, vector<8x8xf32>, vector<8x8xf32> -> vector<8x32xf32>
    %322 = arith.truncf %321 : vector<8x32xf32> to vector<8x32xbf16>
    %c1_116 = arith.constant 1 : index
    %c0_117 = arith.constant 0 : index
    %c0_118 = arith.constant 0 : index
    %323 = vector.load %arg9[%c1_116, %c0_117, %c0_118] : memref<2x32x32xbf16, #tpu.memory_space<vmem>>, vector<1x32x32xbf16>
    %324 = vector.shape_cast %323 : vector<1x32x32xbf16> to vector<32x32xbf16>
    %cst_119 = arith.constant dense<0.000000e+00> : vector<8x32xf32>
    %325 = tpu.matmul %322, %324, %cst_119 {dimension_numbers = #tpu.dot_dimension_numbers<[1], [0], [0], [1], [0, 0, 1, 1], [], []>} : vector<8x32xbf16>, vector<32x32xbf16>, vector<8x32xf32> -> vector<8x32xf32>
    %c1_120 = arith.constant 1 : index
    %c0_121 = arith.constant 0 : index
    %c0_122 = arith.constant 0 : index
    %326 = vector.load %arg10[%c1_120, %c0_121, %c0_122] : memref<2x1x32xf32, #tpu.memory_space<vmem>>, vector<1x1x32xf32>
    %327 = vector.shape_cast %326 : vector<1x1x32xf32> to vector<1x32xf32>
    %328 = vector.broadcast %327 : vector<1x32xf32> to vector<8x32xf32>
    %329 = arith.addf %325, %328 : vector<8x32xf32>
    %330 = arith.addf %201, %329 : vector<8x32xf32>
    %c1_123 = arith.constant 1 : index
    %c0_124 = arith.constant 0 : index
    %c0_125 = arith.constant 0 : index
    %331 = vector.load %arg11[%c1_123, %c0_124, %c0_125] : memref<2x1x32xf32, #tpu.memory_space<vmem>>, vector<1x1x32xf32>
    %332 = vector.shape_cast %331 : vector<1x1x32xf32> to vector<1x32xf32>
    %c1_126 = arith.constant 1 : index
    %c0_127 = arith.constant 0 : index
    %c0_128 = arith.constant 0 : index
    %333 = vector.load %arg12[%c1_126, %c0_127, %c0_128] : memref<2x1x32xf32, #tpu.memory_space<vmem>>, vector<1x1x32xf32>
    %334 = vector.shape_cast %333 : vector<1x1x32xf32> to vector<1x32xf32>
    %cst_129 = arith.constant dense<0.000000e+00> : vector<8xf32>
    %335 = vector.multi_reduction <add>, %330, %cst_129 [1] : vector<8x32xf32> to vector<8xf32>
    %336 = vector.shape_cast %335 : vector<8xf32> to vector<8x1xf32>
    %cst_130 = arith.constant 3.200000e+01 : f32
    %337 = vector.broadcast %cst_130 : f32 to vector<8x1xf32>
    %338 = arith.divf %336, %337 : vector<8x1xf32>
    %339 = vector.broadcast %338 : vector<8x1xf32> to vector<8x32xf32>
    %340 = arith.subf %330, %339 : vector<8x32xf32>
    %341 = arith.mulf %340, %340 : vector<8x32xf32>
    %cst_131 = arith.constant dense<0.000000e+00> : vector<8xf32>
    %342 = vector.multi_reduction <add>, %341, %cst_131 [1] : vector<8x32xf32> to vector<8xf32>
    %343 = vector.shape_cast %342 : vector<8xf32> to vector<8x1xf32>
    %cst_132 = arith.constant 3.200000e+01 : f32
    %344 = vector.broadcast %cst_132 : f32 to vector<8x1xf32>
    %345 = arith.divf %343, %344 : vector<8x1xf32>
    %346 = vector.broadcast %338 : vector<8x1xf32> to vector<8x32xf32>
    %347 = arith.subf %330, %346 : vector<8x32xf32>
    %cst_133 = arith.constant 9.99999974E-6 : f32
    %348 = vector.broadcast %cst_133 : f32 to vector<8x1xf32>
    %349 = arith.addf %345, %348 : vector<8x1xf32>
    %350 = math.rsqrt %349 : vector<8x1xf32>
    %351 = vector.broadcast %350 : vector<8x1xf32> to vector<8x32xf32>
    %352 = arith.mulf %347, %351 : vector<8x32xf32>
    %353 = vector.broadcast %332 : vector<1x32xf32> to vector<8x32xf32>
    %354 = arith.mulf %352, %353 : vector<8x32xf32>
    %355 = vector.broadcast %334 : vector<1x32xf32> to vector<8x32xf32>
    %356 = arith.addf %354, %355 : vector<8x32xf32>
    %357 = arith.truncf %356 : vector<8x32xf32> to vector<8x32xbf16>
    %c1_134 = arith.constant 1 : index
    %c0_135 = arith.constant 0 : index
    %c0_136 = arith.constant 0 : index
    %358 = vector.load %arg13[%c1_134, %c0_135, %c0_136] : memref<2x32x128xbf16, #tpu.memory_space<vmem>>, vector<1x32x128xbf16>
    %359 = vector.shape_cast %358 : vector<1x32x128xbf16> to vector<32x128xbf16>
    %cst_137 = arith.constant dense<0.000000e+00> : vector<8x128xf32>
    %360 = tpu.matmul %357, %359, %cst_137 {dimension_numbers = #tpu.dot_dimension_numbers<[1], [0], [0], [1], [0, 0, 1, 1], [], []>} : vector<8x32xbf16>, vector<32x128xbf16>, vector<8x128xf32> -> vector<8x128xf32>
    %c1_138 = arith.constant 1 : index
    %c0_139 = arith.constant 0 : index
    %c0_140 = arith.constant 0 : index
    %361 = vector.load %arg14[%c1_138, %c0_139, %c0_140] : memref<2x1x128xf32, #tpu.memory_space<vmem>>, vector<1x1x128xf32>
    %362 = vector.shape_cast %361 : vector<1x1x128xf32> to vector<1x128xf32>
    %363 = vector.broadcast %362 : vector<1x128xf32> to vector<8x128xf32>
    %364 = arith.addf %360, %363 : vector<8x128xf32>
    %365 = arith.mulf %364, %364 : vector<8x128xf32>
    %366 = arith.mulf %364, %365 : vector<8x128xf32>
    %cst_141 = arith.constant 4.471500e-02 : f32
    %367 = vector.broadcast %cst_141 : f32 to vector<8x128xf32>
    %368 = arith.mulf %367, %366 : vector<8x128xf32>
    %369 = arith.addf %364, %368 : vector<8x128xf32>
    %cst_142 = arith.constant 0.797884583 : f32
    %370 = vector.broadcast %cst_142 : f32 to vector<8x128xf32>
    %371 = arith.mulf %370, %369 : vector<8x128xf32>
    %372 = math.tanh %371 : vector<8x128xf32>
    %cst_143 = arith.constant 1.000000e+00 : f32
    %373 = vector.broadcast %cst_143 : f32 to vector<8x128xf32>
    %374 = arith.addf %373, %372 : vector<8x128xf32>
    %cst_144 = arith.constant 5.000000e-01 : f32
    %375 = vector.broadcast %cst_144 : f32 to vector<8x128xf32>
    %376 = arith.mulf %375, %374 : vector<8x128xf32>
    %377 = arith.mulf %364, %376 : vector<8x128xf32>
    %378 = arith.truncf %377 : vector<8x128xf32> to vector<8x128xbf16>
    %c1_145 = arith.constant 1 : index
    %c0_146 = arith.constant 0 : index
    %c0_147 = arith.constant 0 : index
    %379 = vector.load %arg15[%c1_145, %c0_146, %c0_147] : memref<2x128x32xbf16, #tpu.memory_space<vmem>>, vector<1x128x32xbf16>
    %380 = vector.shape_cast %379 : vector<1x128x32xbf16> to vector<128x32xbf16>
    %cst_148 = arith.constant dense<0.000000e+00> : vector<8x32xf32>
    %381 = tpu.matmul %378, %380, %cst_148 {dimension_numbers = #tpu.dot_dimension_numbers<[1], [0], [0], [1], [0, 0, 1, 1], [], []>} : vector<8x128xbf16>, vector<128x32xbf16>, vector<8x32xf32> -> vector<8x32xf32>
    %c1_149 = arith.constant 1 : index
    %c0_150 = arith.constant 0 : index
    %c0_151 = arith.constant 0 : index
    %382 = vector.load %arg16[%c1_149, %c0_150, %c0_151] : memref<2x1x32xf32, #tpu.memory_space<vmem>>, vector<1x1x32xf32>
    %383 = vector.shape_cast %382 : vector<1x1x32xf32> to vector<1x32xf32>
    %384 = vector.broadcast %383 : vector<1x32xf32> to vector<8x32xf32>
    %385 = arith.addf %381, %384 : vector<8x32xf32>
    %386 = arith.addf %330, %385 : vector<8x32xf32>
    %c0_152 = arith.constant 0 : index
    %c0_153 = arith.constant 0 : index
    %387 = vector.load %arg17[%c0_152, %c0_153] : memref<32x4xf32, #tpu.memory_space<vmem>>, vector<32x4xf32>
    %cst_154 = arith.constant dense<0.000000e+00> : vector<8x4xf32>
    %388 = tpu.matmul %386, %387, %cst_154 {dimension_numbers = #tpu.dot_dimension_numbers<[1], [0], [0], [1], [0, 0, 1, 1], [], []>} : vector<8x32xf32>, vector<32x4xf32>, vector<8x4xf32> -> vector<8x4xf32>
    %c0_155 = arith.constant 0 : index
    %c0_156 = arith.constant 0 : index
    %389 = vector.load %arg18[%c0_155, %c0_156] : memref<1x4xf32, #tpu.memory_space<vmem>>, vector<1x4xf32>
    %390 = vector.broadcast %389 : vector<1x4xf32> to vector<8x4xf32>
    %391 = arith.addf %388, %390 : vector<8x4xf32>
    %c0_157 = arith.constant 0 : index
    %c0_158 = arith.constant 0 : index
    %c0_159 = arith.constant 0 : index
    %c0_160 = arith.constant 0 : index
    %392 = vector.load %arg19[%c0_157, %c0_158, %c0_159, %c0_160] : memref<2x1x8x4xf32, #tpu.memory_space<vmem>>, vector<1x1x8x4xf32>
    %393 = vector.shape_cast %392 : vector<1x1x8x4xf32> to vector<8x4xf32>
    %394 = vector.shape_cast %391 : vector<8x4xf32> to vector<1x1x8x4xf32>
    tpu.vector_store %arg19[%c0_157, %c0_158, %c0_159, %c0_160], %394 {strides = array<i32>} : memref<2x1x8x4xf32, #tpu.memory_space<vmem>>, vector<1x1x8x4xf32>,
    %395 = arith.addf %386, %8 : vector<8x32xf32>
    %c0_161 = arith.constant 0 : index
    %c0_162 = arith.constant 0 : index
    %c0_163 = arith.constant 0 : index
    %396 = vector.load %arg5[%c0_161, %c0_162, %c0_163] : memref<2x1x32xf32, #tpu.memory_space<vmem>>, vector<1x1x32xf32>
    %397 = vector.shape_cast %396 : vector<1x1x32xf32> to vector<1x32xf32>
    %c0_164 = arith.constant 0 : index
    %c0_165 = arith.constant 0 : index
    %c0_166 = arith.constant 0 : index
    %398 = vector.load %arg6[%c0_164, %c0_165, %c0_166] : memref<2x1x32xf32, #tpu.memory_space<vmem>>, vector<1x1x32xf32>
    %399 = vector.shape_cast %398 : vector<1x1x32xf32> to vector<1x32xf32>
    %cst_167 = arith.constant dense<0.000000e+00> : vector<8xf32>
    %400 = vector.multi_reduction <add>, %395, %cst_167 [1] : vector<8x32xf32> to vector<8xf32>
    %401 = vector.shape_cast %400 : vector<8xf32> to vector<8x1xf32>
    %cst_168 = arith.constant 3.200000e+01 : f32
    %402 = vector.broadcast %cst_168 : f32 to vector<8x1xf32>
    %403 = arith.divf %401, %402 : vector<8x1xf32>
    %404 = vector.broadcast %403 : vector<8x1xf32> to vector<8x32xf32>
    %405 = arith.subf %395, %404 : vector<8x32xf32>
    %406 = arith.mulf %405, %405 : vector<8x32xf32>
    %cst_169 = arith.constant dense<0.000000e+00> : vector<8xf32>
    %407 = vector.multi_reduction <add>, %406, %cst_169 [1] : vector<8x32xf32> to vector<8xf32>
    %408 = vector.shape_cast %407 : vector<8xf32> to vector<8x1xf32>
    %cst_170 = arith.constant 3.200000e+01 : f32
    %409 = vector.broadcast %cst_170 : f32 to vector<8x1xf32>
    %410 = arith.divf %408, %409 : vector<8x1xf32>
    %411 = vector.broadcast %403 : vector<8x1xf32> to vector<8x32xf32>
    %412 = arith.subf %395, %411 : vector<8x32xf32>
    %cst_171 = arith.constant 9.99999974E-6 : f32
    %413 = vector.broadcast %cst_171 : f32 to vector<8x1xf32>
    %414 = arith.addf %410, %413 : vector<8x1xf32>
    %415 = math.rsqrt %414 : vector<8x1xf32>
    %416 = vector.broadcast %415 : vector<8x1xf32> to vector<8x32xf32>
    %417 = arith.mulf %412, %416 : vector<8x32xf32>
    %418 = vector.broadcast %397 : vector<1x32xf32> to vector<8x32xf32>
    %419 = arith.mulf %417, %418 : vector<8x32xf32>
    %420 = vector.broadcast %399 : vector<1x32xf32> to vector<8x32xf32>
    %421 = arith.addf %419, %420 : vector<8x32xf32>
    %422 = arith.truncf %421 : vector<8x32xf32> to vector<8x32xbf16>
    %c0_172 = arith.constant 0 : index
    %c0_173 = arith.constant 0 : index
    %c0_174 = arith.constant 0 : index
    %423 = vector.load %arg7[%c0_172, %c0_173, %c0_174] : memref<2x32x96xbf16, #tpu.memory_space<vmem>>, vector<1x32x96xbf16>
    %424 = vector.shape_cast %423 : vector<1x32x96xbf16> to vector<32x96xbf16>
    %cst_175 = arith.constant dense<0.000000e+00> : vector<8x96xf32>
    %425 = tpu.matmul %422, %424, %cst_175 {dimension_numbers = #tpu.dot_dimension_numbers<[1], [0], [0], [1], [0, 0, 1, 1], [], []>} : vector<8x32xbf16>, vector<32x96xbf16>, vector<8x96xf32> -> vector<8x96xf32>
    %c0_176 = arith.constant 0 : index
    %c0_177 = arith.constant 0 : index
    %c0_178 = arith.constant 0 : index
    %426 = vector.load %arg8[%c0_176, %c0_177, %c0_178] : memref<2x1x96xf32, #tpu.memory_space<vmem>>, vector<1x1x96xf32>
    %427 = vector.shape_cast %426 : vector<1x1x96xf32> to vector<1x96xf32>
    %428 = vector.broadcast %427 : vector<1x96xf32> to vector<8x96xf32>
    %429 = arith.addf %425, %428 : vector<8x96xf32>
    %430 = vector.extract_strided_slice %429 {offsets = [0, 0], sizes = [8, 32], strides = [1, 1]} : vector<8x96xf32> to vector<8x32xf32>
    %cst_179 = arith.constant 0.353553385 : f32
    %431 = vector.broadcast %cst_179 : f32 to vector<8x32xf32>
    %432 = arith.mulf %430, %431 : vector<8x32xf32>
    %433 = vector.extract_strided_slice %429 {offsets = [0, 32], sizes = [8, 32], strides = [1, 1]} : vector<8x96xf32> to vector<8x32xf32>
    %434 = vector.extract_strided_slice %429 {offsets = [0, 64], sizes = [8, 32], strides = [1, 1]} : vector<8x96xf32> to vector<8x32xf32>
    %435 = vector.extract_strided_slice %432 {offsets = [0, 0], sizes = [8, 8], strides = [1, 1]} : vector<8x32xf32> to vector<8x8xf32>
    %436 = arith.truncf %435 : vector<8x8xf32> to vector<8x8xbf16>
    %437 = vector.extract_strided_slice %433 {offsets = [0, 0], sizes = [8, 8], strides = [1, 1]} : vector<8x32xf32> to vector<8x8xf32>
    %438 = arith.truncf %437 : vector<8x8xf32> to vector<8x8xbf16>
    %439 = vector.extract_strided_slice %434 {offsets = [0, 0], sizes = [8, 8], strides = [1, 1]} : vector<8x32xf32> to vector<8x8xf32>
    %440 = arith.truncf %439 : vector<8x8xf32> to vector<8x8xbf16>
    %cst_180 = arith.constant dense<0.000000e+00> : vector<8x8xf32>
    %441 = tpu.matmul %436, %438, %cst_180 {dimension_numbers = #tpu.dot_dimension_numbers<[1], [1], [0], [0], [0, 0, 1, 0], [], []>} : vector<8x8xbf16>, vector<8x8xbf16>, vector<8x8xf32> -> vector<8x8xf32>
    %442 = arith.addf %441, %14 : vector<8x8xf32>
    %cst_181 = arith.constant dense<0xFF800000> : vector<8xf32>
    %443 = vector.multi_reduction <maximumf>, %442, %cst_181 [1] : vector<8x8xf32> to vector<8xf32>
    %444 = vector.shape_cast %443 : vector<8xf32> to vector<8x1xf32>
    %445 = vector.broadcast %444 : vector<8x1xf32> to vector<8x8xf32>
    %446 = arith.subf %442, %445 : vector<8x8xf32>
    %447 = math.exp %446 : vector<8x8xf32>
    %cst_182 = arith.constant dense<0.000000e+00> : vector<8xf32>
    %448 = vector.multi_reduction <add>, %447, %cst_182 [1] : vector<8x8xf32> to vector<8xf32>
    %449 = vector.shape_cast %448 : vector<8xf32> to vector<8x1xf32>
    %450 = tpu.reciprocal %449 {approx = true} : vector<8x1xf32> -> vector<8x1xf32>
    %451 = vector.broadcast %450 : vector<8x1xf32> to vector<8x8xf32>
    %452 = arith.mulf %447, %451 : vector<8x8xf32>
    %453 = arith.truncf %452 : vector<8x8xf32> to vector<8x8xbf16>
    %cst_183 = arith.constant dense<0.000000e+00> : vector<8x8xf32>
    %454 = tpu.matmul %453, %440, %cst_183 {dimension_numbers = #tpu.dot_dimension_numbers<[1], [0], [0], [1], [0, 0, 1, 1], [], []>} : vector<8x8xbf16>, vector<8x8xbf16>, vector<8x8xf32> -> vector<8x8xf32>
    %455 = vector.extract_strided_slice %432 {offsets = [0, 8], sizes = [8, 8], strides = [1, 1]} : vector<8x32xf32> to vector<8x8xf32>
    %456 = arith.truncf %455 : vector<8x8xf32> to vector<8x8xbf16>
    %457 = vector.extract_strided_slice %433 {offsets = [0, 8], sizes = [8, 8], strides = [1, 1]} : vector<8x32xf32> to vector<8x8xf32>
    %458 = arith.truncf %457 : vector<8x8xf32> to vector<8x8xbf16>
    %459 = vector.extract_strided_slice %434 {offsets = [0, 8], sizes = [8, 8], strides = [1, 1]} : vector<8x32xf32> to vector<8x8xf32>
    %460 = arith.truncf %459 : vector<8x8xf32> to vector<8x8xbf16>
    %cst_184 = arith.constant dense<0.000000e+00> : vector<8x8xf32>
    %461 = tpu.matmul %456, %458, %cst_184 {dimension_numbers = #tpu.dot_dimension_numbers<[1], [1], [0], [0], [0, 0, 1, 0], [], []>} : vector<8x8xbf16>, vector<8x8xbf16>, vector<8x8xf32> -> vector<8x8xf32>
    %462 = arith.addf %461, %14 : vector<8x8xf32>
    %cst_185 = arith.constant dense<0xFF800000> : vector<8xf32>
    %463 = vector.multi_reduction <maximumf>, %462, %cst_185 [1] : vector<8x8xf32> to vector<8xf32>
    %464 = vector.shape_cast %463 : vector<8xf32> to vector<8x1xf32>
    %465 = vector.broadcast %464 : vector<8x1xf32> to vector<8x8xf32>
    %466 = arith.subf %462, %465 : vector<8x8xf32>
    %467 = math.exp %466 : vector<8x8xf32>
    %cst_186 = arith.constant dense<0.000000e+00> : vector<8xf32>
    %468 = vector.multi_reduction <add>, %467, %cst_186 [1] : vector<8x8xf32> to vector<8xf32>
    %469 = vector.shape_cast %468 : vector<8xf32> to vector<8x1xf32>
    %470 = tpu.reciprocal %469 {approx = true} : vector<8x1xf32> -> vector<8x1xf32>
    %471 = vector.broadcast %470 : vector<8x1xf32> to vector<8x8xf32>
    %472 = arith.mulf %467, %471 : vector<8x8xf32>
    %473 = arith.truncf %472 : vector<8x8xf32> to vector<8x8xbf16>
    %cst_187 = arith.constant dense<0.000000e+00> : vector<8x8xf32>
    %474 = tpu.matmul %473, %460, %cst_187 {dimension_numbers = #tpu.dot_dimension_numbers<[1], [0], [0], [1], [0, 0, 1, 1], [], []>} : vector<8x8xbf16>, vector<8x8xbf16>, vector<8x8xf32> -> vector<8x8xf32>
    %475 = vector.extract_strided_slice %432 {offsets = [0, 16], sizes = [8, 8], strides = [1, 1]} : vector<8x32xf32> to vector<8x8xf32>
    %476 = arith.truncf %475 : vector<8x8xf32> to vector<8x8xbf16>
    %477 = vector.extract_strided_slice %433 {offsets = [0, 16], sizes = [8, 8], strides = [1, 1]} : vector<8x32xf32> to vector<8x8xf32>
    %478 = arith.truncf %477 : vector<8x8xf32> to vector<8x8xbf16>
    %479 = vector.extract_strided_slice %434 {offsets = [0, 16], sizes = [8, 8], strides = [1, 1]} : vector<8x32xf32> to vector<8x8xf32>
    %480 = arith.truncf %479 : vector<8x8xf32> to vector<8x8xbf16>
    %cst_188 = arith.constant dense<0.000000e+00> : vector<8x8xf32>
    %481 = tpu.matmul %476, %478, %cst_188 {dimension_numbers = #tpu.dot_dimension_numbers<[1], [1], [0], [0], [0, 0, 1, 0], [], []>} : vector<8x8xbf16>, vector<8x8xbf16>, vector<8x8xf32> -> vector<8x8xf32>
    %482 = arith.addf %481, %14 : vector<8x8xf32>
    %cst_189 = arith.constant dense<0xFF800000> : vector<8xf32>
    %483 = vector.multi_reduction <maximumf>, %482, %cst_189 [1] : vector<8x8xf32> to vector<8xf32>
    %484 = vector.shape_cast %483 : vector<8xf32> to vector<8x1xf32>
    %485 = vector.broadcast %484 : vector<8x1xf32> to vector<8x8xf32>
    %486 = arith.subf %482, %485 : vector<8x8xf32>
    %487 = math.exp %486 : vector<8x8xf32>
    %cst_190 = arith.constant dense<0.000000e+00> : vector<8xf32>
    %488 = vector.multi_reduction <add>, %487, %cst_190 [1] : vector<8x8xf32> to vector<8xf32>
    %489 = vector.shape_cast %488 : vector<8xf32> to vector<8x1xf32>
    %490 = tpu.reciprocal %489 {approx = true} : vector<8x1xf32> -> vector<8x1xf32>
    %491 = vector.broadcast %490 : vector<8x1xf32> to vector<8x8xf32>
    %492 = arith.mulf %487, %491 : vector<8x8xf32>
    %493 = arith.truncf %492 : vector<8x8xf32> to vector<8x8xbf16>
    %cst_191 = arith.constant dense<0.000000e+00> : vector<8x8xf32>
    %494 = tpu.matmul %493, %480, %cst_191 {dimension_numbers = #tpu.dot_dimension_numbers<[1], [0], [0], [1], [0, 0, 1, 1], [], []>} : vector<8x8xbf16>, vector<8x8xbf16>, vector<8x8xf32> -> vector<8x8xf32>
    %495 = vector.extract_strided_slice %432 {offsets = [0, 24], sizes = [8, 8], strides = [1, 1]} : vector<8x32xf32> to vector<8x8xf32>
    %496 = arith.truncf %495 : vector<8x8xf32> to vector<8x8xbf16>
    %497 = vector.extract_strided_slice %433 {offsets = [0, 24], sizes = [8, 8], strides = [1, 1]} : vector<8x32xf32> to vector<8x8xf32>
    %498 = arith.truncf %497 : vector<8x8xf32> to vector<8x8xbf16>
    %499 = vector.extract_strided_slice %434 {offsets = [0, 24], sizes = [8, 8], strides = [1, 1]} : vector<8x32xf32> to vector<8x8xf32>
    %500 = arith.truncf %499 : vector<8x8xf32> to vector<8x8xbf16>
    %cst_192 = arith.constant dense<0.000000e+00> : vector<8x8xf32>
    %501 = tpu.matmul %496, %498, %cst_192 {dimension_numbers = #tpu.dot_dimension_numbers<[1], [1], [0], [0], [0, 0, 1, 0], [], []>} : vector<8x8xbf16>, vector<8x8xbf16>, vector<8x8xf32> -> vector<8x8xf32>
    %502 = arith.addf %501, %14 : vector<8x8xf32>
    %cst_193 = arith.constant dense<0xFF800000> : vector<8xf32>
    %503 = vector.multi_reduction <maximumf>, %502, %cst_193 [1] : vector<8x8xf32> to vector<8xf32>
    %504 = vector.shape_cast %503 : vector<8xf32> to vector<8x1xf32>
    %505 = vector.broadcast %504 : vector<8x1xf32> to vector<8x8xf32>
    %506 = arith.subf %502, %505 : vector<8x8xf32>
    %507 = math.exp %506 : vector<8x8xf32>
    %cst_194 = arith.constant dense<0.000000e+00> : vector<8xf32>
    %508 = vector.multi_reduction <add>, %507, %cst_194 [1] : vector<8x8xf32> to vector<8xf32>
    %509 = vector.shape_cast %508 : vector<8xf32> to vector<8x1xf32>
    %510 = tpu.reciprocal %509 {approx = true} : vector<8x1xf32> -> vector<8x1xf32>
    %511 = vector.broadcast %510 : vector<8x1xf32> to vector<8x8xf32>
    %512 = arith.mulf %507, %511 : vector<8x8xf32>
    %513 = arith.truncf %512 : vector<8x8xf32> to vector<8x8xbf16>
    %cst_195 = arith.constant dense<0.000000e+00> : vector<8x8xf32>
    %514 = tpu.matmul %513, %500, %cst_195 {dimension_numbers = #tpu.dot_dimension_numbers<[1], [0], [0], [1], [0, 0, 1, 1], [], []>} : vector<8x8xbf16>, vector<8x8xbf16>, vector<8x8xf32> -> vector<8x8xf32>
    %515 = tpu.concatenate %454, %474, %494, %514 in 1 : vector<8x8xf32>, vector<8x8xf32>, vector<8x8xf32>, vector<8x8xf32> -> vector<8x32xf32>
    %516 = arith.truncf %515 : vector<8x32xf32> to vector<8x32xbf16>
    %c0_196 = arith.constant 0 : index
    %c0_197 = arith.constant 0 : index
    %c0_198 = arith.constant 0 : index
    %517 = vector.load %arg9[%c0_196, %c0_197, %c0_198] : memref<2x32x32xbf16, #tpu.memory_space<vmem>>, vector<1x32x32xbf16>
    %518 = vector.shape_cast %517 : vector<1x32x32xbf16> to vector<32x32xbf16>
    %cst_199 = arith.constant dense<0.000000e+00> : vector<8x32xf32>
    %519 = tpu.matmul %516, %518, %cst_199 {dimension_numbers = #tpu.dot_dimension_numbers<[1], [0], [0], [1], [0, 0, 1, 1], [], []>} : vector<8x32xbf16>, vector<32x32xbf16>, vector<8x32xf32> -> vector<8x32xf32>
    %c0_200 = arith.constant 0 : index
    %c0_201 = arith.constant 0 : index
    %c0_202 = arith.constant 0 : index
    %520 = vector.load %arg10[%c0_200, %c0_201, %c0_202] : memref<2x1x32xf32, #tpu.memory_space<vmem>>, vector<1x1x32xf32>
    %521 = vector.shape_cast %520 : vector<1x1x32xf32> to vector<1x32xf32>
    %522 = vector.broadcast %521 : vector<1x32xf32> to vector<8x32xf32>
    %523 = arith.addf %519, %522 : vector<8x32xf32>
    %524 = arith.addf %395, %523 : vector<8x32xf32>
    %c0_203 = arith.constant 0 : index
    %c0_204 = arith.constant 0 : index
    %c0_205 = arith.constant 0 : index
    %525 = vector.load %arg11[%c0_203, %c0_204, %c0_205] : memref<2x1x32xf32, #tpu.memory_space<vmem>>, vector<1x1x32xf32>
    %526 = vector.shape_cast %525 : vector<1x1x32xf32> to vector<1x32xf32>
    %c0_206 = arith.constant 0 : index
    %c0_207 = arith.constant 0 : index
    %c0_208 = arith.constant 0 : index
    %527 = vector.load %arg12[%c0_206, %c0_207, %c0_208] : memref<2x1x32xf32, #tpu.memory_space<vmem>>, vector<1x1x32xf32>
    %528 = vector.shape_cast %527 : vector<1x1x32xf32> to vector<1x32xf32>
    %cst_209 = arith.constant dense<0.000000e+00> : vector<8xf32>
    %529 = vector.multi_reduction <add>, %524, %cst_209 [1] : vector<8x32xf32> to vector<8xf32>
    %530 = vector.shape_cast %529 : vector<8xf32> to vector<8x1xf32>
    %cst_210 = arith.constant 3.200000e+01 : f32
    %531 = vector.broadcast %cst_210 : f32 to vector<8x1xf32>
    %532 = arith.divf %530, %531 : vector<8x1xf32>
    %533 = vector.broadcast %532 : vector<8x1xf32> to vector<8x32xf32>
    %534 = arith.subf %524, %533 : vector<8x32xf32>
    %535 = arith.mulf %534, %534 : vector<8x32xf32>
    %cst_211 = arith.constant dense<0.000000e+00> : vector<8xf32>
    %536 = vector.multi_reduction <add>, %535, %cst_211 [1] : vector<8x32xf32> to vector<8xf32>
    %537 = vector.shape_cast %536 : vector<8xf32> to vector<8x1xf32>
    %cst_212 = arith.constant 3.200000e+01 : f32
    %538 = vector.broadcast %cst_212 : f32 to vector<8x1xf32>
    %539 = arith.divf %537, %538 : vector<8x1xf32>
    %540 = vector.broadcast %532 : vector<8x1xf32> to vector<8x32xf32>
    %541 = arith.subf %524, %540 : vector<8x32xf32>
    %cst_213 = arith.constant 9.99999974E-6 : f32
    %542 = vector.broadcast %cst_213 : f32 to vector<8x1xf32>
    %543 = arith.addf %539, %542 : vector<8x1xf32>
    %544 = math.rsqrt %543 : vector<8x1xf32>
    %545 = vector.broadcast %544 : vector<8x1xf32> to vector<8x32xf32>
    %546 = arith.mulf %541, %545 : vector<8x32xf32>
    %547 = vector.broadcast %526 : vector<1x32xf32> to vector<8x32xf32>
    %548 = arith.mulf %546, %547 : vector<8x32xf32>
    %549 = vector.broadcast %528 : vector<1x32xf32> to vector<8x32xf32>
    %550 = arith.addf %548, %549 : vector<8x32xf32>
    %551 = arith.truncf %550 : vector<8x32xf32> to vector<8x32xbf16>
    %c0_214 = arith.constant 0 : index
    %c0_215 = arith.constant 0 : index
    %c0_216 = arith.constant 0 : index
    %552 = vector.load %arg13[%c0_214, %c0_215, %c0_216] : memref<2x32x128xbf16, #tpu.memory_space<vmem>>, vector<1x32x128xbf16>
    %553 = vector.shape_cast %552 : vector<1x32x128xbf16> to vector<32x128xbf16>
    %cst_217 = arith.constant dense<0.000000e+00> : vector<8x128xf32>
    %554 = tpu.matmul %551, %553, %cst_217 {dimension_numbers = #tpu.dot_dimension_numbers<[1], [0], [0], [1], [0, 0, 1, 1], [], []>} : vector<8x32xbf16>, vector<32x128xbf16>, vector<8x128xf32> -> vector<8x128xf32>
    %c0_218 = arith.constant 0 : index
    %c0_219 = arith.constant 0 : index
    %c0_220 = arith.constant 0 : index
    %555 = vector.load %arg14[%c0_218, %c0_219, %c0_220] : memref<2x1x128xf32, #tpu.memory_space<vmem>>, vector<1x1x128xf32>
    %556 = vector.shape_cast %555 : vector<1x1x128xf32> to vector<1x128xf32>
    %557 = vector.broadcast %556 : vector<1x128xf32> to vector<8x128xf32>
    %558 = arith.addf %554, %557 : vector<8x128xf32>
    %559 = arith.mulf %558, %558 : vector<8x128xf32>
    %560 = arith.mulf %558, %559 : vector<8x128xf32>
    %cst_221 = arith.constant 4.471500e-02 : f32
    %561 = vector.broadcast %cst_221 : f32 to vector<8x128xf32>
    %562 = arith.mulf %561, %560 : vector<8x128xf32>
    %563 = arith.addf %558, %562 : vector<8x128xf32>
    %cst_222 = arith.constant 0.797884583 : f32
    %564 = vector.broadcast %cst_222 : f32 to vector<8x128xf32>
    %565 = arith.mulf %564, %563 : vector<8x128xf32>
    %566 = math.tanh %565 : vector<8x128xf32>
    %cst_223 = arith.constant 1.000000e+00 : f32
    %567 = vector.broadcast %cst_223 : f32 to vector<8x128xf32>
    %568 = arith.addf %567, %566 : vector<8x128xf32>
    %cst_224 = arith.constant 5.000000e-01 : f32
    %569 = vector.broadcast %cst_224 : f32 to vector<8x128xf32>
    %570 = arith.mulf %569, %568 : vector<8x128xf32>
    %571 = arith.mulf %558, %570 : vector<8x128xf32>
    %572 = arith.truncf %571 : vector<8x128xf32> to vector<8x128xbf16>
    %c0_225 = arith.constant 0 : index
    %c0_226 = arith.constant 0 : index
    %c0_227 = arith.constant 0 : index
    %573 = vector.load %arg15[%c0_225, %c0_226, %c0_227] : memref<2x128x32xbf16, #tpu.memory_space<vmem>>, vector<1x128x32xbf16>
    %574 = vector.shape_cast %573 : vector<1x128x32xbf16> to vector<128x32xbf16>
    %cst_228 = arith.constant dense<0.000000e+00> : vector<8x32xf32>
    %575 = tpu.matmul %572, %574, %cst_228 {dimension_numbers = #tpu.dot_dimension_numbers<[1], [0], [0], [1], [0, 0, 1, 1], [], []>} : vector<8x128xbf16>, vector<128x32xbf16>, vector<8x32xf32> -> vector<8x32xf32>
    %c0_229 = arith.constant 0 : index
    %c0_230 = arith.constant 0 : index
    %c0_231 = arith.constant 0 : index
    %576 = vector.load %arg16[%c0_229, %c0_230, %c0_231] : memref<2x1x32xf32, #tpu.memory_space<vmem>>, vector<1x1x32xf32>
    %577 = vector.shape_cast %576 : vector<1x1x32xf32> to vector<1x32xf32>
    %578 = vector.broadcast %577 : vector<1x32xf32> to vector<8x32xf32>
    %579 = arith.addf %575, %578 : vector<8x32xf32>
    %580 = arith.addf %524, %579 : vector<8x32xf32>
    %c1_232 = arith.constant 1 : index
    %c0_233 = arith.constant 0 : index
    %c0_234 = arith.constant 0 : index
    %581 = vector.load %arg5[%c1_232, %c0_233, %c0_234] : memref<2x1x32xf32, #tpu.memory_space<vmem>>, vector<1x1x32xf32>
    %582 = vector.shape_cast %581 : vector<1x1x32xf32> to vector<1x32xf32>
    %c1_235 = arith.constant 1 : index
    %c0_236 = arith.constant 0 : index
    %c0_237 = arith.constant 0 : index
    %583 = vector.load %arg6[%c1_235, %c0_236, %c0_237] : memref<2x1x32xf32, #tpu.memory_space<vmem>>, vector<1x1x32xf32>
    %584 = vector.shape_cast %583 : vector<1x1x32xf32> to vector<1x32xf32>
    %cst_238 = arith.constant dense<0.000000e+00> : vector<8xf32>
    %585 = vector.multi_reduction <add>, %580, %cst_238 [1] : vector<8x32xf32> to vector<8xf32>
    %586 = vector.shape_cast %585 : vector<8xf32> to vector<8x1xf32>
    %cst_239 = arith.constant 3.200000e+01 : f32
    %587 = vector.broadcast %cst_239 : f32 to vector<8x1xf32>
    %588 = arith.divf %586, %587 : vector<8x1xf32>
    %589 = vector.broadcast %588 : vector<8x1xf32> to vector<8x32xf32>
    %590 = arith.subf %580, %589 : vector<8x32xf32>
    %591 = arith.mulf %590, %590 : vector<8x32xf32>
    %cst_240 = arith.constant dense<0.000000e+00> : vector<8xf32>
    %592 = vector.multi_reduction <add>, %591, %cst_240 [1] : vector<8x32xf32> to vector<8xf32>
    %593 = vector.shape_cast %592 : vector<8xf32> to vector<8x1xf32>
    %cst_241 = arith.constant 3.200000e+01 : f32
    %594 = vector.broadcast %cst_241 : f32 to vector<8x1xf32>
    %595 = arith.divf %593, %594 : vector<8x1xf32>
    %596 = vector.broadcast %588 : vector<8x1xf32> to vector<8x32xf32>
    %597 = arith.subf %580, %596 : vector<8x32xf32>
    %cst_242 = arith.constant 9.99999974E-6 : f32
    %598 = vector.broadcast %cst_242 : f32 to vector<8x1xf32>
    %599 = arith.addf %595, %598 : vector<8x1xf32>
    %600 = math.rsqrt %599 : vector<8x1xf32>
    %601 = vector.broadcast %600 : vector<8x1xf32> to vector<8x32xf32>
    %602 = arith.mulf %597, %601 : vector<8x32xf32>
    %603 = vector.broadcast %582 : vector<1x32xf32> to vector<8x32xf32>
    %604 = arith.mulf %602, %603 : vector<8x32xf32>
    %605 = vector.broadcast %584 : vector<1x32xf32> to vector<8x32xf32>
    %606 = arith.addf %604, %605 : vector<8x32xf32>
    %607 = arith.truncf %606 : vector<8x32xf32> to vector<8x32xbf16>
    %c1_243 = arith.constant 1 : index
    %c0_244 = arith.constant 0 : index
    %c0_245 = arith.constant 0 : index
    %608 = vector.load %arg7[%c1_243, %c0_244, %c0_245] : memref<2x32x96xbf16, #tpu.memory_space<vmem>>, vector<1x32x96xbf16>
    %609 = vector.shape_cast %608 : vector<1x32x96xbf16> to vector<32x96xbf16>
    %cst_246 = arith.constant dense<0.000000e+00> : vector<8x96xf32>
    %610 = tpu.matmul %607, %609, %cst_246 {dimension_numbers = #tpu.dot_dimension_numbers<[1], [0], [0], [1], [0, 0, 1, 1], [], []>} : vector<8x32xbf16>, vector<32x96xbf16>, vector<8x96xf32> -> vector<8x96xf32>
    %c1_247 = arith.constant 1 : index
    %c0_248 = arith.constant 0 : index
    %c0_249 = arith.constant 0 : index
    %611 = vector.load %arg8[%c1_247, %c0_248, %c0_249] : memref<2x1x96xf32, #tpu.memory_space<vmem>>, vector<1x1x96xf32>
    %612 = vector.shape_cast %611 : vector<1x1x96xf32> to vector<1x96xf32>
    %613 = vector.broadcast %612 : vector<1x96xf32> to vector<8x96xf32>
    %614 = arith.addf %610, %613 : vector<8x96xf32>
    %615 = vector.extract_strided_slice %614 {offsets = [0, 0], sizes = [8, 32], strides = [1, 1]} : vector<8x96xf32> to vector<8x32xf32>
    %cst_250 = arith.constant 0.353553385 : f32
    %616 = vector.broadcast %cst_250 : f32 to vector<8x32xf32>
    %617 = arith.mulf %615, %616 : vector<8x32xf32>
    %618 = vector.extract_strided_slice %614 {offsets = [0, 32], sizes = [8, 32], strides = [1, 1]} : vector<8x96xf32> to vector<8x32xf32>
    %619 = vector.extract_strided_slice %614 {offsets = [0, 64], sizes = [8, 32], strides = [1, 1]} : vector<8x96xf32> to vector<8x32xf32>
    %620 = vector.extract_strided_slice %617 {offsets = [0, 0], sizes = [8, 8], strides = [1, 1]} : vector<8x32xf32> to vector<8x8xf32>
    %621 = arith.truncf %620 : vector<8x8xf32> to vector<8x8xbf16>
    %622 = vector.extract_strided_slice %618 {offsets = [0, 0], sizes = [8, 8], strides = [1, 1]} : vector<8x32xf32> to vector<8x8xf32>
    %623 = arith.truncf %622 : vector<8x8xf32> to vector<8x8xbf16>
    %624 = vector.extract_strided_slice %619 {offsets = [0, 0], sizes = [8, 8], strides = [1, 1]} : vector<8x32xf32> to vector<8x8xf32>
    %625 = arith.truncf %624 : vector<8x8xf32> to vector<8x8xbf16>
    %cst_251 = arith.constant dense<0.000000e+00> : vector<8x8xf32>
    %626 = tpu.matmul %621, %623, %cst_251 {dimension_numbers = #tpu.dot_dimension_numbers<[1], [1], [0], [0], [0, 0, 1, 0], [], []>} : vector<8x8xbf16>, vector<8x8xbf16>, vector<8x8xf32> -> vector<8x8xf32>
    %627 = arith.addf %626, %14 : vector<8x8xf32>
    %cst_252 = arith.constant dense<0xFF800000> : vector<8xf32>
    %628 = vector.multi_reduction <maximumf>, %627, %cst_252 [1] : vector<8x8xf32> to vector<8xf32>
    %629 = vector.shape_cast %628 : vector<8xf32> to vector<8x1xf32>
    %630 = vector.broadcast %629 : vector<8x1xf32> to vector<8x8xf32>
    %631 = arith.subf %627, %630 : vector<8x8xf32>
    %632 = math.exp %631 : vector<8x8xf32>
    %cst_253 = arith.constant dense<0.000000e+00> : vector<8xf32>
    %633 = vector.multi_reduction <add>, %632, %cst_253 [1] : vector<8x8xf32> to vector<8xf32>
    %634 = vector.shape_cast %633 : vector<8xf32> to vector<8x1xf32>
    %635 = tpu.reciprocal %634 {approx = true} : vector<8x1xf32> -> vector<8x1xf32>
    %636 = vector.broadcast %635 : vector<8x1xf32> to vector<8x8xf32>
    %637 = arith.mulf %632, %636 : vector<8x8xf32>
    %638 = arith.truncf %637 : vector<8x8xf32> to vector<8x8xbf16>
    %cst_254 = arith.constant dense<0.000000e+00> : vector<8x8xf32>
    %639 = tpu.matmul %638, %625, %cst_254 {dimension_numbers = #tpu.dot_dimension_numbers<[1], [0], [0], [1], [0, 0, 1, 1], [], []>} : vector<8x8xbf16>, vector<8x8xbf16>, vector<8x8xf32> -> vector<8x8xf32>
    %640 = vector.extract_strided_slice %617 {offsets = [0, 8], sizes = [8, 8], strides = [1, 1]} : vector<8x32xf32> to vector<8x8xf32>
    %641 = arith.truncf %640 : vector<8x8xf32> to vector<8x8xbf16>
    %642 = vector.extract_strided_slice %618 {offsets = [0, 8], sizes = [8, 8], strides = [1, 1]} : vector<8x32xf32> to vector<8x8xf32>
    %643 = arith.truncf %642 : vector<8x8xf32> to vector<8x8xbf16>
    %644 = vector.extract_strided_slice %619 {offsets = [0, 8], sizes = [8, 8], strides = [1, 1]} : vector<8x32xf32> to vector<8x8xf32>
    %645 = arith.truncf %644 : vector<8x8xf32> to vector<8x8xbf16>
    %cst_255 = arith.constant dense<0.000000e+00> : vector<8x8xf32>
    %646 = tpu.matmul %641, %643, %cst_255 {dimension_numbers = #tpu.dot_dimension_numbers<[1], [1], [0], [0], [0, 0, 1, 0], [], []>} : vector<8x8xbf16>, vector<8x8xbf16>, vector<8x8xf32> -> vector<8x8xf32>
    %647 = arith.addf %646, %14 : vector<8x8xf32>
    %cst_256 = arith.constant dense<0xFF800000> : vector<8xf32>
    %648 = vector.multi_reduction <maximumf>, %647, %cst_256 [1] : vector<8x8xf32> to vector<8xf32>
    %649 = vector.shape_cast %648 : vector<8xf32> to vector<8x1xf32>
    %650 = vector.broadcast %649 : vector<8x1xf32> to vector<8x8xf32>
    %651 = arith.subf %647, %650 : vector<8x8xf32>
    %652 = math.exp %651 : vector<8x8xf32>
    %cst_257 = arith.constant dense<0.000000e+00> : vector<8xf32>
    %653 = vector.multi_reduction <add>, %652, %cst_257 [1] : vector<8x8xf32> to vector<8xf32>
    %654 = vector.shape_cast %653 : vector<8xf32> to vector<8x1xf32>
    %655 = tpu.reciprocal %654 {approx = true} : vector<8x1xf32> -> vector<8x1xf32>
    %656 = vector.broadcast %655 : vector<8x1xf32> to vector<8x8xf32>
    %657 = arith.mulf %652, %656 : vector<8x8xf32>
    %658 = arith.truncf %657 : vector<8x8xf32> to vector<8x8xbf16>
    %cst_258 = arith.constant dense<0.000000e+00> : vector<8x8xf32>
    %659 = tpu.matmul %658, %645, %cst_258 {dimension_numbers = #tpu.dot_dimension_numbers<[1], [0], [0], [1], [0, 0, 1, 1], [], []>} : vector<8x8xbf16>, vector<8x8xbf16>, vector<8x8xf32> -> vector<8x8xf32>
    %660 = vector.extract_strided_slice %617 {offsets = [0, 16], sizes = [8, 8], strides = [1, 1]} : vector<8x32xf32> to vector<8x8xf32>
    %661 = arith.truncf %660 : vector<8x8xf32> to vector<8x8xbf16>
    %662 = vector.extract_strided_slice %618 {offsets = [0, 16], sizes = [8, 8], strides = [1, 1]} : vector<8x32xf32> to vector<8x8xf32>
    %663 = arith.truncf %662 : vector<8x8xf32> to vector<8x8xbf16>
    %664 = vector.extract_strided_slice %619 {offsets = [0, 16], sizes = [8, 8], strides = [1, 1]} : vector<8x32xf32> to vector<8x8xf32>
    %665 = arith.truncf %664 : vector<8x8xf32> to vector<8x8xbf16>
    %cst_259 = arith.constant dense<0.000000e+00> : vector<8x8xf32>
    %666 = tpu.matmul %661, %663, %cst_259 {dimension_numbers = #tpu.dot_dimension_numbers<[1], [1], [0], [0], [0, 0, 1, 0], [], []>} : vector<8x8xbf16>, vector<8x8xbf16>, vector<8x8xf32> -> vector<8x8xf32>
    %667 = arith.addf %666, %14 : vector<8x8xf32>
    %cst_260 = arith.constant dense<0xFF800000> : vector<8xf32>
    %668 = vector.multi_reduction <maximumf>, %667, %cst_260 [1] : vector<8x8xf32> to vector<8xf32>
    %669 = vector.shape_cast %668 : vector<8xf32> to vector<8x1xf32>
    %670 = vector.broadcast %669 : vector<8x1xf32> to vector<8x8xf32>
    %671 = arith.subf %667, %670 : vector<8x8xf32>
    %672 = math.exp %671 : vector<8x8xf32>
    %cst_261 = arith.constant dense<0.000000e+00> : vector<8xf32>
    %673 = vector.multi_reduction <add>, %672, %cst_261 [1] : vector<8x8xf32> to vector<8xf32>
    %674 = vector.shape_cast %673 : vector<8xf32> to vector<8x1xf32>
    %675 = tpu.reciprocal %674 {approx = true} : vector<8x1xf32> -> vector<8x1xf32>
    %676 = vector.broadcast %675 : vector<8x1xf32> to vector<8x8xf32>
    %677 = arith.mulf %672, %676 : vector<8x8xf32>
    %678 = arith.truncf %677 : vector<8x8xf32> to vector<8x8xbf16>
    %cst_262 = arith.constant dense<0.000000e+00> : vector<8x8xf32>
    %679 = tpu.matmul %678, %665, %cst_262 {dimension_numbers = #tpu.dot_dimension_numbers<[1], [0], [0], [1], [0, 0, 1, 1], [], []>} : vector<8x8xbf16>, vector<8x8xbf16>, vector<8x8xf32> -> vector<8x8xf32>
    %680 = vector.extract_strided_slice %617 {offsets = [0, 24], sizes = [8, 8], strides = [1, 1]} : vector<8x32xf32> to vector<8x8xf32>
    %681 = arith.truncf %680 : vector<8x8xf32> to vector<8x8xbf16>
    %682 = vector.extract_strided_slice %618 {offsets = [0, 24], sizes = [8, 8], strides = [1, 1]} : vector<8x32xf32> to vector<8x8xf32>
    %683 = arith.truncf %682 : vector<8x8xf32> to vector<8x8xbf16>
    %684 = vector.extract_strided_slice %619 {offsets = [0, 24], sizes = [8, 8], strides = [1, 1]} : vector<8x32xf32> to vector<8x8xf32>
    %685 = arith.truncf %684 : vector<8x8xf32> to vector<8x8xbf16>
    %cst_263 = arith.constant dense<0.000000e+00> : vector<8x8xf32>
    %686 = tpu.matmul %681, %683, %cst_263 {dimension_numbers = #tpu.dot_dimension_numbers<[1], [1], [0], [0], [0, 0, 1, 0], [], []>} : vector<8x8xbf16>, vector<8x8xbf16>, vector<8x8xf32> -> vector<8x8xf32>
    %687 = arith.addf %686, %14 : vector<8x8xf32>
    %cst_264 = arith.constant dense<0xFF800000> : vector<8xf32>
    %688 = vector.multi_reduction <maximumf>, %687, %cst_264 [1] : vector<8x8xf32> to vector<8xf32>
    %689 = vector.shape_cast %688 : vector<8xf32> to vector<8x1xf32>
    %690 = vector.broadcast %689 : vector<8x1xf32> to vector<8x8xf32>
    %691 = arith.subf %687, %690 : vector<8x8xf32>
    %692 = math.exp %691 : vector<8x8xf32>
    %cst_265 = arith.constant dense<0.000000e+00> : vector<8xf32>
    %693 = vector.multi_reduction <add>, %692, %cst_265 [1] : vector<8x8xf32> to vector<8xf32>
    %694 = vector.shape_cast %693 : vector<8xf32> to vector<8x1xf32>
    %695 = tpu.reciprocal %694 {approx = true} : vector<8x1xf32> -> vector<8x1xf32>
    %696 = vector.broadcast %695 : vector<8x1xf32> to vector<8x8xf32>
    %697 = arith.mulf %692, %696 : vector<8x8xf32>
    %698 = arith.truncf %697 : vector<8x8xf32> to vector<8x8xbf16>
    %cst_266 = arith.constant dense<0.000000e+00> : vector<8x8xf32>
    %699 = tpu.matmul %698, %685, %cst_266 {dimension_numbers = #tpu.dot_dimension_numbers<[1], [0], [0], [1], [0, 0, 1, 1], [], []>} : vector<8x8xbf16>, vector<8x8xbf16>, vector<8x8xf32> -> vector<8x8xf32>
    %700 = tpu.concatenate %639, %659, %679, %699 in 1 : vector<8x8xf32>, vector<8x8xf32>, vector<8x8xf32>, vector<8x8xf32> -> vector<8x32xf32>
    %701 = arith.truncf %700 : vector<8x32xf32> to vector<8x32xbf16>
    %c1_267 = arith.constant 1 : index
    %c0_268 = arith.constant 0 : index
    %c0_269 = arith.constant 0 : index
    %702 = vector.load %arg9[%c1_267, %c0_268, %c0_269] : memref<2x32x32xbf16, #tpu.memory_space<vmem>>, vector<1x32x32xbf16>
    %703 = vector.shape_cast %702 : vector<1x32x32xbf16> to vector<32x32xbf16>
    %cst_270 = arith.constant dense<0.000000e+00> : vector<8x32xf32>
    %704 = tpu.matmul %701, %703, %cst_270 {dimension_numbers = #tpu.dot_dimension_numbers<[1], [0], [0], [1], [0, 0, 1, 1], [], []>} : vector<8x32xbf16>, vector<32x32xbf16>, vector<8x32xf32> -> vector<8x32xf32>
    %c1_271 = arith.constant 1 : index
    %c0_272 = arith.constant 0 : index
    %c0_273 = arith.constant 0 : index
    %705 = vector.load %arg10[%c1_271, %c0_272, %c0_273] : memref<2x1x32xf32, #tpu.memory_space<vmem>>, vector<1x1x32xf32>
    %706 = vector.shape_cast %705 : vector<1x1x32xf32> to vector<1x32xf32>
    %707 = vector.broadcast %706 : vector<1x32xf32> to vector<8x32xf32>
    %708 = arith.addf %704, %707 : vector<8x32xf32>
    %709 = arith.addf %580, %708 : vector<8x32xf32>
    %c1_274 = arith.constant 1 : index
    %c0_275 = arith.constant 0 : index
    %c0_276 = arith.constant 0 : index
    %710 = vector.load %arg11[%c1_274, %c0_275, %c0_276] : memref<2x1x32xf32, #tpu.memory_space<vmem>>, vector<1x1x32xf32>
    %711 = vector.shape_cast %710 : vector<1x1x32xf32> to vector<1x32xf32>
    %c1_277 = arith.constant 1 : index
    %c0_278 = arith.constant 0 : index
    %c0_279 = arith.constant 0 : index
    %712 = vector.load %arg12[%c1_277, %c0_278, %c0_279] : memref<2x1x32xf32, #tpu.memory_space<vmem>>, vector<1x1x32xf32>
    %713 = vector.shape_cast %712 : vector<1x1x32xf32> to vector<1x32xf32>
    %cst_280 = arith.constant dense<0.000000e+00> : vector<8xf32>
    %714 = vector.multi_reduction <add>, %709, %cst_280 [1] : vector<8x32xf32> to vector<8xf32>
    %715 = vector.shape_cast %714 : vector<8xf32> to vector<8x1xf32>
    %cst_281 = arith.constant 3.200000e+01 : f32
    %716 = vector.broadcast %cst_281 : f32 to vector<8x1xf32>
    %717 = arith.divf %715, %716 : vector<8x1xf32>
    %718 = vector.broadcast %717 : vector<8x1xf32> to vector<8x32xf32>
    %719 = arith.subf %709, %718 : vector<8x32xf32>
    %720 = arith.mulf %719, %719 : vector<8x32xf32>
    %cst_282 = arith.constant dense<0.000000e+00> : vector<8xf32>
    %721 = vector.multi_reduction <add>, %720, %cst_282 [1] : vector<8x32xf32> to vector<8xf32>
    %722 = vector.shape_cast %721 : vector<8xf32> to vector<8x1xf32>
    %cst_283 = arith.constant 3.200000e+01 : f32
    %723 = vector.broadcast %cst_283 : f32 to vector<8x1xf32>
    %724 = arith.divf %722, %723 : vector<8x1xf32>
    %725 = vector.broadcast %717 : vector<8x1xf32> to vector<8x32xf32>
    %726 = arith.subf %709, %725 : vector<8x32xf32>
    %cst_284 = arith.constant 9.99999974E-6 : f32
    %727 = vector.broadcast %cst_284 : f32 to vector<8x1xf32>
    %728 = arith.addf %724, %727 : vector<8x1xf32>
    %729 = math.rsqrt %728 : vector<8x1xf32>
    %730 = vector.broadcast %729 : vector<8x1xf32> to vector<8x32xf32>
    %731 = arith.mulf %726, %730 : vector<8x32xf32>
    %732 = vector.broadcast %711 : vector<1x32xf32> to vector<8x32xf32>
    %733 = arith.mulf %731, %732 : vector<8x32xf32>
    %734 = vector.broadcast %713 : vector<1x32xf32> to vector<8x32xf32>
    %735 = arith.addf %733, %734 : vector<8x32xf32>
    %736 = arith.truncf %735 : vector<8x32xf32> to vector<8x32xbf16>
    %c1_285 = arith.constant 1 : index
    %c0_286 = arith.constant 0 : index
    %c0_287 = arith.constant 0 : index
    %737 = vector.load %arg13[%c1_285, %c0_286, %c0_287] : memref<2x32x128xbf16, #tpu.memory_space<vmem>>, vector<1x32x128xbf16>
    %738 = vector.shape_cast %737 : vector<1x32x128xbf16> to vector<32x128xbf16>
    %cst_288 = arith.constant dense<0.000000e+00> : vector<8x128xf32>
    %739 = tpu.matmul %736, %738, %cst_288 {dimension_numbers = #tpu.dot_dimension_numbers<[1], [0], [0], [1], [0, 0, 1, 1], [], []>} : vector<8x32xbf16>, vector<32x128xbf16>, vector<8x128xf32> -> vector<8x128xf32>
    %c1_289 = arith.constant 1 : index
    %c0_290 = arith.constant 0 : index
    %c0_291 = arith.constant 0 : index
    %740 = vector.load %arg14[%c1_289, %c0_290, %c0_291] : memref<2x1x128xf32, #tpu.memory_space<vmem>>, vector<1x1x128xf32>
    %741 = vector.shape_cast %740 : vector<1x1x128xf32> to vector<1x128xf32>
    %742 = vector.broadcast %741 : vector<1x128xf32> to vector<8x128xf32>
    %743 = arith.addf %739, %742 : vector<8x128xf32>
    %744 = arith.mulf %743, %743 : vector<8x128xf32>
    %745 = arith.mulf %743, %744 : vector<8x128xf32>
    %cst_292 = arith.constant 4.471500e-02 : f32
    %746 = vector.broadcast %cst_292 : f32 to vector<8x128xf32>
    %747 = arith.mulf %746, %745 : vector<8x128xf32>
    %748 = arith.addf %743, %747 : vector<8x128xf32>
    %cst_293 = arith.constant 0.797884583 : f32
    %749 = vector.broadcast %cst_293 : f32 to vector<8x128xf32>
    %750 = arith.mulf %749, %748 : vector<8x128xf32>
    %751 = math.tanh %750 : vector<8x128xf32>
    %cst_294 = arith.constant 1.000000e+00 : f32
    %752 = vector.broadcast %cst_294 : f32 to vector<8x128xf32>
    %753 = arith.addf %752, %751 : vector<8x128xf32>
    %cst_295 = arith.constant 5.000000e-01 : f32
    %754 = vector.broadcast %cst_295 : f32 to vector<8x128xf32>
    %755 = arith.mulf %754, %753 : vector<8x128xf32>
    %756 = arith.mulf %743, %755 : vector<8x128xf32>
    %757 = arith.truncf %756 : vector<8x128xf32> to vector<8x128xbf16>
    %c1_296 = arith.constant 1 : index
    %c0_297 = arith.constant 0 : index
    %c0_298 = arith.constant 0 : index
    %758 = vector.load %arg15[%c1_296, %c0_297, %c0_298] : memref<2x128x32xbf16, #tpu.memory_space<vmem>>, vector<1x128x32xbf16>
    %759 = vector.shape_cast %758 : vector<1x128x32xbf16> to vector<128x32xbf16>
    %cst_299 = arith.constant dense<0.000000e+00> : vector<8x32xf32>
    %760 = tpu.matmul %757, %759, %cst_299 {dimension_numbers = #tpu.dot_dimension_numbers<[1], [0], [0], [1], [0, 0, 1, 1], [], []>} : vector<8x128xbf16>, vector<128x32xbf16>, vector<8x32xf32> -> vector<8x32xf32>
    %c1_300 = arith.constant 1 : index
    %c0_301 = arith.constant 0 : index
    %c0_302 = arith.constant 0 : index
    %761 = vector.load %arg16[%c1_300, %c0_301, %c0_302] : memref<2x1x32xf32, #tpu.memory_space<vmem>>, vector<1x1x32xf32>
    %762 = vector.shape_cast %761 : vector<1x1x32xf32> to vector<1x32xf32>
    %763 = vector.broadcast %762 : vector<1x32xf32> to vector<8x32xf32>
    %764 = arith.addf %760, %763 : vector<8x32xf32>
    %765 = arith.addf %709, %764 : vector<8x32xf32>
    %c0_303 = arith.constant 0 : index
    %c0_304 = arith.constant 0 : index
    %766 = vector.load %arg17[%c0_303, %c0_304] : memref<32x4xf32, #tpu.memory_space<vmem>>, vector<32x4xf32>
    %cst_305 = arith.constant dense<0.000000e+00> : vector<8x4xf32>
    %767 = tpu.matmul %765, %766, %cst_305 {dimension_numbers = #tpu.dot_dimension_numbers<[1], [0], [0], [1], [0, 0, 1, 1], [], []>} : vector<8x32xf32>, vector<32x4xf32>, vector<8x4xf32> -> vector<8x4xf32>
    %c0_306 = arith.constant 0 : index
    %c0_307 = arith.constant 0 : index
    %768 = vector.load %arg18[%c0_306, %c0_307] : memref<1x4xf32, #tpu.memory_space<vmem>>, vector<1x4xf32>
    %769 = vector.broadcast %768 : vector<1x4xf32> to vector<8x4xf32>
    %770 = arith.addf %767, %769 : vector<8x4xf32>
    %c1_308 = arith.constant 1 : index
    %c0_309 = arith.constant 0 : index
    %c0_310 = arith.constant 0 : index
    %c0_311 = arith.constant 0 : index
    %771 = vector.load %arg19[%c1_308, %c0_309, %c0_310, %c0_311] : memref<2x1x8x4xf32, #tpu.memory_space<vmem>>, vector<1x1x8x4xf32>
    %772 = vector.shape_cast %771 : vector<1x1x8x4xf32> to vector<8x4xf32>
    %773 = vector.shape_cast %770 : vector<8x4xf32> to vector<1x1x8x4xf32>
    tpu.vector_store %arg19[%c1_308, %c0_309, %c0_310, %c0_311], %773 {strides = array<i32>} : memref<2x1x8x4xf32, #tpu.memory_space<vmem>>, vector<1x1x8x4xf32>,
    return
  }
  func.func @transform_0(%arg0: i32) -> (i32, i32, i32) {
    %c0_i32 = arith.constant 0 : i32
    %c0_i32_0 = arith.constant 0 : i32
    %c0_i32_1 = arith.constant 0 : i32
    return %arg0, %c0_i32, %c0_i32_0 : i32, i32, i32
  }
  func.func @transform_1(%arg0: i32) -> (i32, i32) {
    %c0_i32 = arith.constant 0 : i32
    %c0_i32_0 = arith.constant 0 : i32
    %c0_i32_1 = arith.constant 0 : i32
    return %c0_i32, %c0_i32_0 : i32, i32
  }
  func.func @transform_2(%arg0: i32) -> (i32, i32) {
    %c0_i32 = arith.constant 0 : i32
    %c0_i32_0 = arith.constant 0 : i32
    %c0_i32_1 = arith.constant 0 : i32
    return %c0_i32, %c0_i32_0 : i32, i32
  }
  func.func @transform_3(%arg0: i32) -> (i32, i32) {
    %c0_i32 = arith.constant 0 : i32
    %c0_i32_0 = arith.constant 0 : i32
    %c0_i32_1 = arith.constant 0 : i32
    return %c0_i32, %c0_i32_0 : i32, i32
  }
  func.func @transform_4(%arg0: i32) -> (i32, i32, i32) {
    %c0_i32 = arith.constant 0 : i32
    %c0_i32_0 = arith.constant 0 : i32
    %c0_i32_1 = arith.constant 0 : i32
    %c0_i32_2 = arith.constant 0 : i32
    return %c0_i32, %c0_i32_0, %c0_i32_1 : i32, i32, i32
  }
  func.func @transform_5(%arg0: i32) -> (i32, i32, i32) {
    %c0_i32 = arith.constant 0 : i32
    %c0_i32_0 = arith.constant 0 : i32
    %c0_i32_1 = arith.constant 0 : i32
    %c0_i32_2 = arith.constant 0 : i32
    return %c0_i32, %c0_i32_0, %c0_i32_1 : i32, i32, i32
  }
  func.func @transform_6(%arg0: i32) -> (i32, i32, i32) {
    %c0_i32 = arith.constant 0 : i32
    %c0_i32_0 = arith.constant 0 : i32
    %c0_i32_1 = arith.constant 0 : i32
    %c0_i32_2 = arith.constant 0 : i32
    return %c0_i32, %c0_i32_0, %c0_i32_1 : i32, i32, i32
  }
  func.func @transform_7(%arg0: i32) -> (i32, i32, i32) {
    %c0_i32 = arith.constant 0 : i32
    %c0_i32_0 = arith.constant 0 : i32
    %c0_i32_1 = arith.constant 0 : i32
    %c0_i32_2 = arith.constant 0 : i32
    return %c0_i32, %c0_i32_0, %c0_i32_1 : i32, i32, i32
  }
  func.func @transform_8(%arg0: i32) -> (i32, i32, i32) {
    %c0_i32 = arith.constant 0 : i32
    %c0_i32_0 = arith.constant 0 : i32
    %c0_i32_1 = arith.constant 0 : i32
    %c0_i32_2 = arith.constant 0 : i32
    return %c0_i32, %c0_i32_0, %c0_i32_1 : i32, i32, i32
  }
  func.func @transform_9(%arg0: i32) -> (i32, i32, i32) {
    %c0_i32 = arith.constant 0 : i32
    %c0_i32_0 = arith.constant 0 : i32
    %c0_i32_1 = arith.constant 0 : i32
    %c0_i32_2 = arith.constant 0 : i32
    return %c0_i32, %c0_i32_0, %c0_i32_1 : i32, i32, i32
  }
  func.func @transform_10(%arg0: i32) -> (i32, i32, i32) {
    %c0_i32 = arith.constant 0 : i32
    %c0_i32_0 = arith.constant 0 : i32
    %c0_i32_1 = arith.constant 0 : i32
    %c0_i32_2 = arith.constant 0 : i32
    return %c0_i32, %c0_i32_0, %c0_i32_1 : i32, i32, i32
  }
  func.func @transform_11(%arg0: i32) -> (i32, i32, i32) {
    %c0_i32 = arith.constant 0 : i32
    %c0_i32_0 = arith.constant 0 : i32
    %c0_i32_1 = arith.constant 0 : i32
    %c0_i32_2 = arith.constant 0 : i32
    return %c0_i32, %c0_i32_0, %c0_i32_1 : i32, i32, i32
  }
  func.func @transform_12(%arg0: i32) -> (i32, i32, i32) {
    %c0_i32 = arith.constant 0 : i32
    %c0_i32_0 = arith.constant 0 : i32
    %c0_i32_1 = arith.constant 0 : i32
    %c0_i32_2 = arith.constant 0 : i32
    return %c0_i32, %c0_i32_0, %c0_i32_1 : i32, i32, i32
  }
  func.func @transform_13(%arg0: i32) -> (i32, i32, i32) {
    %c0_i32 = arith.constant 0 : i32
    %c0_i32_0 = arith.constant 0 : i32
    %c0_i32_1 = arith.constant 0 : i32
    %c0_i32_2 = arith.constant 0 : i32
    return %c0_i32, %c0_i32_0, %c0_i32_1 : i32, i32, i32
  }
  func.func @transform_14(%arg0: i32) -> (i32, i32, i32) {
    %c0_i32 = arith.constant 0 : i32
    %c0_i32_0 = arith.constant 0 : i32
    %c0_i32_1 = arith.constant 0 : i32
    %c0_i32_2 = arith.constant 0 : i32
    return %c0_i32, %c0_i32_0, %c0_i32_1 : i32, i32, i32
  }
  func.func @transform_15(%arg0: i32) -> (i32, i32, i32) {
    %c0_i32 = arith.constant 0 : i32
    %c0_i32_0 = arith.constant 0 : i32
    %c0_i32_1 = arith.constant 0 : i32
    %c0_i32_2 = arith.constant 0 : i32
    return %c0_i32, %c0_i32_0, %c0_i32_1 : i32, i32, i32
  }
  func.func @transform_16(%arg0: i32) -> (i32, i32) {
    %c0_i32 = arith.constant 0 : i32
    %c0_i32_0 = arith.constant 0 : i32
    %c0_i32_1 = arith.constant 0 : i32
    return %c0_i32, %c0_i32_0 : i32, i32
  }
  func.func @transform_17(%arg0: i32) -> (i32, i32) {
    %c0_i32 = arith.constant 0 : i32
    %c0_i32_0 = arith.constant 0 : i32
    %c0_i32_1 = arith.constant 0 : i32
    return %c0_i32, %c0_i32_0 : i32, i32
  }
  func.func @transform_18(%arg0: i32) -> (i32, i32, i32, i32) {
    %c0_i32 = arith.constant 0 : i32
    %c0_i32_0 = arith.constant 0 : i32
    %c0_i32_1 = arith.constant 0 : i32
    %c0_i32_2 = arith.constant 0 : i32
    return %c0_i32, %arg0, %c0_i32_0, %c0_i32_1 : i32, i32, i32, i32
  }
}

</mosaic_0001>

<llo_original>
// kernel: transformer_forward.1
$region0: #{transformer_forward.1}
  #allocation0 [shape = 'u32[]', space=smem, size = 0x4, offset = 0x4, fixed_abs, tag = 'smem constant byte address 0x4 - core index']
  #allocation1 [shape = 'u32[72,128]{1,0:T(1,128)}', space=vmem, size = 0x9000, scoped, tag = 'internal scratch']
  %s0 = inlined_call_operand.vmem [shape: f32[2,8,4], index: 0, kind: input, shape index: {}]
  %s1 = inlined_call_operand.vmem [shape: f32[8,32], index: 1, kind: input, shape index: {}]
  %s2 = inlined_call_operand.vmem [shape: f32[4,32], index: 2, kind: input, shape index: {}]
  %s3 = inlined_call_operand.vmem [shape: f32[1,32], index: 3, kind: input, shape index: {}]
  %s4 = inlined_call_operand.vmem [shape: f32[2,1,32], index: 4, kind: input, shape index: {}]
  %s5 = inlined_call_operand.vmem [shape: f32[2,1,32], index: 5, kind: input, shape index: {}]
  %s6 = inlined_call_operand.vmem [shape: bf16[2,32,96], index: 6, kind: input, shape index: {}]
  %s7 = inlined_call_operand.vmem [shape: f32[2,1,96], index: 7, kind: input, shape index: {}]
  %s8 = inlined_call_operand.vmem [shape: bf16[2,32,32], index: 8, kind: input, shape index: {}]
  %s9 = inlined_call_operand.vmem [shape: f32[2,1,32], index: 9, kind: input, shape index: {}]
  %s10 = inlined_call_operand.vmem [shape: f32[2,1,32], index: 10, kind: input, shape index: {}]
  %s11 = inlined_call_operand.vmem [shape: f32[2,1,32], index: 11, kind: input, shape index: {}]
  %s12 = inlined_call_operand.vmem [shape: bf16[2,32,128], index: 12, kind: input, shape index: {}]
  %s13 = inlined_call_operand.vmem [shape: f32[2,1,128], index: 13, kind: input, shape index: {}]
  %s14 = inlined_call_operand.vmem [shape: bf16[2,128,32], index: 14, kind: input, shape index: {}]
  %s15 = inlined_call_operand.vmem [shape: f32[2,1,32], index: 15, kind: input, shape index: {}]
  %s16 = inlined_call_operand.vmem [shape: f32[32,4], index: 16, kind: input, shape index: {}]
  %s17 = inlined_call_operand.vmem [shape: f32[1,4], index: 17, kind: input, shape index: {}]
  %s18 = inlined_call_operand.vmem [shape: f32[2,2,8,4], index: 18, kind: output, shape index: {}]
  %s19 = sld [smem:[#allocation0]]
  $region139: #{transformer_forward.1} parent=0
    _
  %s21 = ssub.s32 1, %s19
  %s22 = scalar_select 0, %s21, %s19
  $region1: #{transformer_forward.1} parent=0
    #allocation2 [shape = 'u8[16384]{0}', space=vmem, size = 0x4000, scoped, tag = 'output window, operand 0']
    loop: start=0, step=1, limit=4
    $region2: #{transformer_forward.1} parent=1 // loop_pre_header
      _
    $region3: #{transformer_forward.1} parent=1 // loop_header
      %s24 = sphi 0, %s28
      %p25 = scmp.ge.s32.totalorder %s24, 4
      %s34 = sphi 0, %s36
      %s37 = sphi 0, %s34
      %s38 = sphi 0, %s37
      %s54 = sphi 0, %s38
      %s58 = sphi 0, %s58
      %s60 = sphi 0, %s58
      %s61 = sphi 0, %s60
      %s75 = sphi 0, %s61
      %s79 = sphi 0, %s79
      %s81 = sphi 0, %s79
      %s82 = sphi 0, %s81
      %s96 = sphi 0, %s82
      %s100 = sphi 0, %s100
      %s102 = sphi 0, %s100
      %s103 = sphi 0, %s102
      %s117 = sphi 0, %s103
      %s121 = sphi 0, %s121
      %s123 = sphi 0, %s121
      %s124 = sphi 0, %s123
      %s138 = sphi 0, %s124
      %s142 = sphi 0, %s142
      %s144 = sphi 0, %s142
      %s145 = sphi 0, %s144
      %s159 = sphi 0, %s145
      %s163 = sphi 0, %s163
      %s165 = sphi 0, %s163
      %s166 = sphi 0, %s165
      %s180 = sphi 0, %s166
      %s184 = sphi 0, %s184
      %s186 = sphi 0, %s184
      %s187 = sphi 0, %s186
      %s201 = sphi 0, %s187
      %s205 = sphi 0, %s205
      %s207 = sphi 0, %s205
      %s208 = sphi 0, %s207
      %s222 = sphi 0, %s208
      %s226 = sphi 0, %s226
      %s228 = sphi 0, %s226
      %s229 = sphi 0, %s228
      %s243 = sphi 0, %s229
      %s247 = sphi 0, %s247
      %s249 = sphi 0, %s247
      %s250 = sphi 0, %s249
      %s264 = sphi 0, %s250
      %s268 = sphi 0, %s268
      %s270 = sphi 0, %s268
      %s271 = sphi 0, %s270
      %s285 = sphi 0, %s271
      %s289 = sphi 0, %s289
      %s291 = sphi 0, %s289
      %s292 = sphi 0, %s291
      %s306 = sphi 0, %s292
      %s310 = sphi 0, %s310
      %s312 = sphi 0, %s310
      %s313 = sphi 0, %s312
      %s327 = sphi 0, %s313
      %s331 = sphi 0, %s331
      %s333 = sphi 0, %s331
      %s334 = sphi 0, %s333
      %s348 = sphi 0, %s334
      %s352 = sphi 0, %s352
      %s354 = sphi 0, %s352
      %s355 = sphi 0, %s354
      %s369 = sphi 0, %s355
      %s373 = sphi 0, %s373
      %s375 = sphi 0, %s373
      %s376 = sphi 0, %s375
      %s390 = sphi 0, %s376
      %s394 = sphi 0, %s394
      %s396 = sphi 0, %s394
      %s397 = sphi 0, %s396
      %s411 = sphi 0, %s397
      %s417 = sphi 0, %s419
      %s420 = sphi 0, %s417
      %s421 = sphi 0, %s420
      %s437 = sphi 0, %s421
    $region4: #{transformer_forward.1} parent=1 // loop_header_branch
      %27 = sbr.rel (%p25) target = $region8
    $region5: #{transformer_forward.1} parent=1 // loop_body
      %s29 = ssub.s32 %s24, 1
      %s30 = ssub.s32 %s24, 2
      %s31 = sadd.s32 %s24, 1
      %s32 = ssub.s32 %s24, %s31
      %p33 = scmp.eq.s32.totalorder %s32, 0
      %s35 = sadd.s32 %s34, 1
      %s36 = scalar_select %p33, %s34, %s35
      %p39 = pneg %p33
      %p40 = scmp.eq.s32.totalorder %s24, 1
      %p41 = por %p39, %p40
      %p42 = scmp.ne.s32.totalorder %s34, %s37
      %p43 = scmp.eq.s32.totalorder %s24, 0
      %p44 = por %p42, %p43
      %p45 = scmp.ne.s32.totalorder %s34, %s37
      %p46 = scmp.eq.s32.totalorder %s29, 1
      %p47 = por %p45, %p46
      %p48 = scmp.ne.s32.totalorder %s37, %s38
      %p49 = scmp.eq.s32.totalorder %s29, 0
      %p50 = por %p48, %p49
      %p51 = scmp.ne.s32.totalorder %s37, %s38
      %p52 = scmp.eq.s32.totalorder %s30, 1
      %p53 = por %p51, %p52
      %p55 = scmp.ne.s32.totalorder %s38, %s54
      %p56 = scmp.eq.s32.totalorder %s30, 0
      %p57 = por %p55, %p56
      %s59 = sadd.s32 %s58, 1
      %p62 = scmp.eq.s32.totalorder %s24, 1
      %p63 = scmp.ne.s32.totalorder %s58, %s60
      %p64 = scmp.eq.s32.totalorder %s24, 0
      %p65 = por %p63, %p64
      %p66 = scmp.ne.s32.totalorder %s58, %s60
      %p67 = scmp.eq.s32.totalorder %s29, 1
      %p68 = por %p66, %p67
      %p69 = scmp.ne.s32.totalorder %s60, %s61
      %p70 = scmp.eq.s32.totalorder %s29, 0
      %p71 = por %p69, %p70
      %p72 = scmp.ne.s32.totalorder %s60, %s61
      %p73 = scmp.eq.s32.totalorder %s30, 1
      %p74 = por %p72, %p73
      %p76 = scmp.ne.s32.totalorder %s61, %s75
      %p77 = scmp.eq.s32.totalorder %s30, 0
      %p78 = por %p76, %p77
      %s80 = sadd.s32 %s79, 1
      %p83 = scmp.eq.s32.totalorder %s24, 1
      %p84 = scmp.ne.s32.totalorder %s79, %s81
      %p85 = scmp.eq.s32.totalorder %s24, 0
      %p86 = por %p84, %p85
      %p87 = scmp.ne.s32.totalorder %s79, %s81
      %p88 = scmp.eq.s32.totalorder %s29, 1
      %p89 = por %p87, %p88
      %p90 = scmp.ne.s32.totalorder %s81, %s82
      %p91 = scmp.eq.s32.totalorder %s29, 0
      %p92 = por %p90, %p91
      %p93 = scmp.ne.s32.totalorder %s81, %s82
      %p94 = scmp.eq.s32.totalorder %s30, 1
      %p95 = por %p93, %p94
      %p97 = scmp.ne.s32.totalorder %s82, %s96
      %p98 = scmp.eq.s32.totalorder %s30, 0
      %p99 = por %p97, %p98
      %s101 = sadd.s32 %s100, 1
      %p104 = scmp.eq.s32.totalorder %s24, 1
      %p105 = scmp.ne.s32.totalorder %s100, %s102
      %p106 = scmp.eq.s32.totalorder %s24, 0
      %p107 = por %p105, %p106
      %p108 = scmp.ne.s32.totalorder %s100, %s102
      %p109 = scmp.eq.s32.totalorder %s29, 1
      %p110 = por %p108, %p109
      %p111 = scmp.ne.s32.totalorder %s102, %s103
      %p112 = scmp.eq.s32.totalorder %s29, 0
      %p113 = por %p111, %p112
      %p114 = scmp.ne.s32.totalorder %s102, %s103
      %p115 = scmp.eq.s32.totalorder %s30, 1
      %p116 = por %p114, %p115
      %p118 = scmp.ne.s32.totalorder %s103, %s117
      %p119 = scmp.eq.s32.totalorder %s30, 0
      %p120 = por %p118, %p119
      %s122 = sadd.s32 %s121, 1
      %p125 = scmp.eq.s32.totalorder %s24, 1
      %p126 = scmp.ne.s32.totalorder %s121, %s123
      %p127 = scmp.eq.s32.totalorder %s24, 0
      %p128 = por %p126, %p127
      %p129 = scmp.ne.s32.totalorder %s121, %s123
      %p130 = scmp.eq.s32.totalorder %s29, 1
      %p131 = por %p129, %p130
      %p132 = scmp.ne.s32.totalorder %s123, %s124
      %p133 = scmp.eq.s32.totalorder %s29, 0
      %p134 = por %p132, %p133
      %p135 = scmp.ne.s32.totalorder %s123, %s124
      %p136 = scmp.eq.s32.totalorder %s30, 1
      %p137 = por %p135, %p136
      %p139 = scmp.ne.s32.totalorder %s124, %s138
      %p140 = scmp.eq.s32.totalorder %s30, 0
      %p141 = por %p139, %p140
      %s143 = sadd.s32 %s142, 1
      %p146 = scmp.eq.s32.totalorder %s24, 1
      %p147 = scmp.ne.s32.totalorder %s142, %s144
      %p148 = scmp.eq.s32.totalorder %s24, 0
      %p149 = por %p147, %p148
      %p150 = scmp.ne.s32.totalorder %s142, %s144
      %p151 = scmp.eq.s32.totalorder %s29, 1
      %p152 = por %p150, %p151
      %p153 = scmp.ne.s32.totalorder %s144, %s145
      %p154 = scmp.eq.s32.totalorder %s29, 0
      %p155 = por %p153, %p154
      %p156 = scmp.ne.s32.totalorder %s144, %s145
      %p157 = scmp.eq.s32.totalorder %s30, 1
      %p158 = por %p156, %p157
      %p160 = scmp.ne.s32.totalorder %s145, %s159
      %p161 = scmp.eq.s32.totalorder %s30, 0
      %p162 = por %p160, %p161
      %s164 = sadd.s32 %s163, 1
      %p167 = scmp.eq.s32.totalorder %s24, 1
      %p168 = scmp.ne.s32.totalorder %s163, %s165
      %p169 = scmp.eq.s32.totalorder %s24, 0
      %p170 = por %p168, %p169
      %p171 = scmp.ne.s32.totalorder %s163, %s165
      %p172 = scmp.eq.s32.totalorder %s29, 1
      %p173 = por %p171, %p172
      %p174 = scmp.ne.s32.totalorder %s165, %s166
      %p175 = scmp.eq.s32.totalorder %s29, 0
      %p176 = por %p174, %p175
      %p177 = scmp.ne.s32.totalorder %s165, %s166
      %p178 = scmp.eq.s32.totalorder %s30, 1
      %p179 = por %p177, %p178
      %p181 = scmp.ne.s32.totalorder %s166, %s180
      %p182 = scmp.eq.s32.totalorder %s30, 0
      %p183 = por %p181, %p182
      %s185 = sadd.s32 %s184, 1
      %p188 = scmp.eq.s32.totalorder %s24, 1
      %p189 = scmp.ne.s32.totalorder %s184, %s186
      %p190 = scmp.eq.s32.totalorder %s24, 0
      %p191 = por %p189, %p190
      %p192 = scmp.ne.s32.totalorder %s184, %s186
      %p193 = scmp.eq.s32.totalorder %s29, 1
      %p194 = por %p192, %p193
      %p195 = scmp.ne.s32.totalorder %s186, %s187
      %p196 = scmp.eq.s32.totalorder %s29, 0
      %p197 = por %p195, %p196
      %p198 = scmp.ne.s32.totalorder %s186, %s187
      %p199 = scmp.eq.s32.totalorder %s30, 1
      %p200 = por %p198, %p199
      %p202 = scmp.ne.s32.totalorder %s187, %s201
      %p203 = scmp.eq.s32.totalorder %s30, 0
      %p204 = por %p202, %p203
      %s206 = sadd.s32 %s205, 1
      %p209 = scmp.eq.s32.totalorder %s24, 1
      %p210 = scmp.ne.s32.totalorder %s205, %s207
      %p211 = scmp.eq.s32.totalorder %s24, 0
      %p212 = por %p210, %p211
      %p213 = scmp.ne.s32.totalorder %s205, %s207
      %p214 = scmp.eq.s32.totalorder %s29, 1
      %p215 = por %p213, %p214
      %p216 = scmp.ne.s32.totalorder %s207, %s208
      %p217 = scmp.eq.s32.totalorder %s29, 0
      %p218 = por %p216, %p217
      %p219 = scmp.ne.s32.totalorder %s207, %s208
      %p220 = scmp.eq.s32.totalorder %s30, 1
      %p221 = por %p219, %p220
      %p223 = scmp.ne.s32.totalorder %s208, %s222
      %p224 = scmp.eq.s32.totalorder %s30, 0
      %p225 = por %p223, %p224
      %s227 = sadd.s32 %s226, 1
      %p230 = scmp.eq.s32.totalorder %s24, 1
      %p231 = scmp.ne.s32.totalorder %s226, %s228
      %p232 = scmp.eq.s32.totalorder %s24, 0
      %p233 = por %p231, %p232
      %p234 = scmp.ne.s32.totalorder %s226, %s228
      %p235 = scmp.eq.s32.totalorder %s29, 1
      %p236 = por %p234, %p235
      %p237 = scmp.ne.s32.totalorder %s228, %s229
      %p238 = scmp.eq.s32.totalorder %s29, 0
      %p239 = por %p237, %p238
      %p240 = scmp.ne.s32.totalorder %s228, %s229
      %p241 = scmp.eq.s32.totalorder %s30, 1
      %p242 = por %p240, %p241
      %p244 = scmp.ne.s32.totalorder %s229, %s243
      %p245 = scmp.eq.s32.totalorder %s30, 0
      %p246 = por %p244, %p245
      %s248 = sadd.s32 %s247, 1
      %p251 = scmp.eq.s32.totalorder %s24, 1
      %p252 = scmp.ne.s32.totalorder %s247, %s249
      %p253 = scmp.eq.s32.totalorder %s24, 0
      %p254 = por %p252, %p253
      %p255 = scmp.ne.s32.totalorder %s247, %s249
      %p256 = scmp.eq.s32.totalorder %s29, 1
      %p257 = por %p255, %p256
      %p258 = scmp.ne.s32.totalorder %s249, %s250
      %p259 = scmp.eq.s32.totalorder %s29, 0
      %p260 = por %p258, %p259
      %p261 = scmp.ne.s32.totalorder %s249, %s250
      %p262 = scmp.eq.s32.totalorder %s30, 1
      %p263 = por %p261, %p262
      %p265 = scmp.ne.s32.totalorder %s250, %s264
      %p266 = scmp.eq.s32.totalorder %s30, 0
      %p267 = por %p265, %p266
      %s269 = sadd.s32 %s268, 1
      %p272 = scmp.eq.s32.totalorder %s24, 1
      %p273 = scmp.ne.s32.totalorder %s268, %s270
      %p274 = scmp.eq.s32.totalorder %s24, 0
      %p275 = por %p273, %p274
      %p276 = scmp.ne.s32.totalorder %s268, %s270
      %p277 = scmp.eq.s32.totalorder %s29, 1
      %p278 = por %p276, %p277
      %p279 = scmp.ne.s32.totalorder %s270, %s271
      %p280 = scmp.eq.s32.totalorder %s29, 0
      %p281 = por %p279, %p280
      %p282 = scmp.ne.s32.totalorder %s270, %s271
      %p283 = scmp.eq.s32.totalorder %s30, 1
      %p284 = por %p282, %p283
      %p286 = scmp.ne.s32.totalorder %s271, %s285
      %p287 = scmp.eq.s32.totalorder %s30, 0
      %p288 = por %p286, %p287
      %s290 = sadd.s32 %s289, 1
      %p293 = scmp.eq.s32.totalorder %s24, 1
      %p294 = scmp.ne.s32.totalorder %s289, %s291
      %p295 = scmp.eq.s32.totalorder %s24, 0
      %p296 = por %p294, %p295
      %p297 = scmp.ne.s32.totalorder %s289, %s291
      %p298 = scmp.eq.s32.totalorder %s29, 1
      %p299 = por %p297, %p298
      %p300 = scmp.ne.s32.totalorder %s291, %s292
      %p301 = scmp.eq.s32.totalorder %s29, 0
      %p302 = por %p300, %p301
      %p303 = scmp.ne.s32.totalorder %s291, %s292
      %p304 = scmp.eq.s32.totalorder %s30, 1
      %p305 = por %p303, %p304
      %p307 = scmp.ne.s32.totalorder %s292, %s306
      %p308 = scmp.eq.s32.totalorder %s30, 0
      %p309 = por %p307, %p308
      %s311 = sadd.s32 %s310, 1
      %p314 = scmp.eq.s32.totalorder %s24, 1
      %p315 = scmp.ne.s32.totalorder %s310, %s312
      %p316 = scmp.eq.s32.totalorder %s24, 0
      %p317 = por %p315, %p316
      %p318 = scmp.ne.s32.totalorder %s310, %s312
      %p319 = scmp.eq.s32.totalorder %s29, 1
      %p320 = por %p318, %p319
      %p321 = scmp.ne.s32.totalorder %s312, %s313
      %p322 = scmp.eq.s32.totalorder %s29, 0
      %p323 = por %p321, %p322
      %p324 = scmp.ne.s32.totalorder %s312, %s313
      %p325 = scmp.eq.s32.totalorder %s30, 1
      %p326 = por %p324, %p325
      %p328 = scmp.ne.s32.totalorder %s313, %s327
      %p329 = scmp.eq.s32.totalorder %s30, 0
      %p330 = por %p328, %p329
      %s332 = sadd.s32 %s331, 1
      %p335 = scmp.eq.s32.totalorder %s24, 1
      %p336 = scmp.ne.s32.totalorder %s331, %s333
      %p337 = scmp.eq.s32.totalorder %s24, 0
      %p338 = por %p336, %p337
      %p339 = scmp.ne.s32.totalorder %s331, %s333
      %p340 = scmp.eq.s32.totalorder %s29, 1
      %p341 = por %p339, %p340
      %p342 = scmp.ne.s32.totalorder %s333, %s334
      %p343 = scmp.eq.s32.totalorder %s29, 0
      %p344 = por %p342, %p343
      %p345 = scmp.ne.s32.totalorder %s333, %s334
      %p346 = scmp.eq.s32.totalorder %s30, 1
      %p347 = por %p345, %p346
      %p349 = scmp.ne.s32.totalorder %s334, %s348
      %p350 = scmp.eq.s32.totalorder %s30, 0
      %p351 = por %p349, %p350
      %s353 = sadd.s32 %s352, 1
      %p356 = scmp.eq.s32.totalorder %s24, 1
      %p357 = scmp.ne.s32.totalorder %s352, %s354
      %p358 = scmp.eq.s32.totalorder %s24, 0
      %p359 = por %p357, %p358
      %p360 = scmp.ne.s32.totalorder %s352, %s354
      %p361 = scmp.eq.s32.totalorder %s29, 1
      %p362 = por %p360, %p361
      %p363 = scmp.ne.s32.totalorder %s354, %s355
      %p364 = scmp.eq.s32.totalorder %s29, 0
      %p365 = por %p363, %p364
      %p366 = scmp.ne.s32.totalorder %s354, %s355
      %p367 = scmp.eq.s32.totalorder %s30, 1
      %p368 = por %p366, %p367
      %p370 = scmp.ne.s32.totalorder %s355, %s369
      %p371 = scmp.eq.s32.totalorder %s30, 0
      %p372 = por %p370, %p371
      %s374 = sadd.s32 %s373, 1
      %p377 = scmp.eq.s32.totalorder %s24, 1
      %p378 = scmp.ne.s32.totalorder %s373, %s375
      %p379 = scmp.eq.s32.totalorder %s24, 0
      %p380 = por %p378, %p379
      %p381 = scmp.ne.s32.totalorder %s373, %s375
      %p382 = scmp.eq.s32.totalorder %s29, 1
      %p383 = por %p381, %p382
      %p384 = scmp.ne.s32.totalorder %s375, %s376
      %p385 = scmp.eq.s32.totalorder %s29, 0
      %p386 = por %p384, %p385
      %p387 = scmp.ne.s32.totalorder %s375, %s376
      %p388 = scmp.eq.s32.totalorder %s30, 1
      %p389 = por %p387, %p388
      %p391 = scmp.ne.s32.totalorder %s376, %s390
      %p392 = scmp.eq.s32.totalorder %s30, 0
      %p393 = por %p391, %p392
      %s395 = sadd.s32 %s394, 1
      %p398 = scmp.eq.s32.totalorder %s24, 1
      %p399 = scmp.ne.s32.totalorder %s394, %s396
      %p400 = scmp.eq.s32.totalorder %s24, 0
      %p401 = por %p399, %p400
      %p402 = scmp.ne.s32.totalorder %s394, %s396
      %p403 = scmp.eq.s32.totalorder %s29, 1
      %p404 = por %p402, %p403
      %p405 = scmp.ne.s32.totalorder %s396, %s397
      %p406 = scmp.eq.s32.totalorder %s29, 0
      %p407 = por %p405, %p406
      %p408 = scmp.ne.s32.totalorder %s396, %s397
      %p409 = scmp.eq.s32.totalorder %s30, 1
      %p410 = por %p408, %p409
      %p412 = scmp.ne.s32.totalorder %s397, %s411
      %p413 = scmp.eq.s32.totalorder %s30, 0
      %p414 = por %p412, %p413
      %s415 = ssub.s32 %s24, %s31
      %p416 = scmp.eq.s32.totalorder %s415, 0
      %s418 = sadd.s32 %s417, 1
      %s419 = scalar_select %p416, %s417, %s418
      %p422 = pneg %p416
      %p423 = scmp.eq.s32.totalorder %s24, 1
      %p424 = por %p422, %p423
      %p425 = scmp.ne.s32.totalorder %s417, %s420
      %p426 = scmp.eq.s32.totalorder %s24, 0
      %p427 = por %p425, %p426
      %p428 = scmp.ne.s32.totalorder %s417, %s420
      %p429 = scmp.eq.s32.totalorder %s29, 1
      %p430 = por %p428, %p429
      %p431 = scmp.ne.s32.totalorder %s420, %s421
      %p432 = scmp.eq.s32.totalorder %s29, 0
      %p433 = por %p431, %p432
      %p434 = scmp.ne.s32.totalorder %s420, %s421
      %p435 = scmp.eq.s32.totalorder %s30, 1
      %p436 = por %p434, %p435
      %p438 = scmp.ne.s32.totalorder %s421, %s437
      %p439 = scmp.eq.s32.totalorder %s30, 0
      %p440 = por %p438, %p439
      %p441 = scmp.le.s32.totalorder 1, %s24
      %p442 = scmp.lt.s32.totalorder %s24, 3
      %p443 = pnand %p441, %p442
      %p444 = pneg %p443
      // Predicated region
      $region9: #{transformer_forward.1} parent=5 // pred_check
        _
      $region10: #{transformer_forward.1} parent=5 // pred_check_branch
        %446 = sbr.rel (%p443) target = $region12
      $region11: #{transformer_forward.1} parent=5 // pred_region
        %s447 = ssub.s32 %s24, 1
        // Predicated region
        $region13: #{transformer_forward.1} parent=11 // pred_check
          %p448 = pneg %p71
        $region14: #{transformer_forward.1} parent=11 // pred_check_branch
          %450 = sbr.rel (%p448) target = $region16
        $region15: #{transformer_forward.1} parent=11 // pred_region
          _
        $region16: #{transformer_forward.1} parent=11 // pred_fallthru
          _
        // Predicated region
        $region17: #{transformer_forward.1} parent=11 // pred_check
          %p451 = pneg %p92
        $region18: #{transformer_forward.1} parent=11 // pred_check_branch
          %453 = sbr.rel (%p451) target = $region20
        $region19: #{transformer_forward.1} parent=11 // pred_region
          _
        $region20: #{transformer_forward.1} parent=11 // pred_fallthru
          _
        // Predicated region
        $region21: #{transformer_forward.1} parent=11 // pred_check
          %p454 = pneg %p113
        $region22: #{transformer_forward.1} parent=11 // pred_check_branch
          %456 = sbr.rel (%p454) target = $region24
        $region23: #{transformer_forward.1} parent=11 // pred_region
          _
        $region24: #{transformer_forward.1} parent=11 // pred_fallthru
          _
        // Predicated region
        $region25: #{transformer_forward.1} parent=11 // pred_check
          %p457 = pneg %p134
        $region26: #{transformer_forward.1} parent=11 // pred_check_branch
          %459 = sbr.rel (%p457) target = $region28
        $region27: #{transformer_forward.1} parent=11 // pred_region
          _
        $region28: #{transformer_forward.1} parent=11 // pred_fallthru
          _
        // Predicated region
        $region29: #{transformer_forward.1} parent=11 // pred_check
          %p460 = pneg %p155
        $region30: #{transformer_forward.1} parent=11 // pred_check_branch
          %462 = sbr.rel (%p460) target = $region32
        $region31: #{transformer_forward.1} parent=11 // pred_region
          _
        $region32: #{transformer_forward.1} parent=11 // pred_fallthru
          _
        // Predicated region
        $region33: #{transformer_forward.1} parent=11 // pred_check
          %p463 = pneg %p176
        $region34: #{transformer_forward.1} parent=11 // pred_check_branch
          %465 = sbr.rel (%p463) target = $region36
        $region35: #{transformer_forward.1} parent=11 // pred_region
          _
        $region36: #{transformer_forward.1} parent=11 // pred_fallthru
          _
        // Predicated region
        $region37: #{transformer_forward.1} parent=11 // pred_check
          %p466 = pneg %p197
        $region38: #{transformer_forward.1} parent=11 // pred_check_branch
          %468 = sbr.rel (%p466) target = $region40
        $region39: #{transformer_forward.1} parent=11 // pred_region
          _
        $region40: #{transformer_forward.1} parent=11 // pred_fallthru
          _
        // Predicated region
        $region41: #{transformer_forward.1} parent=11 // pred_check
          %p469 = pneg %p218
        $region42: #{transformer_forward.1} parent=11 // pred_check_branch
          %471 = sbr.rel (%p469) target = $region44
        $region43: #{transformer_forward.1} parent=11 // pred_region
          _
        $region44: #{transformer_forward.1} parent=11 // pred_fallthru
          _
        // Predicated region
        $region45: #{transformer_forward.1} parent=11 // pred_check
          %p472 = pneg %p239
        $region46: #{transformer_forward.1} parent=11 // pred_check_branch
          %474 = sbr.rel (%p472) target = $region48
        $region47: #{transformer_forward.1} parent=11 // pred_region
          _
        $region48: #{transformer_forward.1} parent=11 // pred_fallthru
          _
        // Predicated region
        $region49: #{transformer_forward.1} parent=11 // pred_check
          %p475 = pneg %p260
        $region50: #{transformer_forward.1} parent=11 // pred_check_branch
          %477 = sbr.rel (%p475) target = $region52
        $region51: #{transformer_forward.1} parent=11 // pred_region
          _
        $region52: #{transformer_forward.1} parent=11 // pred_fallthru
          _
        // Predicated region
        $region53: #{transformer_forward.1} parent=11 // pred_check
          %p478 = pneg %p281
        $region54: #{transformer_forward.1} parent=11 // pred_check_branch
          %480 = sbr.rel (%p478) target = $region56
        $region55: #{transformer_forward.1} parent=11 // pred_region
          _
        $region56: #{transformer_forward.1} parent=11 // pred_fallthru
          _
        // Predicated region
        $region57: #{transformer_forward.1} parent=11 // pred_check
          %p481 = pneg %p302
        $region58: #{transformer_forward.1} parent=11 // pred_check_branch
          %483 = sbr.rel (%p481) target = $region60
        $region59: #{transformer_forward.1} parent=11 // pred_region
          _
        $region60: #{transformer_forward.1} parent=11 // pred_fallthru
          _
        // Predicated region
        $region61: #{transformer_forward.1} parent=11 // pred_check
          %p484 = pneg %p323
        $region62: #{transformer_forward.1} parent=11 // pred_check_branch
          %486 = sbr.rel (%p484) target = $region64
        $region63: #{transformer_forward.1} parent=11 // pred_region
          _
        $region64: #{transformer_forward.1} parent=11 // pred_fallthru
          _
        // Predicated region
        $region65: #{transformer_forward.1} parent=11 // pred_check
          %p487 = pneg %p344
        $region66: #{transformer_forward.1} parent=11 // pred_check_branch
          %489 = sbr.rel (%p487) target = $region68
        $region67: #{transformer_forward.1} parent=11 // pred_region
          _
        $region68: #{transformer_forward.1} parent=11 // pred_fallthru
          _
        // Predicated region
        $region69: #{transformer_forward.1} parent=11 // pred_check
          %p490 = pneg %p365
        $region70: #{transformer_forward.1} parent=11 // pred_check_branch
          %492 = sbr.rel (%p490) target = $region72
        $region71: #{transformer_forward.1} parent=11 // pred_region
          _
        $region72: #{transformer_forward.1} parent=11 // pred_fallthru
          _
        // Predicated region
        $region73: #{transformer_forward.1} parent=11 // pred_check
          %p493 = pneg %p386
        $region74: #{transformer_forward.1} parent=11 // pred_check_branch
          %495 = sbr.rel (%p493) target = $region76
        $region75: #{transformer_forward.1} parent=11 // pred_region
          _
        $region76: #{transformer_forward.1} parent=11 // pred_fallthru
          _
        // Predicated region
        $region77: #{transformer_forward.1} parent=11 // pred_check
          %p496 = pneg %p407
        $region78: #{transformer_forward.1} parent=11 // pred_check_branch
          %498 = sbr.rel (%p496) target = $region80
        $region79: #{transformer_forward.1} parent=11 // pred_region
          _
        $region80: #{transformer_forward.1} parent=11 // pred_fallthru
          _
      $region12: #{transformer_forward.1} parent=5 // pred_fallthru
        _
      %p499 = scmp.lt.s32.totalorder %s24, 2
      // Predicated region
      $region81: #{transformer_forward.1} parent=5 // pred_check
        %p500 = pneg %p499
      $region82: #{transformer_forward.1} parent=5 // pred_check_branch
        %502 = sbr.rel (%p500) target = $region84
      $region83: #{transformer_forward.1} parent=5 // pred_region
        // Predicated region
        $region85: #{transformer_forward.1} parent=83 // pred_check
          %p503 = pneg %p44
        $region86: #{transformer_forward.1} parent=83 // pred_check_branch
          %505 = sbr.rel (%p503) target = $region88
        $region87: #{transformer_forward.1} parent=83 // pred_region
          %p506 = scmp.lt.s32.totalorder %s24, 1
          %s507 = scalar_select %p506, %s24, 1
          %s508 = smul.addr %s507, 8
          %s509 = scalar_lea.vmem %s0, %s508
        $region88: #{transformer_forward.1} parent=83 // pred_fallthru
          _
      $region84: #{transformer_forward.1} parent=5 // pred_fallthru
        _
      %p510 = scmp.le.s32.totalorder 1, %s24
      %p511 = scmp.lt.s32.totalorder %s24, 3
      %p512 = pnand %p510, %p511
      %p513 = pneg %p512
      // Predicated region
      $region89: #{transformer_forward.1} parent=5 // pred_check
        _
      $region90: #{transformer_forward.1} parent=5 // pred_check_branch
        %515 = sbr.rel (%p512) target = $region92
      $region91: #{transformer_forward.1} parent=5 // pred_region
        %s516 = ssub.s32 %s24, 1
        %p517 = scmp.lt.s32.totalorder %s29, 1
        %s518 = scalar_select %p517, %s29, 1
        %s519 = smul.addr %s518, 8
        %s520 = scalar_lea.vmem %s0, %s519
        %p521 = pneg %p50
        %p522 = pneg %p47
        %p523 = pneg %p71
        %p524 = pneg %p68
        %p525 = pneg %p92
        %p526 = pneg %p89
        %p527 = pneg %p113
        %p528 = pneg %p110
        %p529 = pneg %p134
        %p530 = pneg %p131
        %p531 = pneg %p155
        %p532 = pneg %p152
        %p533 = pneg %p176
        %p534 = pneg %p173
        %p535 = pneg %p197
        %p536 = pneg %p194
        %p537 = pneg %p218
        %p538 = pneg %p215
        %p539 = pneg %p239
        %p540 = pneg %p236
        %p541 = pneg %p260
        %p542 = pneg %p257
        %p543 = pneg %p281
        %p544 = pneg %p278
        %p545 = pneg %p302
        %p546 = pneg %p299
        %p547 = pneg %p323
        %p548 = pneg %p320
        %p549 = pneg %p344
        %p550 = pneg %p341
        %p551 = pneg %p365
        %p552 = pneg %p362
        %p553 = pneg %p386
        %p554 = pneg %p383
        %p555 = pneg %p407
        %p556 = pneg %p404
        %p557 = pneg %p433
        %p558 = pneg %p430
        %s559 = sand.u32 %s420, 1
        %s560 = sand.u32 %s420, 1
        %s561 = smul.addr %s560, 16
        %s562 = scalar_lea.vmem [#allocation2], %s561
        %p563 = scmp.lt.s32.totalorder %s29, 1
        %s564 = scalar_select %p563, %s29, 1
        %s565 = smul.addr %s564, 8
        %s566 = scalar_lea.vmem %s0, %s565
        %v568 = vld [vmem:[%s566] sm:$0xff]
        %v569 = vld [vmem:[%s2] sm:$0xf]
        %v570 = vld [vmem:[%s3] sm:$0x1]
        %v572 = vperm.slane %v570, 0
        %vm574 = vcmask 31744
        %v576 = vsel %vm574, %v568, 0
        %vm578 = vcmask 1043456
        %v580 = vsel %vm578, %v569, 0
        %582 = vmatpush.msra.mxu0 0.0
        %583 = vmatpush.msra.mxu0 0.0
        %584 = vmatpush.msra.mxu0 0.0
        %585 = vmatpush.msra.mxu0 0.0
        %586 = vmatpush.msra.mxu0 0.0
        %587 = vmatpush.msra.mxu0 0.0
        %588 = vmatpush.msra.mxu0 0.0
        %589 = vmatpush.msra.mxu0 0.0
        %590 = vmatpush.msra.mxu0 0.0
        %591 = vmatpush.msra.mxu0 0.0
        %592 = vmatpush.msra.mxu0 0.0
        %593 = vmatpush.msra.mxu0 0.0
        %594 = vmatpush.msra.mxu0 0.0
        %595 = vmatpush.msra.mxu0 0.0
        %596 = vmatpush.msra.mxu0 0.0
        %597 = vmatpush.msra.mxu0 %v580
        %598 = vmatmul.f32.gmra.mxu0 %v576
        %v599 = vpop.f32.mrf.mxu0
        %v600 = vadd.f32 %v572, %v599
        %601 = vdwg.mxu0
        %v602 = vld [vmem:[%s1] sm:$0xff]
        %v603 = vadd.f32 %v600, %v602
        %v604 = vlaneseq
        %v605 = vshrl.u32 %v604, 7
        %v606 = vlaneseq
        %v607 = vand.u32 %v606, 127
        %vm608 = vcmp.le.s32.totalorder %v607, %v605
        %v609 = vsel %vm608, 0.0, -1e+30
        %v610 = vadd.f32 %v603, 0.0
        %v611 = vld [vmem:[%s4] sm:$0x1]
        %v612 = vld [vmem:[%s5] sm:$0x1]
        %vm613 = vcmask 261120
        %v614 = vsel %vm613, %v610, 0.0
        %615 = vadd.xlane.f32.xlu0 %v614
        %v616 = vpop.xlane.xlu0 %615
        %v617 = vrcp.pop 32.0
        %v618 = vmul.f32 32.0, %v617
        %v619 = vsub.f32 1.0, %v618
        %v620 = vmul.f32 %v617, %v619
        %v621 = vadd.f32 %v617, %v620
        %vm622 = vweird.f32 %v617
        %v623 = vsel %vm622, %v617, %v621
        %v624 = vmul.f32 %v616, %v623
        %v625 = vsub.f32 %v610, %v624
        %v626 = vmul.f32 %v625, %v625
        %v627 = vsel %vm613, %v626, 0.0
        %628 = vadd.xlane.f32.xlu0 %v627
        %v629 = vpop.xlane.xlu0 %628
        %v630 = vmul.f32 %v629, %v623
        %v631 = vadd.f32 %v630, 1e-05
        %v632 = vrsqrt.pop %v631
        %v633 = vmul.f32 %v632, %v631
        %v634 = vmul.f32 %v633, %v632
        %v635 = vmul.f32 0.5, %v634
        %v636 = vsub.f32 1.5, %v635
        %v637 = vmul.f32 %v632, %v636
        %vm638 = vweird.f32 %v631
        %vm639 = vweird.f32 %v632
        %vm640 = vmor %vm638, %vm639
        %v641 = vsel %vm640, %v632, %v637
        %v642 = vmul.f32 %v625, %v641
        %v644 = vperm.slane %v611, 0
        %v646 = vmul.f32 %v642, %v644
        %v648 = vperm.slane %v612, 0
        %v650 = vadd.f32 %v646, %v648
        %v651 = vpack.c.bf16 %v650, %v650
        %v652 = vld [vmem:[%s6] sm:$0xf]
        %v653 = vld [vmem:[%s6 + $0x4] sm:$0xf]
        %v654 = vld [vmem:[%s6 + $0x8] sm:$0xf]
        %v655 = vld [vmem:[%s6 + $0xc] sm:$0xf]
        %v656 = vld [vmem:[%s7] sm:$0x1]
        %v658 = vperm.slane %v656, 0
        %v664 = vunpack.c.l.b16 %v652
        %v665 = vunpack.c.l.b16 %v653
        %v666 = vunpack.c.l.b16 %v654
        %v667 = vunpack.c.l.b16 %v655
        %v668 = vpack.c.b16 %v665, %v664
        %v669 = vpack.c.b16 %v667, %v666
        %v673 = vsel %vm613, %v651, 0
        %675 = vmatpush.bf16.msra.mxu0 0
        %676 = vmatpush.bf16.msra.mxu0 0
        %677 = vmatpush.bf16.msra.mxu0 0
        %678 = vmatpush.bf16.msra.mxu0 0
        %679 = vmatpush.bf16.msra.mxu0 0
        %680 = vmatpush.bf16.msra.mxu0 0
        %681 = vmatpush.bf16.msra.mxu0 %v669
        %682 = vmatpush.bf16.msra.mxu0 %v668
        %683 = vmatmul.bf16.gmra.mxu0 %v673
        %v684 = vpop.f32.mrf.mxu0
        %v685 = vadd.f32 %v658, %v684
        %v686 = vpop.f32.mrf.mxu0
        %687 = vdwg.mxu0
        %v688 = vmul.f32 %v685, 0.35355338
        %v689 = vpack.c.bf16 %v688, %v688
        %v690 = vpack.c.bf16 %v685, %v685
        %692 = vrot.lane.b32.xlu0 %v690, 96
        %v693 = vpop.permute.xlu0 %692
        %vm694 = vcmask 64512
        %v696 = vsel %vm694, %v689, 0
        %v699 = vsel %vm694, %v693, 0
        %701 = vmatpush.bf16.xpose.msra.mxu0 0
        %702 = vmatpush.bf16.xpose.msra.mxu0 0
        %703 = vmatpush.bf16.xpose.msra.mxu0 0
        %704 = vmatpush.bf16.xpose.msra.mxu0 0
        %705 = vmatpush.bf16.xpose.msra.mxu0 0
        %706 = vmatpush.bf16.xpose.msra.mxu0 0
        %707 = vmatpush.bf16.xpose.msra.mxu0 0
        %708 = vmatpush.bf16.xpose.msra.mxu0 %v699
        %709 = vmatmul.bf16.gmra.mxu0 %v696
        %v710 = vpop.f32.mrf.mxu0
        %v711 = vadd.f32 %v609, %v710
        %v712 = vpop.f32.mrf.mxu0
        %713 = vdwg.mxu0
        %v714 = vsel %vm694, %v711, -inf
        %715 = vmax.xlane.f32.xlu0 %v714
        %v716 = vpop.xlane.xlu0 %715
        %v717 = vsub.f32 %v711, %v716
        %v718 = vmul.f32 %v717, 1.442695
        %v719 = vpow.pop %v718
        %v720 = vsel %vm694, %v719, 0.0
        %721 = vadd.xlane.f32.xlu0 %v720
        %v722 = vpop.xlane.xlu0 %721
        %v723 = vrcp.pop %v722
        %v724 = vmul.f32 %v719, %v723
        %v725 = vpack.c.bf16 %v724, %v724
        %726 = vrot.lane.b32.xlu0 %v690, 64
        %v727 = vpop.permute.xlu0 %726
        %v729 = vsel %vm694, %v725, 0
        %v732 = vsel %vm578, %v727, 0
        %734 = vmatpush.bf16.msra.mxu0 0
        %735 = vmatpush.bf16.msra.mxu0 0
        %736 = vmatpush.bf16.msra.mxu0 0
        %737 = vmatpush.bf16.msra.mxu0 0
        %738 = vmatpush.bf16.msra.mxu0 0
        %739 = vmatpush.bf16.msra.mxu0 0
        %740 = vmatpush.bf16.msra.mxu0 0
        %741 = vmatpush.bf16.msra.mxu0 %v732
        %742 = vmatmul.bf16.gmra.mxu0 %v729
        %v743 = vpop.f32.mrf.mxu0
        %v744 = vadd.f32 0.0, %v743
        %v745 = vpop.f32.mrf.mxu0
        %746 = vdwg.mxu0
        %748 = vrot.lane.b32.xlu0 %v689, 120
        %v749 = vpop.permute.xlu0 %748
        %750 = vrot.lane.b32.xlu0 %v690, 88
        %v751 = vpop.permute.xlu0 %750
        %v753 = vsel %vm694, %v749, 0
        %v756 = vsel %vm694, %v751, 0
        %758 = vmatpush.bf16.xpose.msra.mxu0 0
        %759 = vmatpush.bf16.xpose.msra.mxu0 0
        %760 = vmatpush.bf16.xpose.msra.mxu0 0
        %761 = vmatpush.bf16.xpose.msra.mxu0 0
        %762 = vmatpush.bf16.xpose.msra.mxu0 0
        %763 = vmatpush.bf16.xpose.msra.mxu0 0
        %764 = vmatpush.bf16.xpose.msra.mxu0 0
        %765 = vmatpush.bf16.xpose.msra.mxu0 %v756
        %766 = vmatmul.bf16.gmra.mxu0 %v753
        %v767 = vpop.f32.mrf.mxu0
        %v768 = vadd.f32 %v609, %v767
        %v769 = vpop.f32.mrf.mxu0
        %770 = vdwg.mxu0
        %v771 = vsel %vm694, %v768, -inf
        %772 = vmax.xlane.f32.xlu0 %v771
        %v773 = vpop.xlane.xlu0 %772
        %v774 = vsub.f32 %v768, %v773
        %v775 = vmul.f32 %v774, 1.442695
        %v776 = vpow.pop %v775
        %v777 = vsel %vm694, %v776, 0.0
        %778 = vadd.xlane.f32.xlu0 %v777
        %v779 = vpop.xlane.xlu0 %778
        %v780 = vrcp.pop %v779
        %v781 = vmul.f32 %v776, %v780
        %v782 = vpack.c.bf16 %v781, %v781
        %783 = vrot.lane.b32.xlu0 %v690, 56
        %v784 = vpop.permute.xlu0 %783
        %v786 = vsel %vm694, %v782, 0
        %v789 = vsel %vm578, %v784, 0
        %791 = vmatpush.bf16.msra.mxu0 0
        %792 = vmatpush.bf16.msra.mxu0 0
        %793 = vmatpush.bf16.msra.mxu0 0
        %794 = vmatpush.bf16.msra.mxu0 0
        %795 = vmatpush.bf16.msra.mxu0 0
        %796 = vmatpush.bf16.msra.mxu0 0
        %797 = vmatpush.bf16.msra.mxu0 0
        %798 = vmatpush.bf16.msra.mxu0 %v789
        %799 = vmatmul.bf16.gmra.mxu0 %v786
        %v800 = vpop.f32.mrf.mxu0
        %v801 = vadd.f32 0.0, %v800
        %v802 = vpop.f32.mrf.mxu0
        %803 = vdwg.mxu0
        %804 = vrot.lane.b32.xlu0 %v689, 112
        %v805 = vpop.permute.xlu0 %804
        %806 = vrot.lane.b32.xlu0 %v690, 80
        %v807 = vpop.permute.xlu0 %806
        %v809 = vsel %vm694, %v805, 0
        %v812 = vsel %vm694, %v807, 0
        %814 = vmatpush.bf16.xpose.msra.mxu0 0
        %815 = vmatpush.bf16.xpose.msra.mxu0 0
        %816 = vmatpush.bf16.xpose.msra.mxu0 0
        %817 = vmatpush.bf16.xpose.msra.mxu0 0
        %818 = vmatpush.bf16.xpose.msra.mxu0 0
        %819 = vmatpush.bf16.xpose.msra.mxu0 0
        %820 = vmatpush.bf16.xpose.msra.mxu0 0
        %821 = vmatpush.bf16.xpose.msra.mxu0 %v812
        %822 = vmatmul.bf16.gmra.mxu0 %v809
        %v823 = vpop.f32.mrf.mxu0
        %v824 = vadd.f32 %v609, %v823
        %v825 = vpop.f32.mrf.mxu0
        %826 = vdwg.mxu0
        %v827 = vsel %vm694, %v824, -inf
        %828 = vmax.xlane.f32.xlu0 %v827
        %v829 = vpop.xlane.xlu0 %828
        %v830 = vsub.f32 %v824, %v829
        %v831 = vmul.f32 %v830, 1.442695
        %v832 = vpow.pop %v831
        %v833 = vsel %vm694, %v832, 0.0
        %834 = vadd.xlane.f32.xlu0 %v833
        %v835 = vpop.xlane.xlu0 %834
        %v836 = vrcp.pop %v835
        %v837 = vmul.f32 %v832, %v836
        %v838 = vpack.c.bf16 %v837, %v837
        %839 = vrot.lane.b32.xlu0 %v690, 48
        %v840 = vpop.permute.xlu0 %839
        %v842 = vsel %vm694, %v838, 0
        %v845 = vsel %vm578, %v840, 0
        %847 = vmatpush.bf16.msra.mxu0 0
        %848 = vmatpush.bf16.msra.mxu0 0
        %849 = vmatpush.bf16.msra.mxu0 0
        %850 = vmatpush.bf16.msra.mxu0 0
        %851 = vmatpush.bf16.msra.mxu0 0
        %852 = vmatpush.bf16.msra.mxu0 0
        %853 = vmatpush.bf16.msra.mxu0 0
        %854 = vmatpush.bf16.msra.mxu0 %v845
        %855 = vmatmul.bf16.gmra.mxu0 %v842
        %v856 = vpop.f32.mrf.mxu0
        %v857 = vadd.f32 0.0, %v856
        %v858 = vpop.f32.mrf.mxu0
        %859 = vdwg.mxu0
        %860 = vrot.lane.b32.xlu0 %v689, 104
        %v861 = vpop.permute.xlu0 %860
        %862 = vrot.lane.b32.xlu0 %v690, 72
        %v863 = vpop.permute.xlu0 %862
        %v865 = vsel %vm694, %v861, 0
        %v868 = vsel %vm694, %v863, 0
        %870 = vmatpush.bf16.xpose.msra.mxu0 0
        %871 = vmatpush.bf16.xpose.msra.mxu0 0
        %872 = vmatpush.bf16.xpose.msra.mxu0 0
        %873 = vmatpush.bf16.xpose.msra.mxu0 0
        %874 = vmatpush.bf16.xpose.msra.mxu0 0
        %875 = vmatpush.bf16.xpose.msra.mxu0 0
        %876 = vmatpush.bf16.xpose.msra.mxu0 0
        %877 = vmatpush.bf16.xpose.msra.mxu0 %v868
        %878 = vmatmul.bf16.gmra.mxu0 %v865
        %v879 = vpop.f32.mrf.mxu0
        %v880 = vadd.f32 %v609, %v879
        %v881 = vpop.f32.mrf.mxu0
        %882 = vdwg.mxu0
        %v883 = vsel %vm694, %v880, -inf
        %884 = vmax.xlane.f32.xlu0 %v883
        %v885 = vpop.xlane.xlu0 %884
        %v886 = vsub.f32 %v880, %v885
        %v887 = vmul.f32 %v886, 1.442695
        %v888 = vpow.pop %v887
        %v889 = vsel %vm694, %v888, 0.0
        %890 = vadd.xlane.f32.xlu0 %v889
        %v891 = vpop.xlane.xlu0 %890
        %v892 = vrcp.pop %v891
        %v893 = vmul.f32 %v888, %v892
        %v894 = vpack.c.bf16 %v893, %v893
        %895 = vrot.lane.b32.xlu0 %v690, 40
        %v896 = vpop.permute.xlu0 %895
        %v898 = vsel %vm694, %v894, 0
        %v901 = vsel %vm578, %v896, 0
        %903 = vmatpush.bf16.msra.mxu0 0
        %904 = vmatpush.bf16.msra.mxu0 0
        %905 = vmatpush.bf16.msra.mxu0 0
        %906 = vmatpush.bf16.msra.mxu0 0
        %907 = vmatpush.bf16.msra.mxu0 0
        %908 = vmatpush.bf16.msra.mxu0 0
        %909 = vmatpush.bf16.msra.mxu0 0
        %910 = vmatpush.bf16.msra.mxu0 %v901
        %911 = vmatmul.bf16.gmra.mxu0 %v898
        %v912 = vpop.f32.mrf.mxu0
        %v913 = vadd.f32 0.0, %v912
        %v914 = vpop.f32.mrf.mxu0
        %915 = vdwg.mxu0
        %917 = vrot.lane.b32.xlu0 %v801, 8
        %v918 = vpop.permute.xlu0 %917
        %921 = vrot.lane.b32.xlu0 %v857, 16
        %v922 = vpop.permute.xlu0 %921
        %925 = vrot.lane.b32.xlu0 %v913, 24
        %v926 = vpop.permute.xlu0 %925
        %v928 = vsel %vm694, %v744, %v918
        %vm929 = vcmask 130048
        %v930 = vsel %vm929, %v928, %v922
        %vm931 = vcmask 195584
        %v932 = vsel %vm931, %v930, %v926
        %v933 = vpack.c.bf16 %v932, %v932
        %v934 = vld [vmem:[%s8] sm:$0xf]
        %v935 = vld [vmem:[%s8 + $0x4] sm:$0xf]
        %v936 = vld [vmem:[%s8 + $0x8] sm:$0xf]
        %v937 = vld [vmem:[%s8 + $0xc] sm:$0xf]
        %v938 = vld [vmem:[%s9] sm:$0x1]
        %v940 = vperm.slane %v938, 0
        %v946 = vunpack.c.l.b16 %v934
        %v947 = vunpack.c.l.b16 %v935
        %v948 = vunpack.c.l.b16 %v936
        %v949 = vunpack.c.l.b16 %v937
        %v950 = vpack.c.b16 %v947, %v946
        %v951 = vpack.c.b16 %v949, %v948
        %v955 = vsel %vm613, %v933, 0
        %957 = vmatpush.bf16.msra.mxu0 0
        %958 = vmatpush.bf16.msra.mxu0 0
        %959 = vmatpush.bf16.msra.mxu0 0
        %960 = vmatpush.bf16.msra.mxu0 0
        %961 = vmatpush.bf16.msra.mxu0 0
        %962 = vmatpush.bf16.msra.mxu0 0
        %963 = vmatpush.bf16.msra.mxu0 %v951
        %964 = vmatpush.bf16.msra.mxu0 %v950
        %965 = vmatmul.bf16.gmra.mxu0 %v955
        %v966 = vpop.f32.mrf.mxu0
        %v967 = vadd.f32 %v940, %v966
        %v968 = vpop.f32.mrf.mxu0
        %969 = vdwg.mxu0
        %v970 = vadd.f32 %v610, %v967
        %v971 = vld [vmem:[%s10] sm:$0x1]
        %v972 = vld [vmem:[%s11] sm:$0x1]
        %v973 = vsel %vm613, %v970, 0.0
        %974 = vadd.xlane.f32.xlu0 %v973
        %v975 = vpop.xlane.xlu0 %974
        %v976 = vmul.f32 %v975, %v623
        %v977 = vsub.f32 %v970, %v976
        %v978 = vmul.f32 %v977, %v977
        %v979 = vsel %vm613, %v978, 0.0
        %980 = vadd.xlane.f32.xlu0 %v979
        %v981 = vpop.xlane.xlu0 %980
        %v982 = vmul.f32 %v981, %v623
        %v983 = vadd.f32 %v982, 1e-05
        %v984 = vrsqrt.pop %v983
        %v985 = vmul.f32 %v984, %v983
        %v986 = vmul.f32 %v985, %v984
        %v987 = vmul.f32 0.5, %v986
        %v988 = vsub.f32 1.5, %v987
        %v989 = vmul.f32 %v984, %v988
        %vm990 = vweird.f32 %v983
        %vm991 = vweird.f32 %v984
        %vm992 = vmor %vm990, %vm991
        %v993 = vsel %vm992, %v984, %v989
        %v994 = vmul.f32 %v977, %v993
        %v996 = vperm.slane %v971, 0
        %v998 = vmul.f32 %v994, %v996
        %v1000 = vperm.slane %v972, 0
        %v1002 = vadd.f32 %v998, %v1000
        %v1003 = vpack.c.bf16 %v1002, %v1002
        %v1004 = vld [vmem:[%s12] sm:$0xf]
        %v1005 = vld [vmem:[%s12 + $0x4] sm:$0xf]
        %v1006 = vld [vmem:[%s12 + $0x8] sm:$0xf]
        %v1007 = vld [vmem:[%s12 + $0xc] sm:$0xf]
        %v1008 = vld [vmem:[%s13] sm:$0x1]
        %v1010 = vperm.slane %v1008, 0
        %v1016 = vunpack.c.l.b16 %v1004
        %v1017 = vunpack.c.l.b16 %v1005
        %v1018 = vunpack.c.l.b16 %v1006
        %v1019 = vunpack.c.l.b16 %v1007
        %v1020 = vpack.c.b16 %v1017, %v1016
        %v1021 = vpack.c.b16 %v1019, %v1018
        %v1025 = vsel %vm613, %v1003, 0
        %1027 = vmatpush.bf16.msra.mxu0 0
        %1028 = vmatpush.bf16.msra.mxu0 0
        %1029 = vmatpush.bf16.msra.mxu0 0
        %1030 = vmatpush.bf16.msra.mxu0 0
        %1031 = vmatpush.bf16.msra.mxu0 0
        %1032 = vmatpush.bf16.msra.mxu0 0
        %1033 = vmatpush.bf16.msra.mxu0 %v1021
        %1034 = vmatpush.bf16.msra.mxu0 %v1020
        %1035 = vmatmul.bf16.gmra.mxu0 %v1025
        %v1036 = vpop.f32.mrf.mxu0
        %v1037 = vadd.f32 %v1010, %v1036
        %v1038 = vpop.f32.mrf.mxu0
        %1039 = vdwg.mxu0
        %v1040 = vmul.f32 %v1037, %v1037
        %v1041 = vmul.f32 %v1037, %v1040
        %v1042 = vmul.f32 %v1041, 0.044715
        %v1043 = vadd.f32 %v1037, %v1042
        %v1044 = vmul.f32 %v1043, 0.7978846
        %v1045 = vtanh.pop %v1044
        %v1046 = vadd.f32 %v1045, 1.0
        %v1047 = vmul.f32 %v1046, 0.5
        %v1048 = vmul.f32 %v1037, %v1047
        %v1049 = vpack.c.bf16 %v1048, %v1048
        %v1050 = vld [vmem:[%s14] sm:$0xf]
        %v1051 = vld [vmem:[%s14 + $0x4] sm:$0xf]
        %v1052 = vld [vmem:[%s14 + $0x8] sm:$0xf]
        %v1053 = vld [vmem:[%s14 + $0xc] sm:$0xf]
        %v1054 = vld [vmem:[%s14 + $0x10] sm:$0xf]
        %v1055 = vld [vmem:[%s14 + $0x14] sm:$0xf]
        %v1056 = vld [vmem:[%s14 + $0x18] sm:$0xf]
        %v1057 = vld [vmem:[%s14 + $0x1c] sm:$0xf]
        %v1058 = vld [vmem:[%s14 + $0x20] sm:$0xf]
        %v1059 = vld [vmem:[%s14 + $0x24] sm:$0xf]
        %v1060 = vld [vmem:[%s14 + $0x28] sm:$0xf]
        %v1061 = vld [vmem:[%s14 + $0x2c] sm:$0xf]
        %v1062 = vld [vmem:[%s14 + $0x30] sm:$0xf]
        %v1063 = vld [vmem:[%s14 + $0x34] sm:$0xf]
        %v1064 = vld [vmem:[%s14 + $0x38] sm:$0xf]
        %v1065 = vld [vmem:[%s14 + $0x3c] sm:$0xf]
        %v1066 = vld [vmem:[%s15] sm:$0x1]
        %v1068 = vperm.slane %v1066, 0
        %v1086 = vunpack.c.l.b16 %v1050
        %v1087 = vunpack.c.l.b16 %v1051
        %v1088 = vunpack.c.l.b16 %v1052
        %v1089 = vunpack.c.l.b16 %v1053
        %v1090 = vunpack.c.l.b16 %v1054
        %v1091 = vunpack.c.l.b16 %v1055
        %v1092 = vunpack.c.l.b16 %v1056
        %v1093 = vunpack.c.l.b16 %v1057
        %v1094 = vunpack.c.l.b16 %v1058
        %v1095 = vunpack.c.l.b16 %v1059
        %v1096 = vunpack.c.l.b16 %v1060
        %v1097 = vunpack.c.l.b16 %v1061
        %v1098 = vunpack.c.l.b16 %v1062
        %v1099 = vunpack.c.l.b16 %v1063
        %v1100 = vunpack.c.l.b16 %v1064
        %v1101 = vunpack.c.l.b16 %v1065
        %v1102 = vpack.c.b16 %v1087, %v1086
        %v1103 = vpack.c.b16 %v1089, %v1088
        %v1104 = vpack.c.b16 %v1091, %v1090
        %v1105 = vpack.c.b16 %v1093, %v1092
        %v1106 = vpack.c.b16 %v1095, %v1094
        %v1107 = vpack.c.b16 %v1097, %v1096
        %v1108 = vpack.c.b16 %v1099, %v1098
        %v1109 = vpack.c.b16 %v1101, %v1100
        %1118 = vmatpush.bf16.msra.mxu0 %v1109
        %1119 = vmatpush.bf16.msra.mxu0 %v1108
        %1120 = vmatpush.bf16.msra.mxu0 %v1107
        %1121 = vmatpush.bf16.msra.mxu0 %v1106
        %1122 = vmatpush.bf16.msra.mxu0 %v1105
        %1123 = vmatpush.bf16.msra.mxu0 %v1104
        %1124 = vmatpush.bf16.msra.mxu0 %v1103
        %1125 = vmatpush.bf16.msra.mxu0 %v1102
        %1126 = vmatmul.bf16.gmra.mxu0 %v1049
        %v1127 = vpop.f32.mrf.mxu0
        %v1128 = vadd.f32 %v1068, %v1127
        %v1129 = vpop.f32.mrf.mxu0
        %1130 = vdwg.mxu0
        %v1131 = vadd.f32 %v970, %v1128
        %s1132 = scalar_lea.vmem %s4, 1
        %v1133 = vld [vmem:[%s1132] sm:$0x1]
        %s1134 = scalar_lea.vmem %s5, 1
        %v1135 = vld [vmem:[%s1134] sm:$0x1]
        %v1136 = vsel %vm613, %v1131, 0.0
        %1137 = vadd.xlane.f32.xlu0 %v1136
        %v1138 = vpop.xlane.xlu0 %1137
        %v1139 = vmul.f32 %v1138, %v623
        %v1140 = vsub.f32 %v1131, %v1139
        %v1141 = vmul.f32 %v1140, %v1140
        %v1142 = vsel %vm613, %v1141, 0.0
        %1143 = vadd.xlane.f32.xlu0 %v1142
        %v1144 = vpop.xlane.xlu0 %1143
        %v1145 = vmul.f32 %v1144, %v623
        %v1146 = vadd.f32 %v1145, 1e-05
        %v1147 = vrsqrt.pop %v1146
        %v1148 = vmul.f32 %v1147, %v1146
        %v1149 = vmul.f32 %v1148, %v1147
        %v1150 = vmul.f32 0.5, %v1149
        %v1151 = vsub.f32 1.5, %v1150
        %v1152 = vmul.f32 %v1147, %v1151
        %vm1153 = vweird.f32 %v1146
        %vm1154 = vweird.f32 %v1147
        %vm1155 = vmor %vm1153, %vm1154
        %v1156 = vsel %vm1155, %v1147, %v1152
        %v1157 = vmul.f32 %v1140, %v1156
        %v1159 = vperm.slane %v1133, 0
        %v1161 = vmul.f32 %v1157, %v1159
        %v1163 = vperm.slane %v1135, 0
        %v1165 = vadd.f32 %v1161, %v1163
        %v1166 = vpack.c.bf16 %v1165, %v1165
        %s1167 = scalar_lea.vmem %s6, 16
        %v1168 = vld [vmem:[%s1167] sm:$0xf]
        %v1169 = vld [vmem:[%s1167 + $0x4] sm:$0xf]
        %v1170 = vld [vmem:[%s1167 + $0x8] sm:$0xf]
        %v1171 = vld [vmem:[%s1167 + $0xc] sm:$0xf]
        %s1172 = scalar_lea.vmem %s7, 1
        %v1173 = vld [vmem:[%s1172] sm:$0x1]
        %v1175 = vperm.slane %v1173, 0
        %v1181 = vunpack.c.l.b16 %v1168
        %v1182 = vunpack.c.l.b16 %v1169
        %v1183 = vunpack.c.l.b16 %v1170
        %v1184 = vunpack.c.l.b16 %v1171
        %v1185 = vpack.c.b16 %v1182, %v1181
        %v1186 = vpack.c.b16 %v1184, %v1183
        %v1190 = vsel %vm613, %v1166, 0
        %1192 = vmatpush.bf16.msra.mxu0 0
        %1193 = vmatpush.bf16.msra.mxu0 0
        %1194 = vmatpush.bf16.msra.mxu0 0
        %1195 = vmatpush.bf16.msra.mxu0 0
        %1196 = vmatpush.bf16.msra.mxu0 0
        %1197 = vmatpush.bf16.msra.mxu0 0
        %1198 = vmatpush.bf16.msra.mxu0 %v1186
        %1199 = vmatpush.bf16.msra.mxu0 %v1185
        %1200 = vmatmul.bf16.gmra.mxu0 %v1190
        %v1201 = vpop.f32.mrf.mxu0
        %v1202 = vadd.f32 %v1175, %v1201
        %v1203 = vpop.f32.mrf.mxu0
        %1204 = vdwg.mxu0
        %v1205 = vmul.f32 %v1202, 0.35355338
        %v1206 = vpack.c.bf16 %v1205, %v1205
        %v1207 = vpack.c.bf16 %v1202, %v1202
        %1209 = vrot.lane.b32.xlu0 %v1207, 96
        %v1210 = vpop.permute.xlu0 %1209
        %v1212 = vsel %vm694, %v1206, 0
        %v1215 = vsel %vm694, %v1210, 0
        %1217 = vmatpush.bf16.xpose.msra.mxu0 0
        %1218 = vmatpush.bf16.xpose.msra.mxu0 0
        %1219 = vmatpush.bf16.xpose.msra.mxu0 0
        %1220 = vmatpush.bf16.xpose.msra.mxu0 0
        %1221 = vmatpush.bf16.xpose.msra.mxu0 0
        %1222 = vmatpush.bf16.xpose.msra.mxu0 0
        %1223 = vmatpush.bf16.xpose.msra.mxu0 0
        %1224 = vmatpush.bf16.xpose.msra.mxu0 %v1215
        %1225 = vmatmul.bf16.gmra.mxu0 %v1212
        %v1226 = vpop.f32.mrf.mxu0
        %v1227 = vadd.f32 %v609, %v1226
        %v1228 = vpop.f32.mrf.mxu0
        %1229 = vdwg.mxu0
        %v1230 = vsel %vm694, %v1227, -inf
        %1231 = vmax.xlane.f32.xlu0 %v1230
        %v1232 = vpop.xlane.xlu0 %1231
        %v1233 = vsub.f32 %v1227, %v1232
        %v1234 = vmul.f32 %v1233, 1.442695
        %v1235 = vpow.pop %v1234
        %v1236 = vsel %vm694, %v1235, 0.0
        %1237 = vadd.xlane.f32.xlu0 %v1236
        %v1238 = vpop.xlane.xlu0 %1237
        %v1239 = vrcp.pop %v1238
        %v1240 = vmul.f32 %v1235, %v1239
        %v1241 = vpack.c.bf16 %v1240, %v1240
        %1242 = vrot.lane.b32.xlu0 %v1207, 64
        %v1243 = vpop.permute.xlu0 %1242
        %v1245 = vsel %vm694, %v1241, 0
        %v1248 = vsel %vm578, %v1243, 0
        %1250 = vmatpush.bf16.msra.mxu0 0
        %1251 = vmatpush.bf16.msra.mxu0 0
        %1252 = vmatpush.bf16.msra.mxu0 0
        %1253 = vmatpush.bf16.msra.mxu0 0
        %1254 = vmatpush.bf16.msra.mxu0 0
        %1255 = vmatpush.bf16.msra.mxu0 0
        %1256 = vmatpush.bf16.msra.mxu0 0
        %1257 = vmatpush.bf16.msra.mxu0 %v1248
        %1258 = vmatmul.bf16.gmra.mxu0 %v1245
        %v1259 = vpop.f32.mrf.mxu0
        %v1260 = vadd.f32 0.0, %v1259
        %v1261 = vpop.f32.mrf.mxu0
        %1262 = vdwg.mxu0
        %1264 = vrot.lane.b32.xlu0 %v1206, 120
        %v1265 = vpop.permute.xlu0 %1264
        %1266 = vrot.lane.b32.xlu0 %v1207, 88
        %v1267 = vpop.permute.xlu0 %1266
        %v1269 = vsel %vm694, %v1265, 0
        %v1272 = vsel %vm694, %v1267, 0
        %1274 = vmatpush.bf16.xpose.msra.mxu0 0
        %1275 = vmatpush.bf16.xpose.msra.mxu0 0
        %1276 = vmatpush.bf16.xpose.msra.mxu0 0
        %1277 = vmatpush.bf16.xpose.msra.mxu0 0
        %1278 = vmatpush.bf16.xpose.msra.mxu0 0
        %1279 = vmatpush.bf16.xpose.msra.mxu0 0
        %1280 = vmatpush.bf16.xpose.msra.mxu0 0
        %1281 = vmatpush.bf16.xpose.msra.mxu0 %v1272
        %1282 = vmatmul.bf16.gmra.mxu0 %v1269
        %v1283 = vpop.f32.mrf.mxu0
        %v1284 = vadd.f32 %v609, %v1283
        %v1285 = vpop.f32.mrf.mxu0
        %1286 = vdwg.mxu0
        %v1287 = vsel %vm694, %v1284, -inf
        %1288 = vmax.xlane.f32.xlu0 %v1287
        %v1289 = vpop.xlane.xlu0 %1288
        %v1290 = vsub.f32 %v1284, %v1289
        %v1291 = vmul.f32 %v1290, 1.442695
        %v1292 = vpow.pop %v1291
        %v1293 = vsel %vm694, %v1292, 0.0
        %1294 = vadd.xlane.f32.xlu0 %v1293
        %v1295 = vpop.xlane.xlu0 %1294
        %v1296 = vrcp.pop %v1295
        %v1297 = vmul.f32 %v1292, %v1296
        %v1298 = vpack.c.bf16 %v1297, %v1297
        %1299 = vrot.lane.b32.xlu0 %v1207, 56
        %v1300 = vpop.permute.xlu0 %1299
        %v1302 = vsel %vm694, %v1298, 0
        %v1305 = vsel %vm578, %v1300, 0
        %1307 = vmatpush.bf16.msra.mxu0 0
        %1308 = vmatpush.bf16.msra.mxu0 0
        %1309 = vmatpush.bf16.msra.mxu0 0
        %1310 = vmatpush.bf16.msra.mxu0 0
        %1311 = vmatpush.bf16.msra.mxu0 0
        %1312 = vmatpush.bf16.msra.mxu0 0
        %1313 = vmatpush.bf16.msra.mxu0 0
        %1314 = vmatpush.bf16.msra.mxu0 %v1305
        %1315 = vmatmul.bf16.gmra.mxu0 %v1302
        %v1316 = vpop.f32.mrf.mxu0
        %v1317 = vadd.f32 0.0, %v1316
        %v1318 = vpop.f32.mrf.mxu0
        %1319 = vdwg.mxu0
        %1320 = vrot.lane.b32.xlu0 %v1206, 112
        %v1321 = vpop.permute.xlu0 %1320
        %1322 = vrot.lane.b32.xlu0 %v1207, 80
        %v1323 = vpop.permute.xlu0 %1322
        %v1325 = vsel %vm694, %v1321, 0
        %v1328 = vsel %vm694, %v1323, 0
        %1330 = vmatpush.bf16.xpose.msra.mxu0 0
        %1331 = vmatpush.bf16.xpose.msra.mxu0 0
        %1332 = vmatpush.bf16.xpose.msra.mxu0 0
        %1333 = vmatpush.bf16.xpose.msra.mxu0 0
        %1334 = vmatpush.bf16.xpose.msra.mxu0 0
        %1335 = vmatpush.bf16.xpose.msra.mxu0 0
        %1336 = vmatpush.bf16.xpose.msra.mxu0 0
        %1337 = vmatpush.bf16.xpose.msra.mxu0 %v1328
        %1338 = vmatmul.bf16.gmra.mxu0 %v1325
        %v1339 = vpop.f32.mrf.mxu0
        %v1340 = vadd.f32 %v609, %v1339
        %v1341 = vpop.f32.mrf.mxu0
        %1342 = vdwg.mxu0
        %v1343 = vsel %vm694, %v1340, -inf
        %1344 = vmax.xlane.f32.xlu0 %v1343
        %v1345 = vpop.xlane.xlu0 %1344
        %v1346 = vsub.f32 %v1340, %v1345
        %v1347 = vmul.f32 %v1346, 1.442695
        %v1348 = vpow.pop %v1347
        %v1349 = vsel %vm694, %v1348, 0.0
        %1350 = vadd.xlane.f32.xlu0 %v1349
        %v1351 = vpop.xlane.xlu0 %1350
        %v1352 = vrcp.pop %v1351
        %v1353 = vmul.f32 %v1348, %v1352
        %v1354 = vpack.c.bf16 %v1353, %v1353
        %1355 = vrot.lane.b32.xlu0 %v1207, 48
        %v1356 = vpop.permute.xlu0 %1355
        %v1358 = vsel %vm694, %v1354, 0
        %v1361 = vsel %vm578, %v1356, 0
        %1363 = vmatpush.bf16.msra.mxu0 0
        %1364 = vmatpush.bf16.msra.mxu0 0
        %1365 = vmatpush.bf16.msra.mxu0 0
        %1366 = vmatpush.bf16.msra.mxu0 0
        %1367 = vmatpush.bf16.msra.mxu0 0
        %1368 = vmatpush.bf16.msra.mxu0 0
        %1369 = vmatpush.bf16.msra.mxu0 0
        %1370 = vmatpush.bf16.msra.mxu0 %v1361
        %1371 = vmatmul.bf16.gmra.mxu0 %v1358
        %v1372 = vpop.f32.mrf.mxu0
        %v1373 = vadd.f32 0.0, %v1372
        %v1374 = vpop.f32.mrf.mxu0
        %1375 = vdwg.mxu0
        %1376 = vrot.lane.b32.xlu0 %v1206, 104
        %v1377 = vpop.permute.xlu0 %1376
        %1378 = vrot.lane.b32.xlu0 %v1207, 72
        %v1379 = vpop.permute.xlu0 %1378
        %v1381 = vsel %vm694, %v1377, 0
        %v1384 = vsel %vm694, %v1379, 0
        %1386 = vmatpush.bf16.xpose.msra.mxu0 0
        %1387 = vmatpush.bf16.xpose.msra.mxu0 0
        %1388 = vmatpush.bf16.xpose.msra.mxu0 0
        %1389 = vmatpush.bf16.xpose.msra.mxu0 0
        %1390 = vmatpush.bf16.xpose.msra.mxu0 0
        %1391 = vmatpush.bf16.xpose.msra.mxu0 0
        %1392 = vmatpush.bf16.xpose.msra.mxu0 0
        %1393 = vmatpush.bf16.xpose.msra.mxu0 %v1384
        %1394 = vmatmul.bf16.gmra.mxu0 %v1381
        %v1395 = vpop.f32.mrf.mxu0
        %v1396 = vadd.f32 %v609, %v1395
        %v1397 = vpop.f32.mrf.mxu0
        %1398 = vdwg.mxu0
        %v1399 = vsel %vm694, %v1396, -inf
        %1400 = vmax.xlane.f32.xlu0 %v1399
        %v1401 = vpop.xlane.xlu0 %1400
        %v1402 = vsub.f32 %v1396, %v1401
        %v1403 = vmul.f32 %v1402, 1.442695
        %v1404 = vpow.pop %v1403
        %v1405 = vsel %vm694, %v1404, 0.0
        %1406 = vadd.xlane.f32.xlu0 %v1405
        %v1407 = vpop.xlane.xlu0 %1406
        %v1408 = vrcp.pop %v1407
        %v1409 = vmul.f32 %v1404, %v1408
        %v1410 = vpack.c.bf16 %v1409, %v1409
        %1411 = vrot.lane.b32.xlu0 %v1207, 40
        %v1412 = vpop.permute.xlu0 %1411
        %v1414 = vsel %vm694, %v1410, 0
        %v1417 = vsel %vm578, %v1412, 0
        %1419 = vmatpush.bf16.msra.mxu0 0
        %1420 = vmatpush.bf16.msra.mxu0 0
        %1421 = vmatpush.bf16.msra.mxu0 0
        %1422 = vmatpush.bf16.msra.mxu0 0
        %1423 = vmatpush.bf16.msra.mxu0 0
        %1424 = vmatpush.bf16.msra.mxu0 0
        %1425 = vmatpush.bf16.msra.mxu0 0
        %1426 = vmatpush.bf16.msra.mxu0 %v1417
        %1427 = vmatmul.bf16.gmra.mxu0 %v1414
        %v1428 = vpop.f32.mrf.mxu0
        %v1429 = vadd.f32 0.0, %v1428
        %v1430 = vpop.f32.mrf.mxu0
        %1431 = vdwg.mxu0
        %1433 = vrot.lane.b32.xlu0 %v1317, 8
        %v1434 = vpop.permute.xlu0 %1433
        %1437 = vrot.lane.b32.xlu0 %v1373, 16
        %v1438 = vpop.permute.xlu0 %1437
        %1441 = vrot.lane.b32.xlu0 %v1429, 24
        %v1442 = vpop.permute.xlu0 %1441
        %v1444 = vsel %vm694, %v1260, %v1434
        %v1445 = vsel %vm929, %v1444, %v1438
        %v1446 = vsel %vm931, %v1445, %v1442
        %v1447 = vpack.c.bf16 %v1446, %v1446
        %s1448 = scalar_lea.vmem %s8, 16
        %v1449 = vld [vmem:[%s1448] sm:$0xf]
        %v1450 = vld [vmem:[%s1448 + $0x4] sm:$0xf]
        %v1451 = vld [vmem:[%s1448 + $0x8] sm:$0xf]
        %v1452 = vld [vmem:[%s1448 + $0xc] sm:$0xf]
        %s1453 = scalar_lea.vmem %s9, 1
        %v1454 = vld [vmem:[%s1453] sm:$0x1]
        %v1456 = vperm.slane %v1454, 0
        %v1462 = vunpack.c.l.b16 %v1449
        %v1463 = vunpack.c.l.b16 %v1450
        %v1464 = vunpack.c.l.b16 %v1451
        %v1465 = vunpack.c.l.b16 %v1452
        %v1466 = vpack.c.b16 %v1463, %v1462
        %v1467 = vpack.c.b16 %v1465, %v1464
        %v1471 = vsel %vm613, %v1447, 0
        %1473 = vmatpush.bf16.msra.mxu0 0
        %1474 = vmatpush.bf16.msra.mxu0 0
        %1475 = vmatpush.bf16.msra.mxu0 0
        %1476 = vmatpush.bf16.msra.mxu0 0
        %1477 = vmatpush.bf16.msra.mxu0 0
        %1478 = vmatpush.bf16.msra.mxu0 0
        %1479 = vmatpush.bf16.msra.mxu0 %v1467
        %1480 = vmatpush.bf16.msra.mxu0 %v1466
        %1481 = vmatmul.bf16.gmra.mxu0 %v1471
        %v1482 = vpop.f32.mrf.mxu0
        %v1483 = vadd.f32 %v1456, %v1482
        %v1484 = vpop.f32.mrf.mxu0
        %1485 = vdwg.mxu0
        %v1486 = vadd.f32 %v1131, %v1483
        %s1487 = scalar_lea.vmem %s10, 1
        %v1488 = vld [vmem:[%s1487] sm:$0x1]
        %s1489 = scalar_lea.vmem %s11, 1
        %v1490 = vld [vmem:[%s1489] sm:$0x1]
        %v1491 = vsel %vm613, %v1486, 0.0
        %1492 = vadd.xlane.f32.xlu0 %v1491
        %v1493 = vpop.xlane.xlu0 %1492
        %v1494 = vmul.f32 %v1493, %v623
        %v1495 = vsub.f32 %v1486, %v1494
        %v1496 = vmul.f32 %v1495, %v1495
        %v1497 = vsel %vm613, %v1496, 0.0
        %1498 = vadd.xlane.f32.xlu0 %v1497
        %v1499 = vpop.xlane.xlu0 %1498
        %v1500 = vmul.f32 %v1499, %v623
        %v1501 = vadd.f32 %v1500, 1e-05
        %v1502 = vrsqrt.pop %v1501
        %v1503 = vmul.f32 %v1502, %v1501
        %v1504 = vmul.f32 %v1503, %v1502
        %v1505 = vmul.f32 0.5, %v1504
        %v1506 = vsub.f32 1.5, %v1505
        %v1507 = vmul.f32 %v1502, %v1506
        %vm1508 = vweird.f32 %v1501
        %vm1509 = vweird.f32 %v1502
        %vm1510 = vmor %vm1508, %vm1509
        %v1511 = vsel %vm1510, %v1502, %v1507
        %v1512 = vmul.f32 %v1495, %v1511
        %v1514 = vperm.slane %v1488, 0
        %v1516 = vmul.f32 %v1512, %v1514
        %v1518 = vperm.slane %v1490, 0
        %v1520 = vadd.f32 %v1516, %v1518
        %v1521 = vpack.c.bf16 %v1520, %v1520
        %s1522 = scalar_lea.vmem %s12, 16
        %v1523 = vld [vmem:[%s1522] sm:$0xf]
        %v1524 = vld [vmem:[%s1522 + $0x4] sm:$0xf]
        %v1525 = vld [vmem:[%s1522 + $0x8] sm:$0xf]
        %v1526 = vld [vmem:[%s1522 + $0xc] sm:$0xf]
        %s1527 = scalar_lea.vmem %s13, 1
        %v1528 = vld [vmem:[%s1527] sm:$0x1]
        %v1530 = vperm.slane %v1528, 0
        %v1536 = vunpack.c.l.b16 %v1523
        %v1537 = vunpack.c.l.b16 %v1524
        %v1538 = vunpack.c.l.b16 %v1525
        %v1539 = vunpack.c.l.b16 %v1526
        %v1540 = vpack.c.b16 %v1537, %v1536
        %v1541 = vpack.c.b16 %v1539, %v1538
        %v1545 = vsel %vm613, %v1521, 0
        %1547 = vmatpush.bf16.msra.mxu0 0
        %1548 = vmatpush.bf16.msra.mxu0 0
        %1549 = vmatpush.bf16.msra.mxu0 0
        %1550 = vmatpush.bf16.msra.mxu0 0
        %1551 = vmatpush.bf16.msra.mxu0 0
        %1552 = vmatpush.bf16.msra.mxu0 0
        %1553 = vmatpush.bf16.msra.mxu0 %v1541
        %1554 = vmatpush.bf16.msra.mxu0 %v1540
        %1555 = vmatmul.bf16.gmra.mxu0 %v1545
        %v1556 = vpop.f32.mrf.mxu0
        %v1557 = vadd.f32 %v1530, %v1556
        %v1558 = vpop.f32.mrf.mxu0
        %1559 = vdwg.mxu0
        %v1560 = vmul.f32 %v1557, %v1557
        %v1561 = vmul.f32 %v1557, %v1560
        %v1562 = vmul.f32 %v1561, 0.044715
        %v1563 = vadd.f32 %v1557, %v1562
        %v1564 = vmul.f32 %v1563, 0.7978846
        %v1565 = vtanh.pop %v1564
        %v1566 = vadd.f32 %v1565, 1.0
        %v1567 = vmul.f32 %v1566, 0.5
        %v1568 = vmul.f32 %v1557, %v1567
        %v1569 = vpack.c.bf16 %v1568, %v1568
        %s1570 = scalar_lea.vmem %s14, 64
        %v1571 = vld [vmem:[%s1570] sm:$0xf]
        %v1572 = vld [vmem:[%s1570 + $0x4] sm:$0xf]
        %v1573 = vld [vmem:[%s1570 + $0x8] sm:$0xf]
        %v1574 = vld [vmem:[%s1570 + $0xc] sm:$0xf]
        %v1575 = vld [vmem:[%s1570 + $0x10] sm:$0xf]
        %v1576 = vld [vmem:[%s1570 + $0x14] sm:$0xf]
        %v1577 = vld [vmem:[%s1570 + $0x18] sm:$0xf]
        %v1578 = vld [vmem:[%s1570 + $0x1c] sm:$0xf]
        %v1579 = vld [vmem:[%s1570 + $0x20] sm:$0xf]
        %v1580 = vld [vmem:[%s1570 + $0x24] sm:$0xf]
        %v1581 = vld [vmem:[%s1570 + $0x28] sm:$0xf]
        %v1582 = vld [vmem:[%s1570 + $0x2c] sm:$0xf]
        %v1583 = vld [vmem:[%s1570 + $0x30] sm:$0xf]
        %v1584 = vld [vmem:[%s1570 + $0x34] sm:$0xf]
        %v1585 = vld [vmem:[%s1570 + $0x38] sm:$0xf]
        %v1586 = vld [vmem:[%s1570 + $0x3c] sm:$0xf]
        %s1587 = scalar_lea.vmem %s15, 1
        %v1588 = vld [vmem:[%s1587] sm:$0x1]
        %v1590 = vperm.slane %v1588, 0
        %v1608 = vunpack.c.l.b16 %v1571
        %v1609 = vunpack.c.l.b16 %v1572
        %v1610 = vunpack.c.l.b16 %v1573
        %v1611 = vunpack.c.l.b16 %v1574
        %v1612 = vunpack.c.l.b16 %v1575
        %v1613 = vunpack.c.l.b16 %v1576
        %v1614 = vunpack.c.l.b16 %v1577
        %v1615 = vunpack.c.l.b16 %v1578
        %v1616 = vunpack.c.l.b16 %v1579
        %v1617 = vunpack.c.l.b16 %v1580
        %v1618 = vunpack.c.l.b16 %v1581
        %v1619 = vunpack.c.l.b16 %v1582
        %v1620 = vunpack.c.l.b16 %v1583
        %v1621 = vunpack.c.l.b16 %v1584
        %v1622 = vunpack.c.l.b16 %v1585
        %v1623 = vunpack.c.l.b16 %v1586
        %v1624 = vpack.c.b16 %v1609, %v1608
        %v1625 = vpack.c.b16 %v1611, %v1610
        %v1626 = vpack.c.b16 %v1613, %v1612
        %v1627 = vpack.c.b16 %v1615, %v1614
        %v1628 = vpack.c.b16 %v1617, %v1616
        %v1629 = vpack.c.b16 %v1619, %v1618
        %v1630 = vpack.c.b16 %v1621, %v1620
        %v1631 = vpack.c.b16 %v1623, %v1622
        %1640 = vmatpush.bf16.msra.mxu0 %v1631
        %1641 = vmatpush.bf16.msra.mxu0 %v1630
        %1642 = vmatpush.bf16.msra.mxu0 %v1629
        %1643 = vmatpush.bf16.msra.mxu0 %v1628
        %1644 = vmatpush.bf16.msra.mxu0 %v1627
        %1645 = vmatpush.bf16.msra.mxu0 %v1626
        %1646 = vmatpush.bf16.msra.mxu0 %v1625
        %1647 = vmatpush.bf16.msra.mxu0 %v1624
        %1648 = vmatmul.bf16.gmra.mxu0 %v1569
        %v1649 = vpop.f32.mrf.mxu0
        %v1650 = vadd.f32 %v1590, %v1649
        %v1651 = vpop.f32.mrf.mxu0
        %1652 = vdwg.mxu0
        %v1653 = vadd.f32 %v1486, %v1650
        %v1654 = vld [vmem:[%s16] sm:$0xff]
        %v1655 = vld [vmem:[%s16 + $0x8] sm:$0xff]
        %v1656 = vld [vmem:[%s16 + $0x10] sm:$0xff]
        %v1657 = vld [vmem:[%s16 + $0x18] sm:$0xff]
        %v1658 = vld [vmem:[%s17] sm:$0x1]
        %v1660 = vperm.slane %v1658, 0
        %v1663 = vsel %vm613, %v1653, 0
        %1665 = vmatpush.msra.mxu0 0.0
        %1666 = vmatpush.msra.mxu0 0.0
        %1667 = vmatpush.msra.mxu0 0.0
        %1668 = vmatpush.msra.mxu0 0.0
        %1669 = vmatpush.msra.mxu0 0.0
        %1670 = vmatpush.msra.mxu0 0.0
        %1671 = vmatpush.msra.mxu0 0.0
        %1672 = vmatpush.msra.mxu0 0.0
        %1673 = vmatpush.msra.mxu0 0.0
        %1674 = vmatpush.msra.mxu0 0.0
        %1675 = vmatpush.msra.mxu0 0.0
        %1676 = vmatpush.msra.mxu0 0.0
        %1677 = vmatpush.msra.mxu0 %v1657
        %1678 = vmatpush.msra.mxu0 %v1656
        %1679 = vmatpush.msra.mxu0 %v1655
        %1680 = vmatpush.msra.mxu0 %v1654
        %1681 = vmatmul.f32.gmra.mxu0 %v1663
        %v1682 = vpop.f32.mrf.mxu0
        %v1683 = vadd.f32 %v1660, %v1682
        %1684 = vdwg.mxu0
        %1685 = vst.msk [vmem:[%s562] sm:$0xff] %vm574, %v1683
        %v1686 = vadd.f32 %v1653, %v603
        %v1687 = vld [vmem:[%s4] sm:$0x1]
        %v1688 = vld [vmem:[%s5] sm:$0x1]
        %v1689 = vsel %vm613, %v1686, 0.0
        %1690 = vadd.xlane.f32.xlu0 %v1689
        %v1691 = vpop.xlane.xlu0 %1690
        %v1692 = vmul.f32 %v1691, %v623
        %v1693 = vsub.f32 %v1686, %v1692
        %v1694 = vmul.f32 %v1693, %v1693
        %v1695 = vsel %vm613, %v1694, 0.0
        %1696 = vadd.xlane.f32.xlu0 %v1695
        %v1697 = vpop.xlane.xlu0 %1696
        %v1698 = vmul.f32 %v1697, %v623
        %v1699 = vadd.f32 %v1698, 1e-05
        %v1700 = vrsqrt.pop %v1699
        %v1701 = vmul.f32 %v1700, %v1699
        %v1702 = vmul.f32 %v1701, %v1700
        %v1703 = vmul.f32 0.5, %v1702
        %v1704 = vsub.f32 1.5, %v1703
        %v1705 = vmul.f32 %v1700, %v1704
        %vm1706 = vweird.f32 %v1699
        %vm1707 = vweird.f32 %v1700
        %vm1708 = vmor %vm1706, %vm1707
        %v1709 = vsel %vm1708, %v1700, %v1705
        %v1710 = vmul.f32 %v1693, %v1709
        %v1712 = vperm.slane %v1687, 0
        %v1714 = vmul.f32 %v1710, %v1712
        %v1716 = vperm.slane %v1688, 0
        %v1718 = vadd.f32 %v1714, %v1716
        %v1719 = vpack.c.bf16 %v1718, %v1718
        %v1720 = vld [vmem:[%s6] sm:$0xf]
        %v1721 = vld [vmem:[%s6 + $0x4] sm:$0xf]
        %v1722 = vld [vmem:[%s6 + $0x8] sm:$0xf]
        %v1723 = vld [vmem:[%s6 + $0xc] sm:$0xf]
        %v1724 = vld [vmem:[%s7] sm:$0x1]
        %v1726 = vperm.slane %v1724, 0
        %v1732 = vunpack.c.l.b16 %v1720
        %v1733 = vunpack.c.l.b16 %v1721
        %v1734 = vunpack.c.l.b16 %v1722
        %v1735 = vunpack.c.l.b16 %v1723
        %v1736 = vpack.c.b16 %v1733, %v1732
        %v1737 = vpack.c.b16 %v1735, %v1734
        %v1741 = vsel %vm613, %v1719, 0
        %1743 = vmatpush.bf16.msra.mxu0 0
        %1744 = vmatpush.bf16.msra.mxu0 0
        %1745 = vmatpush.bf16.msra.mxu0 0
        %1746 = vmatpush.bf16.msra.mxu0 0
        %1747 = vmatpush.bf16.msra.mxu0 0
        %1748 = vmatpush.bf16.msra.mxu0 0
        %1749 = vmatpush.bf16.msra.mxu0 %v1737
        %1750 = vmatpush.bf16.msra.mxu0 %v1736
        %1751 = vmatmul.bf16.gmra.mxu0 %v1741
        %v1752 = vpop.f32.mrf.mxu0
        %v1753 = vadd.f32 %v1726, %v1752
        %v1754 = vpop.f32.mrf.mxu0
        %1755 = vdwg.mxu0
        %v1756 = vmul.f32 %v1753, 0.35355338
        %v1757 = vpack.c.bf16 %v1756, %v1756
        %v1758 = vpack.c.bf16 %v1753, %v1753
        %1760 = vrot.lane.b32.xlu0 %v1758, 96
        %v1761 = vpop.permute.xlu0 %1760
        %v1763 = vsel %vm694, %v1757, 0
        %v1766 = vsel %vm694, %v1761, 0
        %1768 = vmatpush.bf16.xpose.msra.mxu0 0
        %1769 = vmatpush.bf16.xpose.msra.mxu0 0
        %1770 = vmatpush.bf16.xpose.msra.mxu0 0
        %1771 = vmatpush.bf16.xpose.msra.mxu0 0
        %1772 = vmatpush.bf16.xpose.msra.mxu0 0
        %1773 = vmatpush.bf16.xpose.msra.mxu0 0
        %1774 = vmatpush.bf16.xpose.msra.mxu0 0
        %1775 = vmatpush.bf16.xpose.msra.mxu0 %v1766
        %1776 = vmatmul.bf16.gmra.mxu0 %v1763
        %v1777 = vpop.f32.mrf.mxu0
        %v1778 = vadd.f32 %v609, %v1777
        %v1779 = vpop.f32.mrf.mxu0
        %1780 = vdwg.mxu0
        %v1781 = vsel %vm694, %v1778, -inf
        %1782 = vmax.xlane.f32.xlu0 %v1781
        %v1783 = vpop.xlane.xlu0 %1782
        %v1784 = vsub.f32 %v1778, %v1783
        %v1785 = vmul.f32 %v1784, 1.442695
        %v1786 = vpow.pop %v1785
        %v1787 = vsel %vm694, %v1786, 0.0
        %1788 = vadd.xlane.f32.xlu0 %v1787
        %v1789 = vpop.xlane.xlu0 %1788
        %v1790 = vrcp.pop %v1789
        %v1791 = vmul.f32 %v1786, %v1790
        %v1792 = vpack.c.bf16 %v1791, %v1791
        %1793 = vrot.lane.b32.xlu0 %v1758, 64
        %v1794 = vpop.permute.xlu0 %1793
        %v1796 = vsel %vm694, %v1792, 0
        %v1799 = vsel %vm578, %v1794, 0
        %1801 = vmatpush.bf16.msra.mxu0 0
        %1802 = vmatpush.bf16.msra.mxu0 0
        %1803 = vmatpush.bf16.msra.mxu0 0
        %1804 = vmatpush.bf16.msra.mxu0 0
        %1805 = vmatpush.bf16.msra.mxu0 0
        %1806 = vmatpush.bf16.msra.mxu0 0
        %1807 = vmatpush.bf16.msra.mxu0 0
        %1808 = vmatpush.bf16.msra.mxu0 %v1799
        %1809 = vmatmul.bf16.gmra.mxu0 %v1796
        %v1810 = vpop.f32.mrf.mxu0
        %v1811 = vadd.f32 0.0, %v1810
        %v1812 = vpop.f32.mrf.mxu0
        %1813 = vdwg.mxu0
        %1815 = vrot.lane.b32.xlu0 %v1757, 120
        %v1816 = vpop.permute.xlu0 %1815
        %1817 = vrot.lane.b32.xlu0 %v1758, 88
        %v1818 = vpop.permute.xlu0 %1817
        %v1820 = vsel %vm694, %v1816, 0
        %v1823 = vsel %vm694, %v1818, 0
        %1825 = vmatpush.bf16.xpose.msra.mxu0 0
        %1826 = vmatpush.bf16.xpose.msra.mxu0 0
        %1827 = vmatpush.bf16.xpose.msra.mxu0 0
        %1828 = vmatpush.bf16.xpose.msra.mxu0 0
        %1829 = vmatpush.bf16.xpose.msra.mxu0 0
        %1830 = vmatpush.bf16.xpose.msra.mxu0 0
        %1831 = vmatpush.bf16.xpose.msra.mxu0 0
        %1832 = vmatpush.bf16.xpose.msra.mxu0 %v1823
        %1833 = vmatmul.bf16.gmra.mxu0 %v1820
        %v1834 = vpop.f32.mrf.mxu0
        %v1835 = vadd.f32 %v609, %v1834
        %v1836 = vpop.f32.mrf.mxu0
        %1837 = vdwg.mxu0
        %v1838 = vsel %vm694, %v1835, -inf
        %1839 = vmax.xlane.f32.xlu0 %v1838
        %v1840 = vpop.xlane.xlu0 %1839
        %v1841 = vsub.f32 %v1835, %v1840
        %v1842 = vmul.f32 %v1841, 1.442695
        %v1843 = vpow.pop %v1842
        %v1844 = vsel %vm694, %v1843, 0.0
        %1845 = vadd.xlane.f32.xlu0 %v1844
        %v1846 = vpop.xlane.xlu0 %1845
        %v1847 = vrcp.pop %v1846
        %v1848 = vmul.f32 %v1843, %v1847
        %v1849 = vpack.c.bf16 %v1848, %v1848
        %1850 = vrot.lane.b32.xlu0 %v1758, 56
        %v1851 = vpop.permute.xlu0 %1850
        %v1853 = vsel %vm694, %v1849, 0
        %v1856 = vsel %vm578, %v1851, 0
        %1858 = vmatpush.bf16.msra.mxu0 0
        %1859 = vmatpush.bf16.msra.mxu0 0
        %1860 = vmatpush.bf16.msra.mxu0 0
        %1861 = vmatpush.bf16.msra.mxu0 0
        %1862 = vmatpush.bf16.msra.mxu0 0
        %1863 = vmatpush.bf16.msra.mxu0 0
        %1864 = vmatpush.bf16.msra.mxu0 0
        %1865 = vmatpush.bf16.msra.mxu0 %v1856
        %1866 = vmatmul.bf16.gmra.mxu0 %v1853
        %v1867 = vpop.f32.mrf.mxu0
        %v1868 = vadd.f32 0.0, %v1867
        %v1869 = vpop.f32.mrf.mxu0
        %1870 = vdwg.mxu0
        %1871 = vrot.lane.b32.xlu0 %v1757, 112
        %v1872 = vpop.permute.xlu0 %1871
        %1873 = vrot.lane.b32.xlu0 %v1758, 80
        %v1874 = vpop.permute.xlu0 %1873
        %v1876 = vsel %vm694, %v1872, 0
        %v1879 = vsel %vm694, %v1874, 0
        %1881 = vmatpush.bf16.xpose.msra.mxu0 0
        %1882 = vmatpush.bf16.xpose.msra.mxu0 0
        %1883 = vmatpush.bf16.xpose.msra.mxu0 0
        %1884 = vmatpush.bf16.xpose.msra.mxu0 0
        %1885 = vmatpush.bf16.xpose.msra.mxu0 0
        %1886 = vmatpush.bf16.xpose.msra.mxu0 0
        %1887 = vmatpush.bf16.xpose.msra.mxu0 0
        %1888 = vmatpush.bf16.xpose.msra.mxu0 %v1879
        %1889 = vmatmul.bf16.gmra.mxu0 %v1876
        %v1890 = vpop.f32.mrf.mxu0
        %v1891 = vadd.f32 %v609, %v1890
        %v1892 = vpop.f32.mrf.mxu0
        %1893 = vdwg.mxu0
        %v1894 = vsel %vm694, %v1891, -inf
        %1895 = vmax.xlane.f32.xlu0 %v1894
        %v1896 = vpop.xlane.xlu0 %1895
        %v1897 = vsub.f32 %v1891, %v1896
        %v1898 = vmul.f32 %v1897, 1.442695
        %v1899 = vpow.pop %v1898
        %v1900 = vsel %vm694, %v1899, 0.0
        %1901 = vadd.xlane.f32.xlu0 %v1900
        %v1902 = vpop.xlane.xlu0 %1901
        %v1903 = vrcp.pop %v1902
        %v1904 = vmul.f32 %v1899, %v1903
        %v1905 = vpack.c.bf16 %v1904, %v1904
        %1906 = vrot.lane.b32.xlu0 %v1758, 48
        %v1907 = vpop.permute.xlu0 %1906
        %v1909 = vsel %vm694, %v1905, 0
        %v1912 = vsel %vm578, %v1907, 0
        %1914 = vmatpush.bf16.msra.mxu0 0
        %1915 = vmatpush.bf16.msra.mxu0 0
        %1916 = vmatpush.bf16.msra.mxu0 0
        %1917 = vmatpush.bf16.msra.mxu0 0
        %1918 = vmatpush.bf16.msra.mxu0 0
        %1919 = vmatpush.bf16.msra.mxu0 0
        %1920 = vmatpush.bf16.msra.mxu0 0
        %1921 = vmatpush.bf16.msra.mxu0 %v1912
        %1922 = vmatmul.bf16.gmra.mxu0 %v1909
        %v1923 = vpop.f32.mrf.mxu0
        %v1924 = vadd.f32 0.0, %v1923
        %v1925 = vpop.f32.mrf.mxu0
        %1926 = vdwg.mxu0
        %1927 = vrot.lane.b32.xlu0 %v1757, 104
        %v1928 = vpop.permute.xlu0 %1927
        %1929 = vrot.lane.b32.xlu0 %v1758, 72
        %v1930 = vpop.permute.xlu0 %1929
        %v1932 = vsel %vm694, %v1928, 0
        %v1935 = vsel %vm694, %v1930, 0
        %1937 = vmatpush.bf16.xpose.msra.mxu0 0
        %1938 = vmatpush.bf16.xpose.msra.mxu0 0
        %1939 = vmatpush.bf16.xpose.msra.mxu0 0
        %1940 = vmatpush.bf16.xpose.msra.mxu0 0
        %1941 = vmatpush.bf16.xpose.msra.mxu0 0
        %1942 = vmatpush.bf16.xpose.msra.mxu0 0
        %1943 = vmatpush.bf16.xpose.msra.mxu0 0
        %1944 = vmatpush.bf16.xpose.msra.mxu0 %v1935
        %1945 = vmatmul.bf16.gmra.mxu0 %v1932
        %v1946 = vpop.f32.mrf.mxu0
        %v1947 = vadd.f32 %v609, %v1946
        %v1948 = vpop.f32.mrf.mxu0
        %1949 = vdwg.mxu0
        %v1950 = vsel %vm694, %v1947, -inf
        %1951 = vmax.xlane.f32.xlu0 %v1950
        %v1952 = vpop.xlane.xlu0 %1951
        %v1953 = vsub.f32 %v1947, %v1952
        %v1954 = vmul.f32 %v1953, 1.442695
        %v1955 = vpow.pop %v1954
        %v1956 = vsel %vm694, %v1955, 0.0
        %1957 = vadd.xlane.f32.xlu0 %v1956
        %v1958 = vpop.xlane.xlu0 %1957
        %v1959 = vrcp.pop %v1958
        %v1960 = vmul.f32 %v1955, %v1959
        %v1961 = vpack.c.bf16 %v1960, %v1960
        %1962 = vrot.lane.b32.xlu0 %v1758, 40
        %v1963 = vpop.permute.xlu0 %1962
        %v1965 = vsel %vm694, %v1961, 0
        %v1968 = vsel %vm578, %v1963, 0
        %1970 = vmatpush.bf16.msra.mxu0 0
        %1971 = vmatpush.bf16.msra.mxu0 0
        %1972 = vmatpush.bf16.msra.mxu0 0
        %1973 = vmatpush.bf16.msra.mxu0 0
        %1974 = vmatpush.bf16.msra.mxu0 0
        %1975 = vmatpush.bf16.msra.mxu0 0
        %1976 = vmatpush.bf16.msra.mxu0 0
        %1977 = vmatpush.bf16.msra.mxu0 %v1968
        %1978 = vmatmul.bf16.gmra.mxu0 %v1965
        %v1979 = vpop.f32.mrf.mxu0
        %v1980 = vadd.f32 0.0, %v1979
        %v1981 = vpop.f32.mrf.mxu0
        %1982 = vdwg.mxu0
        %1984 = vrot.lane.b32.xlu0 %v1868, 8
        %v1985 = vpop.permute.xlu0 %1984
        %1988 = vrot.lane.b32.xlu0 %v1924, 16
        %v1989 = vpop.permute.xlu0 %1988
        %1992 = vrot.lane.b32.xlu0 %v1980, 24
        %v1993 = vpop.permute.xlu0 %1992
        %v1995 = vsel %vm694, %v1811, %v1985
        %v1996 = vsel %vm929, %v1995, %v1989
        %v1997 = vsel %vm931, %v1996, %v1993
        %v1998 = vpack.c.bf16 %v1997, %v1997
        %v1999 = vld [vmem:[%s8] sm:$0xf]
        %v2000 = vld [vmem:[%s8 + $0x4] sm:$0xf]
        %v2001 = vld [vmem:[%s8 + $0x8] sm:$0xf]
        %v2002 = vld [vmem:[%s8 + $0xc] sm:$0xf]
        %v2003 = vld [vmem:[%s9] sm:$0x1]
        %v2005 = vperm.slane %v2003, 0
        %v2011 = vunpack.c.l.b16 %v1999
        %v2012 = vunpack.c.l.b16 %v2000
        %v2013 = vunpack.c.l.b16 %v2001
        %v2014 = vunpack.c.l.b16 %v2002
        %v2015 = vpack.c.b16 %v2012, %v2011
        %v2016 = vpack.c.b16 %v2014, %v2013
        %v2020 = vsel %vm613, %v1998, 0
        %2022 = vmatpush.bf16.msra.mxu0 0
        %2023 = vmatpush.bf16.msra.mxu0 0
        %2024 = vmatpush.bf16.msra.mxu0 0
        %2025 = vmatpush.bf16.msra.mxu0 0
        %2026 = vmatpush.bf16.msra.mxu0 0
        %2027 = vmatpush.bf16.msra.mxu0 0
        %2028 = vmatpush.bf16.msra.mxu0 %v2016
        %2029 = vmatpush.bf16.msra.mxu0 %v2015
        %2030 = vmatmul.bf16.gmra.mxu0 %v2020
        %v2031 = vpop.f32.mrf.mxu0
        %v2032 = vadd.f32 %v2005, %v2031
        %v2033 = vpop.f32.mrf.mxu0
        %2034 = vdwg.mxu0
        %v2035 = vadd.f32 %v1686, %v2032
        %v2036 = vld [vmem:[%s10] sm:$0x1]
        %v2037 = vld [vmem:[%s11] sm:$0x1]
        %v2038 = vsel %vm613, %v2035, 0.0
        %2039 = vadd.xlane.f32.xlu0 %v2038
        %v2040 = vpop.xlane.xlu0 %2039
        %v2041 = vmul.f32 %v2040, %v623
        %v2042 = vsub.f32 %v2035, %v2041
        %v2043 = vmul.f32 %v2042, %v2042
        %v2044 = vsel %vm613, %v2043, 0.0
        %2045 = vadd.xlane.f32.xlu0 %v2044
        %v2046 = vpop.xlane.xlu0 %2045
        %v2047 = vmul.f32 %v2046, %v623
        %v2048 = vadd.f32 %v2047, 1e-05
        %v2049 = vrsqrt.pop %v2048
        %v2050 = vmul.f32 %v2049, %v2048
        %v2051 = vmul.f32 %v2050, %v2049
        %v2052 = vmul.f32 0.5, %v2051
        %v2053 = vsub.f32 1.5, %v2052
        %v2054 = vmul.f32 %v2049, %v2053
        %vm2055 = vweird.f32 %v2048
        %vm2056 = vweird.f32 %v2049
        %vm2057 = vmor %vm2055, %vm2056
        %v2058 = vsel %vm2057, %v2049, %v2054
        %v2059 = vmul.f32 %v2042, %v2058
        %v2061 = vperm.slane %v2036, 0
        %v2063 = vmul.f32 %v2059, %v2061
        %v2065 = vperm.slane %v2037, 0
        %v2067 = vadd.f32 %v2063, %v2065
        %v2068 = vpack.c.bf16 %v2067, %v2067
        %v2069 = vld [vmem:[%s12] sm:$0xf]
        %v2070 = vld [vmem:[%s12 + $0x4] sm:$0xf]
        %v2071 = vld [vmem:[%s12 + $0x8] sm:$0xf]
        %v2072 = vld [vmem:[%s12 + $0xc] sm:$0xf]
        %v2073 = vld [vmem:[%s13] sm:$0x1]
        %v2075 = vperm.slane %v2073, 0
        %v2081 = vunpack.c.l.b16 %v2069
        %v2082 = vunpack.c.l.b16 %v2070
        %v2083 = vunpack.c.l.b16 %v2071
        %v2084 = vunpack.c.l.b16 %v2072
        %v2085 = vpack.c.b16 %v2082, %v2081
        %v2086 = vpack.c.b16 %v2084, %v2083
        %v2090 = vsel %vm613, %v2068, 0
        %2092 = vmatpush.bf16.msra.mxu0 0
        %2093 = vmatpush.bf16.msra.mxu0 0
        %2094 = vmatpush.bf16.msra.mxu0 0
        %2095 = vmatpush.bf16.msra.mxu0 0
        %2096 = vmatpush.bf16.msra.mxu0 0
        %2097 = vmatpush.bf16.msra.mxu0 0
        %2098 = vmatpush.bf16.msra.mxu0 %v2086
        %2099 = vmatpush.bf16.msra.mxu0 %v2085
        %2100 = vmatmul.bf16.gmra.mxu0 %v2090
        %v2101 = vpop.f32.mrf.mxu0
        %v2102 = vadd.f32 %v2075, %v2101
        %v2103 = vpop.f32.mrf.mxu0
        %2104 = vdwg.mxu0
        %v2105 = vmul.f32 %v2102, %v2102
        %v2106 = vmul.f32 %v2102, %v2105
        %v2107 = vmul.f32 %v2106, 0.044715
        %v2108 = vadd.f32 %v2102, %v2107
        %v2109 = vmul.f32 %v2108, 0.7978846
        %v2110 = vtanh.pop %v2109
        %v2111 = vadd.f32 %v2110, 1.0
        %v2112 = vmul.f32 %v2111, 0.5
        %v2113 = vmul.f32 %v2102, %v2112
        %v2114 = vpack.c.bf16 %v2113, %v2113
        %v2115 = vld [vmem:[%s14] sm:$0xf]
        %v2116 = vld [vmem:[%s14 + $0x4] sm:$0xf]
        %v2117 = vld [vmem:[%s14 + $0x8] sm:$0xf]
        %v2118 = vld [vmem:[%s14 + $0xc] sm:$0xf]
        %v2119 = vld [vmem:[%s14 + $0x10] sm:$0xf]
        %v2120 = vld [vmem:[%s14 + $0x14] sm:$0xf]
        %v2121 = vld [vmem:[%s14 + $0x18] sm:$0xf]
        %v2122 = vld [vmem:[%s14 + $0x1c] sm:$0xf]
        %v2123 = vld [vmem:[%s14 + $0x20] sm:$0xf]
        %v2124 = vld [vmem:[%s14 + $0x24] sm:$0xf]
        %v2125 = vld [vmem:[%s14 + $0x28] sm:$0xf]
        %v2126 = vld [vmem:[%s14 + $0x2c] sm:$0xf]
        %v2127 = vld [vmem:[%s14 + $0x30] sm:$0xf]
        %v2128 = vld [vmem:[%s14 + $0x34] sm:$0xf]
        %v2129 = vld [vmem:[%s14 + $0x38] sm:$0xf]
        %v2130 = vld [vmem:[%s14 + $0x3c] sm:$0xf]
        %v2131 = vld [vmem:[%s15] sm:$0x1]
        %v2133 = vperm.slane %v2131, 0
        %v2151 = vunpack.c.l.b16 %v2115
        %v2152 = vunpack.c.l.b16 %v2116
        %v2153 = vunpack.c.l.b16 %v2117
        %v2154 = vunpack.c.l.b16 %v2118
        %v2155 = vunpack.c.l.b16 %v2119
        %v2156 = vunpack.c.l.b16 %v2120
        %v2157 = vunpack.c.l.b16 %v2121
        %v2158 = vunpack.c.l.b16 %v2122
        %v2159 = vunpack.c.l.b16 %v2123
        %v2160 = vunpack.c.l.b16 %v2124
        %v2161 = vunpack.c.l.b16 %v2125
        %v2162 = vunpack.c.l.b16 %v2126
        %v2163 = vunpack.c.l.b16 %v2127
        %v2164 = vunpack.c.l.b16 %v2128
        %v2165 = vunpack.c.l.b16 %v2129
        %v2166 = vunpack.c.l.b16 %v2130
        %v2167 = vpack.c.b16 %v2152, %v2151
        %v2168 = vpack.c.b16 %v2154, %v2153
        %v2169 = vpack.c.b16 %v2156, %v2155
        %v2170 = vpack.c.b16 %v2158, %v2157
        %v2171 = vpack.c.b16 %v2160, %v2159
        %v2172 = vpack.c.b16 %v2162, %v2161
        %v2173 = vpack.c.b16 %v2164, %v2163
        %v2174 = vpack.c.b16 %v2166, %v2165
        %2183 = vmatpush.bf16.msra.mxu0 %v2174
        %2184 = vmatpush.bf16.msra.mxu0 %v2173
        %2185 = vmatpush.bf16.msra.mxu0 %v2172
        %2186 = vmatpush.bf16.msra.mxu0 %v2171
        %2187 = vmatpush.bf16.msra.mxu0 %v2170
        %2188 = vmatpush.bf16.msra.mxu0 %v2169
        %2189 = vmatpush.bf16.msra.mxu0 %v2168
        %2190 = vmatpush.bf16.msra.mxu0 %v2167
        %2191 = vmatmul.bf16.gmra.mxu0 %v2114
        %v2192 = vpop.f32.mrf.mxu0
        %v2193 = vadd.f32 %v2133, %v2192
        %v2194 = vpop.f32.mrf.mxu0
        %2195 = vdwg.mxu0
        %v2196 = vadd.f32 %v2035, %v2193
        %v2197 = vld [vmem:[%s1132] sm:$0x1]
        %v2198 = vld [vmem:[%s1134] sm:$0x1]
        %v2199 = vsel %vm613, %v2196, 0.0
        %2200 = vadd.xlane.f32.xlu0 %v2199
        %v2201 = vpop.xlane.xlu0 %2200
        %v2202 = vmul.f32 %v2201, %v623
        %v2203 = vsub.f32 %v2196, %v2202
        %v2204 = vmul.f32 %v2203, %v2203
        %v2205 = vsel %vm613, %v2204, 0.0
        %2206 = vadd.xlane.f32.xlu0 %v2205
        %v2207 = vpop.xlane.xlu0 %2206
        %v2208 = vmul.f32 %v2207, %v623
        %v2209 = vadd.f32 %v2208, 1e-05
        %v2210 = vrsqrt.pop %v2209
        %v2211 = vmul.f32 %v2210, %v2209
        %v2212 = vmul.f32 %v2211, %v2210
        %v2213 = vmul.f32 0.5, %v2212
        %v2214 = vsub.f32 1.5, %v2213
        %v2215 = vmul.f32 %v2210, %v2214
        %vm2216 = vweird.f32 %v2209
        %vm2217 = vweird.f32 %v2210
        %vm2218 = vmor %vm2216, %vm2217
        %v2219 = vsel %vm2218, %v2210, %v2215
        %v2220 = vmul.f32 %v2203, %v2219
        %v2222 = vperm.slane %v2197, 0
        %v2224 = vmul.f32 %v2220, %v2222
        %v2226 = vperm.slane %v2198, 0
        %v2228 = vadd.f32 %v2224, %v2226
        %v2229 = vpack.c.bf16 %v2228, %v2228
        %v2230 = vld [vmem:[%s1167] sm:$0xf]
        %v2231 = vld [vmem:[%s1167 + $0x4] sm:$0xf]
        %v2232 = vld [vmem:[%s1167 + $0x8] sm:$0xf]
        %v2233 = vld [vmem:[%s1167 + $0xc] sm:$0xf]
        %v2234 = vld [vmem:[%s1172] sm:$0x1]
        %v2236 = vperm.slane %v2234, 0
        %v2242 = vunpack.c.l.b16 %v2230
        %v2243 = vunpack.c.l.b16 %v2231
        %v2244 = vunpack.c.l.b16 %v2232
        %v2245 = vunpack.c.l.b16 %v2233
        %v2246 = vpack.c.b16 %v2243, %v2242
        %v2247 = vpack.c.b16 %v2245, %v2244
        %v2251 = vsel %vm613, %v2229, 0
        %2253 = vmatpush.bf16.msra.mxu0 0
        %2254 = vmatpush.bf16.msra.mxu0 0
        %2255 = vmatpush.bf16.msra.mxu0 0
        %2256 = vmatpush.bf16.msra.mxu0 0
        %2257 = vmatpush.bf16.msra.mxu0 0
        %2258 = vmatpush.bf16.msra.mxu0 0
        %2259 = vmatpush.bf16.msra.mxu0 %v2247
        %2260 = vmatpush.bf16.msra.mxu0 %v2246
        %2261 = vmatmul.bf16.gmra.mxu0 %v2251
        %v2262 = vpop.f32.mrf.mxu0
        %v2263 = vadd.f32 %v2236, %v2262
        %v2264 = vpop.f32.mrf.mxu0
        %2265 = vdwg.mxu0
        %v2266 = vmul.f32 %v2263, 0.35355338
        %v2267 = vpack.c.bf16 %v2266, %v2266
        %v2268 = vpack.c.bf16 %v2263, %v2263
        %2270 = vrot.lane.b32.xlu0 %v2268, 96
        %v2271 = vpop.permute.xlu0 %2270
        %v2273 = vsel %vm694, %v2267, 0
        %v2276 = vsel %vm694, %v2271, 0
        %2278 = vmatpush.bf16.xpose.msra.mxu0 0
        %2279 = vmatpush.bf16.xpose.msra.mxu0 0
        %2280 = vmatpush.bf16.xpose.msra.mxu0 0
        %2281 = vmatpush.bf16.xpose.msra.mxu0 0
        %2282 = vmatpush.bf16.xpose.msra.mxu0 0
        %2283 = vmatpush.bf16.xpose.msra.mxu0 0
        %2284 = vmatpush.bf16.xpose.msra.mxu0 0
        %2285 = vmatpush.bf16.xpose.msra.mxu0 %v2276
        %2286 = vmatmul.bf16.gmra.mxu0 %v2273
        %v2287 = vpop.f32.mrf.mxu0
        %v2288 = vadd.f32 %v609, %v2287
        %v2289 = vpop.f32.mrf.mxu0
        %2290 = vdwg.mxu0
        %v2291 = vsel %vm694, %v2288, -inf
        %2292 = vmax.xlane.f32.xlu0 %v2291
        %v2293 = vpop.xlane.xlu0 %2292
        %v2294 = vsub.f32 %v2288, %v2293
        %v2295 = vmul.f32 %v2294, 1.442695
        %v2296 = vpow.pop %v2295
        %v2297 = vsel %vm694, %v2296, 0.0
        %2298 = vadd.xlane.f32.xlu0 %v2297
        %v2299 = vpop.xlane.xlu0 %2298
        %v2300 = vrcp.pop %v2299
        %v2301 = vmul.f32 %v2296, %v2300
        %v2302 = vpack.c.bf16 %v2301, %v2301
        %2303 = vrot.lane.b32.xlu0 %v2268, 64
        %v2304 = vpop.permute.xlu0 %2303
        %v2306 = vsel %vm694, %v2302, 0
        %v2309 = vsel %vm578, %v2304, 0
        %2311 = vmatpush.bf16.msra.mxu0 0
        %2312 = vmatpush.bf16.msra.mxu0 0
        %2313 = vmatpush.bf16.msra.mxu0 0
        %2314 = vmatpush.bf16.msra.mxu0 0
        %2315 = vmatpush.bf16.msra.mxu0 0
        %2316 = vmatpush.bf16.msra.mxu0 0
        %2317 = vmatpush.bf16.msra.mxu0 0
        %2318 = vmatpush.bf16.msra.mxu0 %v2309
        %2319 = vmatmul.bf16.gmra.mxu0 %v2306
        %v2320 = vpop.f32.mrf.mxu0
        %v2321 = vadd.f32 0.0, %v2320
        %v2322 = vpop.f32.mrf.mxu0
        %2323 = vdwg.mxu0
        %2325 = vrot.lane.b32.xlu0 %v2267, 120
        %v2326 = vpop.permute.xlu0 %2325
        %2327 = vrot.lane.b32.xlu0 %v2268, 88
        %v2328 = vpop.permute.xlu0 %2327
        %v2330 = vsel %vm694, %v2326, 0
        %v2333 = vsel %vm694, %v2328, 0
        %2335 = vmatpush.bf16.xpose.msra.mxu0 0
        %2336 = vmatpush.bf16.xpose.msra.mxu0 0
        %2337 = vmatpush.bf16.xpose.msra.mxu0 0
        %2338 = vmatpush.bf16.xpose.msra.mxu0 0
        %2339 = vmatpush.bf16.xpose.msra.mxu0 0
        %2340 = vmatpush.bf16.xpose.msra.mxu0 0
        %2341 = vmatpush.bf16.xpose.msra.mxu0 0
        %2342 = vmatpush.bf16.xpose.msra.mxu0 %v2333
        %2343 = vmatmul.bf16.gmra.mxu0 %v2330
        %v2344 = vpop.f32.mrf.mxu0
        %v2345 = vadd.f32 %v609, %v2344
        %v2346 = vpop.f32.mrf.mxu0
        %2347 = vdwg.mxu0
        %v2348 = vsel %vm694, %v2345, -inf
        %2349 = vmax.xlane.f32.xlu0 %v2348
        %v2350 = vpop.xlane.xlu0 %2349
        %v2351 = vsub.f32 %v2345, %v2350
        %v2352 = vmul.f32 %v2351, 1.442695
        %v2353 = vpow.pop %v2352
        %v2354 = vsel %vm694, %v2353, 0.0
        %2355 = vadd.xlane.f32.xlu0 %v2354
        %v2356 = vpop.xlane.xlu0 %2355
        %v2357 = vrcp.pop %v2356
        %v2358 = vmul.f32 %v2353, %v2357
        %v2359 = vpack.c.bf16 %v2358, %v2358
        %2360 = vrot.lane.b32.xlu0 %v2268, 56
        %v2361 = vpop.permute.xlu0 %2360
        %v2363 = vsel %vm694, %v2359, 0
        %v2366 = vsel %vm578, %v2361, 0
        %2368 = vmatpush.bf16.msra.mxu0 0
        %2369 = vmatpush.bf16.msra.mxu0 0
        %2370 = vmatpush.bf16.msra.mxu0 0
        %2371 = vmatpush.bf16.msra.mxu0 0
        %2372 = vmatpush.bf16.msra.mxu0 0
        %2373 = vmatpush.bf16.msra.mxu0 0
        %2374 = vmatpush.bf16.msra.mxu0 0
        %2375 = vmatpush.bf16.msra.mxu0 %v2366
        %2376 = vmatmul.bf16.gmra.mxu0 %v2363
        %v2377 = vpop.f32.mrf.mxu0
        %v2378 = vadd.f32 0.0, %v2377
        %v2379 = vpop.f32.mrf.mxu0
        %2380 = vdwg.mxu0
        %2381 = vrot.lane.b32.xlu0 %v2267, 112
        %v2382 = vpop.permute.xlu0 %2381
        %2383 = vrot.lane.b32.xlu0 %v2268, 80
        %v2384 = vpop.permute.xlu0 %2383
        %v2386 = vsel %vm694, %v2382, 0
        %v2389 = vsel %vm694, %v2384, 0
        %2391 = vmatpush.bf16.xpose.msra.mxu0 0
        %2392 = vmatpush.bf16.xpose.msra.mxu0 0
        %2393 = vmatpush.bf16.xpose.msra.mxu0 0
        %2394 = vmatpush.bf16.xpose.msra.mxu0 0
        %2395 = vmatpush.bf16.xpose.msra.mxu0 0
        %2396 = vmatpush.bf16.xpose.msra.mxu0 0
        %2397 = vmatpush.bf16.xpose.msra.mxu0 0
        %2398 = vmatpush.bf16.xpose.msra.mxu0 %v2389
        %2399 = vmatmul.bf16.gmra.mxu0 %v2386
        %v2400 = vpop.f32.mrf.mxu0
        %v2401 = vadd.f32 %v609, %v2400
        %v2402 = vpop.f32.mrf.mxu0
        %2403 = vdwg.mxu0
        %v2404 = vsel %vm694, %v2401, -inf
        %2405 = vmax.xlane.f32.xlu0 %v2404
        %v2406 = vpop.xlane.xlu0 %2405
        %v2407 = vsub.f32 %v2401, %v2406
        %v2408 = vmul.f32 %v2407, 1.442695
        %v2409 = vpow.pop %v2408
        %v2410 = vsel %vm694, %v2409, 0.0
        %2411 = vadd.xlane.f32.xlu0 %v2410
        %v2412 = vpop.xlane.xlu0 %2411
        %v2413 = vrcp.pop %v2412
        %v2414 = vmul.f32 %v2409, %v2413
        %v2415 = vpack.c.bf16 %v2414, %v2414
        %2416 = vrot.lane.b32.xlu0 %v2268, 48
        %v2417 = vpop.permute.xlu0 %2416
        %v2419 = vsel %vm694, %v2415, 0
        %v2422 = vsel %vm578, %v2417, 0
        %2424 = vmatpush.bf16.msra.mxu0 0
        %2425 = vmatpush.bf16.msra.mxu0 0
        %2426 = vmatpush.bf16.msra.mxu0 0
        %2427 = vmatpush.bf16.msra.mxu0 0
        %2428 = vmatpush.bf16.msra.mxu0 0
        %2429 = vmatpush.bf16.msra.mxu0 0
        %2430 = vmatpush.bf16.msra.mxu0 0
        %2431 = vmatpush.bf16.msra.mxu0 %v2422
        %2432 = vmatmul.bf16.gmra.mxu0 %v2419
        %v2433 = vpop.f32.mrf.mxu0
        %v2434 = vadd.f32 0.0, %v2433
        %v2435 = vpop.f32.mrf.mxu0
        %2436 = vdwg.mxu0
        %2437 = vrot.lane.b32.xlu0 %v2267, 104
        %v2438 = vpop.permute.xlu0 %2437
        %2439 = vrot.lane.b32.xlu0 %v2268, 72
        %v2440 = vpop.permute.xlu0 %2439
        %v2442 = vsel %vm694, %v2438, 0
        %v2445 = vsel %vm694, %v2440, 0
        %2447 = vmatpush.bf16.xpose.msra.mxu0 0
        %2448 = vmatpush.bf16.xpose.msra.mxu0 0
        %2449 = vmatpush.bf16.xpose.msra.mxu0 0
        %2450 = vmatpush.bf16.xpose.msra.mxu0 0
        %2451 = vmatpush.bf16.xpose.msra.mxu0 0
        %2452 = vmatpush.bf16.xpose.msra.mxu0 0
        %2453 = vmatpush.bf16.xpose.msra.mxu0 0
        %2454 = vmatpush.bf16.xpose.msra.mxu0 %v2445
        %2455 = vmatmul.bf16.gmra.mxu0 %v2442
        %v2456 = vpop.f32.mrf.mxu0
        %v2457 = vadd.f32 %v609, %v2456
        %v2458 = vpop.f32.mrf.mxu0
        %2459 = vdwg.mxu0
        %v2460 = vsel %vm694, %v2457, -inf
        %2461 = vmax.xlane.f32.xlu0 %v2460
        %v2462 = vpop.xlane.xlu0 %2461
        %v2463 = vsub.f32 %v2457, %v2462
        %v2464 = vmul.f32 %v2463, 1.442695
        %v2465 = vpow.pop %v2464
        %v2466 = vsel %vm694, %v2465, 0.0
        %2467 = vadd.xlane.f32.xlu0 %v2466
        %v2468 = vpop.xlane.xlu0 %2467
        %v2469 = vrcp.pop %v2468
        %v2470 = vmul.f32 %v2465, %v2469
        %v2471 = vpack.c.bf16 %v2470, %v2470
        %2472 = vrot.lane.b32.xlu0 %v2268, 40
        %v2473 = vpop.permute.xlu0 %2472
        %v2475 = vsel %vm694, %v2471, 0
        %v2478 = vsel %vm578, %v2473, 0
        %2480 = vmatpush.bf16.msra.mxu0 0
        %2481 = vmatpush.bf16.msra.mxu0 0
        %2482 = vmatpush.bf16.msra.mxu0 0
        %2483 = vmatpush.bf16.msra.mxu0 0
        %2484 = vmatpush.bf16.msra.mxu0 0
        %2485 = vmatpush.bf16.msra.mxu0 0
        %2486 = vmatpush.bf16.msra.mxu0 0
        %2487 = vmatpush.bf16.msra.mxu0 %v2478
        %2488 = vmatmul.bf16.gmra.mxu0 %v2475
        %v2489 = vpop.f32.mrf.mxu0
        %v2490 = vadd.f32 0.0, %v2489
        %v2491 = vpop.f32.mrf.mxu0
        %2492 = vdwg.mxu0
        %2494 = vrot.lane.b32.xlu0 %v2378, 8
        %v2495 = vpop.permute.xlu0 %2494
        %2498 = vrot.lane.b32.xlu0 %v2434, 16
        %v2499 = vpop.permute.xlu0 %2498
        %2502 = vrot.lane.b32.xlu0 %v2490, 24
        %v2503 = vpop.permute.xlu0 %2502
        %v2505 = vsel %vm694, %v2321, %v2495
        %v2506 = vsel %vm929, %v2505, %v2499
        %v2507 = vsel %vm931, %v2506, %v2503
        %v2508 = vpack.c.bf16 %v2507, %v2507
        %v2509 = vld [vmem:[%s1448] sm:$0xf]
        %v2510 = vld [vmem:[%s1448 + $0x4] sm:$0xf]
        %v2511 = vld [vmem:[%s1448 + $0x8] sm:$0xf]
        %v2512 = vld [vmem:[%s1448 + $0xc] sm:$0xf]
        %v2513 = vld [vmem:[%s1453] sm:$0x1]
        %v2515 = vperm.slane %v2513, 0
        %v2521 = vunpack.c.l.b16 %v2509
        %v2522 = vunpack.c.l.b16 %v2510
        %v2523 = vunpack.c.l.b16 %v2511
        %v2524 = vunpack.c.l.b16 %v2512
        %v2525 = vpack.c.b16 %v2522, %v2521
        %v2526 = vpack.c.b16 %v2524, %v2523
        %v2530 = vsel %vm613, %v2508, 0
        %2532 = vmatpush.bf16.msra.mxu0 0
        %2533 = vmatpush.bf16.msra.mxu0 0
        %2534 = vmatpush.bf16.msra.mxu0 0
        %2535 = vmatpush.bf16.msra.mxu0 0
        %2536 = vmatpush.bf16.msra.mxu0 0
        %2537 = vmatpush.bf16.msra.mxu0 0
        %2538 = vmatpush.bf16.msra.mxu0 %v2526
        %2539 = vmatpush.bf16.msra.mxu0 %v2525
        %2540 = vmatmul.bf16.gmra.mxu0 %v2530
        %v2541 = vpop.f32.mrf.mxu0
        %v2542 = vadd.f32 %v2515, %v2541
        %v2543 = vpop.f32.mrf.mxu0
        %2544 = vdwg.mxu0
        %v2545 = vadd.f32 %v2196, %v2542
        %v2546 = vld [vmem:[%s1487] sm:$0x1]
        %v2547 = vld [vmem:[%s1489] sm:$0x1]
        %v2548 = vsel %vm613, %v2545, 0.0
        %2549 = vadd.xlane.f32.xlu0 %v2548
        %v2550 = vpop.xlane.xlu0 %2549
        %v2551 = vmul.f32 %v2550, %v623
        %v2552 = vsub.f32 %v2545, %v2551
        %v2553 = vmul.f32 %v2552, %v2552
        %v2554 = vsel %vm613, %v2553, 0.0
        %2555 = vadd.xlane.f32.xlu0 %v2554
        %v2556 = vpop.xlane.xlu0 %2555
        %v2557 = vmul.f32 %v2556, %v623
        %v2558 = vadd.f32 %v2557, 1e-05
        %v2559 = vrsqrt.pop %v2558
        %v2560 = vmul.f32 %v2559, %v2558
        %v2561 = vmul.f32 %v2560, %v2559
        %v2562 = vmul.f32 0.5, %v2561
        %v2563 = vsub.f32 1.5, %v2562
        %v2564 = vmul.f32 %v2559, %v2563
        %vm2565 = vweird.f32 %v2558
        %vm2566 = vweird.f32 %v2559
        %vm2567 = vmor %vm2565, %vm2566
        %v2568 = vsel %vm2567, %v2559, %v2564
        %v2569 = vmul.f32 %v2552, %v2568
        %v2571 = vperm.slane %v2546, 0
        %v2573 = vmul.f32 %v2569, %v2571
        %v2575 = vperm.slane %v2547, 0
        %v2577 = vadd.f32 %v2573, %v2575
        %v2578 = vpack.c.bf16 %v2577, %v2577
        %v2579 = vld [vmem:[%s1522] sm:$0xf]
        %v2580 = vld [vmem:[%s1522 + $0x4] sm:$0xf]
        %v2581 = vld [vmem:[%s1522 + $0x8] sm:$0xf]
        %v2582 = vld [vmem:[%s1522 + $0xc] sm:$0xf]
        %v2583 = vld [vmem:[%s1527] sm:$0x1]
        %v2585 = vperm.slane %v2583, 0
        %v2591 = vunpack.c.l.b16 %v2579
        %v2592 = vunpack.c.l.b16 %v2580
        %v2593 = vunpack.c.l.b16 %v2581
        %v2594 = vunpack.c.l.b16 %v2582
        %v2595 = vpack.c.b16 %v2592, %v2591
        %v2596 = vpack.c.b16 %v2594, %v2593
        %v2600 = vsel %vm613, %v2578, 0
        %2602 = vmatpush.bf16.msra.mxu0 0
        %2603 = vmatpush.bf16.msra.mxu0 0
        %2604 = vmatpush.bf16.msra.mxu0 0
        %2605 = vmatpush.bf16.msra.mxu0 0
        %2606 = vmatpush.bf16.msra.mxu0 0
        %2607 = vmatpush.bf16.msra.mxu0 0
        %2608 = vmatpush.bf16.msra.mxu0 %v2596
        %2609 = vmatpush.bf16.msra.mxu0 %v2595
        %2610 = vmatmul.bf16.gmra.mxu0 %v2600
        %v2611 = vpop.f32.mrf.mxu0
        %v2612 = vadd.f32 %v2585, %v2611
        %v2613 = vpop.f32.mrf.mxu0
        %2614 = vdwg.mxu0
        %v2615 = vmul.f32 %v2612, %v2612
        %v2616 = vmul.f32 %v2612, %v2615
        %v2617 = vmul.f32 %v2616, 0.044715
        %v2618 = vadd.f32 %v2612, %v2617
        %v2619 = vmul.f32 %v2618, 0.7978846
        %v2620 = vtanh.pop %v2619
        %v2621 = vadd.f32 %v2620, 1.0
        %v2622 = vmul.f32 %v2621, 0.5
        %v2623 = vmul.f32 %v2612, %v2622
        %v2624 = vpack.c.bf16 %v2623, %v2623
        %v2625 = vld [vmem:[%s1570] sm:$0xf]
        %v2626 = vld [vmem:[%s1570 + $0x4] sm:$0xf]
        %v2627 = vld [vmem:[%s1570 + $0x8] sm:$0xf]
        %v2628 = vld [vmem:[%s1570 + $0xc] sm:$0xf]
        %v2629 = vld [vmem:[%s1570 + $0x10] sm:$0xf]
        %v2630 = vld [vmem:[%s1570 + $0x14] sm:$0xf]
        %v2631 = vld [vmem:[%s1570 + $0x18] sm:$0xf]
        %v2632 = vld [vmem:[%s1570 + $0x1c] sm:$0xf]
        %v2633 = vld [vmem:[%s1570 + $0x20] sm:$0xf]
        %v2634 = vld [vmem:[%s1570 + $0x24] sm:$0xf]
        %v2635 = vld [vmem:[%s1570 + $0x28] sm:$0xf]
        %v2636 = vld [vmem:[%s1570 + $0x2c] sm:$0xf]
        %v2637 = vld [vmem:[%s1570 + $0x30] sm:$0xf]
        %v2638 = vld [vmem:[%s1570 + $0x34] sm:$0xf]
        %v2639 = vld [vmem:[%s1570 + $0x38] sm:$0xf]
        %v2640 = vld [vmem:[%s1570 + $0x3c] sm:$0xf]
        %v2641 = vld [vmem:[%s1587] sm:$0x1]
        %v2643 = vperm.slane %v2641, 0
        %v2661 = vunpack.c.l.b16 %v2625
        %v2662 = vunpack.c.l.b16 %v2626
        %v2663 = vunpack.c.l.b16 %v2627
        %v2664 = vunpack.c.l.b16 %v2628
        %v2665 = vunpack.c.l.b16 %v2629
        %v2666 = vunpack.c.l.b16 %v2630
        %v2667 = vunpack.c.l.b16 %v2631
        %v2668 = vunpack.c.l.b16 %v2632
        %v2669 = vunpack.c.l.b16 %v2633
        %v2670 = vunpack.c.l.b16 %v2634
        %v2671 = vunpack.c.l.b16 %v2635
        %v2672 = vunpack.c.l.b16 %v2636
        %v2673 = vunpack.c.l.b16 %v2637
        %v2674 = vunpack.c.l.b16 %v2638
        %v2675 = vunpack.c.l.b16 %v2639
        %v2676 = vunpack.c.l.b16 %v2640
        %v2677 = vpack.c.b16 %v2662, %v2661
        %v2678 = vpack.c.b16 %v2664, %v2663
        %v2679 = vpack.c.b16 %v2666, %v2665
        %v2680 = vpack.c.b16 %v2668, %v2667
        %v2681 = vpack.c.b16 %v2670, %v2669
        %v2682 = vpack.c.b16 %v2672, %v2671
        %v2683 = vpack.c.b16 %v2674, %v2673
        %v2684 = vpack.c.b16 %v2676, %v2675
        %2693 = vmatpush.bf16.msra.mxu0 %v2684
        %2694 = vmatpush.bf16.msra.mxu0 %v2683
        %2695 = vmatpush.bf16.msra.mxu0 %v2682
        %2696 = vmatpush.bf16.msra.mxu0 %v2681
        %2697 = vmatpush.bf16.msra.mxu0 %v2680
        %2698 = vmatpush.bf16.msra.mxu0 %v2679
        %2699 = vmatpush.bf16.msra.mxu0 %v2678
        %2700 = vmatpush.bf16.msra.mxu0 %v2677
        %2701 = vmatmul.bf16.gmra.mxu0 %v2624
        %v2702 = vpop.f32.mrf.mxu0
        %v2703 = vadd.f32 %v2643, %v2702
        %v2704 = vpop.f32.mrf.mxu0
        %2705 = vdwg.mxu0
        %v2706 = vadd.f32 %v2545, %v2703
        %v2707 = vld [vmem:[%s16] sm:$0xff]
        %v2708 = vld [vmem:[%s16 + $0x8] sm:$0xff]
        %v2709 = vld [vmem:[%s16 + $0x10] sm:$0xff]
        %v2710 = vld [vmem:[%s16 + $0x18] sm:$0xff]
        %v2711 = vld [vmem:[%s17] sm:$0x1]
        %v2713 = vperm.slane %v2711, 0
        %v2716 = vsel %vm613, %v2706, 0
        %2718 = vmatpush.msra.mxu0 0.0
        %2719 = vmatpush.msra.mxu0 0.0
        %2720 = vmatpush.msra.mxu0 0.0
        %2721 = vmatpush.msra.mxu0 0.0
        %2722 = vmatpush.msra.mxu0 0.0
        %2723 = vmatpush.msra.mxu0 0.0
        %2724 = vmatpush.msra.mxu0 0.0
        %2725 = vmatpush.msra.mxu0 0.0
        %2726 = vmatpush.msra.mxu0 0.0
        %2727 = vmatpush.msra.mxu0 0.0
        %2728 = vmatpush.msra.mxu0 0.0
        %2729 = vmatpush.msra.mxu0 0.0
        %2730 = vmatpush.msra.mxu0 %v2710
        %2731 = vmatpush.msra.mxu0 %v2709
        %2732 = vmatpush.msra.mxu0 %v2708
        %2733 = vmatpush.msra.mxu0 %v2707
        %2734 = vmatmul.f32.gmra.mxu0 %v2716
        %v2735 = vpop.f32.mrf.mxu0
        %v2736 = vadd.f32 %v2713, %v2735
        %2737 = vdwg.mxu0
        %s2738 = scalar_lea.vmem %s562, 8 [#allocation2]
        %2739 = vst.msk [vmem:[%s2738] sm:$0xff] %vm574, %v2736
        %s2740 = sand.u32 %s420, 1
        %s2741 = sand.u32 %s420, 1
        %s2742 = smul.addr %s2741, 16
        %s2743 = scalar_lea.vmem [#allocation2], %s2742
        // Predicated region
        $region93: #{transformer_forward.1} parent=91 // pred_check
          %p2744 = pneg %p430
        $region94: #{transformer_forward.1} parent=91 // pred_check_branch
          %2746 = sbr.rel (%p2744) target = $region96
        $region95: #{transformer_forward.1} parent=91 // pred_region
          %s2747 = smul.addr %s29, 8
          %s2748 = scalar_lea.vmem %s18, %s2747
          // Predicated region
          $region97: #{transformer_forward.1} parent=95 // pred_check
            _
          $region98: #{transformer_forward.1} parent=95 // pred_check_branch
            %2750 = sbr.rel (0) target = $region100
          $region99: #{transformer_forward.1} parent=95 // pred_region
            // Predicated region
            $region101: #{transformer_forward.1} parent=99 // pred_check
              _
            $region102: #{transformer_forward.1} parent=99 // pred_check_branch
              %2752 = sbr.rel (0) target = $region104
            $region103: #{transformer_forward.1} parent=99 // pred_region
              // Predicated region
              $region116: #{transformer_forward.1} parent=103 // pred_check
                _
              $region117: #{transformer_forward.1} parent=103 // pred_check_branch
                %2770 = sbr.rel (0) target = $region119
              $region118: #{transformer_forward.1} parent=103 // pred_region
                loop: start=0, step=1, limit=1
                $region120: #{transformer_forward.1} parent=118 // loop_pre_header
                  _
                $region121: #{transformer_forward.1} parent=118 // loop_header
                  %s2772 = sphi 0, %s2776
                  %p2773 = scmp.ge.s32.totalorder %s2772, 1
                  %s2777 = sphi %s2743, %s2743
                  %s2778 = sphi %s2748, %s2748
                $region122: #{transformer_forward.1} parent=118 // loop_header_branch
                  %2775 = sbr.rel (%p2773) target = $region126
                $region123: #{transformer_forward.1} parent=118 // loop_body
                  %v2779 = vld [vmem:[%s2777] sm:$0xff]
                  %2780 = vst [vmem:[%s2778] sm:$0xff] %v2779
                  %v2781 = vld [vmem:[%s2777 + $0x8] sm:$0xff]
                  %2782 = vst [vmem:[%s2778 + $0x10] sm:$0xff] %v2781
                $region124: #{transformer_forward.1} parent=118 // loop_footer
                  %s2776 = sadd.s32 1, %s2772
                $region125: #{transformer_forward.1} parent=118 // loop_footer_branch
                  %2771 = sbr.rel target = $region121
                $region126: #{transformer_forward.1} parent=118 // loop_exit
                  _
              $region119: #{transformer_forward.1} parent=103 // pred_fallthru
                _
              // Predicated region
              $region127: #{transformer_forward.1} parent=103 // pred_check
                _
              $region128: #{transformer_forward.1} parent=103 // pred_check_branch
                %2784 = sbr.rel target = $region130
              $region129: #{transformer_forward.1} parent=103 // pred_region
                _
              $region130: #{transformer_forward.1} parent=103 // pred_fallthru
                _
            $region104: #{transformer_forward.1} parent=99 // pred_fallthru
              _
            // Predicated region
            $region105: #{transformer_forward.1} parent=99 // pred_check
              _
            $region106: #{transformer_forward.1} parent=99 // pred_check_branch
              %2754 = sbr.rel target = $region108
            $region107: #{transformer_forward.1} parent=99 // pred_region
              %s2756 = ssub.s32 256, 1
              loop: start=0, step=1, limit=1
              $region109: #{transformer_forward.1} parent=107 // loop_pre_header
                _
              $region110: #{transformer_forward.1} parent=107 // loop_header
                %s2758 = sphi 0, %s2762
                %p2759 = scmp.ge.s32.totalorder %s2758, 1
                %s2763 = sphi %s2743, %s2743
                %s2764 = sphi %s2748, %s2748
              $region111: #{transformer_forward.1} parent=107 // loop_header_branch
                %2761 = sbr.rel (%p2759) target = $region115
              $region112: #{transformer_forward.1} parent=107 // loop_body
                %v2765 = vld [vmem:[%s2763] sm:%s2756]
                %2766 = vst [vmem:[%s2764] sm:%s2756] %v2765
                %v2767 = vld [vmem:[%s2763 + $0x8] sm:%s2756]
                %2768 = vst [vmem:[%s2764 + $0x10] sm:%s2756] %v2767
              $region113: #{transformer_forward.1} parent=107 // loop_footer
                %s2762 = sadd.s32 1, %s2758
              $region114: #{transformer_forward.1} parent=107 // loop_footer_branch
                %2757 = sbr.rel target = $region110
              $region115: #{transformer_forward.1} parent=107 // loop_exit
                _
            $region108: #{transformer_forward.1} parent=99 // pred_fallthru
              _
          $region100: #{transformer_forward.1} parent=95 // pred_fallthru
            _
          %2785 = vnop
        $region96: #{transformer_forward.1} parent=91 // pred_fallthru
          _
      $region92: #{transformer_forward.1} parent=5 // pred_fallthru
        _
      %p2786 = scmp.le.s32.totalorder 2, %s24
      // Predicated region
      $region131: #{transformer_forward.1} parent=5 // pred_check
        %p2787 = pneg %p2786
      $region132: #{transformer_forward.1} parent=5 // pred_check_branch
        %2789 = sbr.rel (%p2787) target = $region134
      $region133: #{transformer_forward.1} parent=5 // pred_region
        %s2790 = ssub.s32 %s24, 2
        // Predicated region
        $region135: #{transformer_forward.1} parent=133 // pred_check
          %p2791 = pneg %p436
        $region136: #{transformer_forward.1} parent=133 // pred_check_branch
          %2793 = sbr.rel (%p2791) target = $region138
        $region137: #{transformer_forward.1} parent=133 // pred_region
          %s2794 = sand.u32 %s421, 1
          %s2795 = sand.u32 %s421, 1
          %s2796 = smul.addr %s2795, 16
          %s2797 = scalar_lea.vmem [#allocation2], %s2796
        $region138: #{transformer_forward.1} parent=133 // pred_fallthru
          _
      $region134: #{transformer_forward.1} parent=5 // pred_fallthru
        _
    $region6: #{transformer_forward.1} parent=1 // loop_footer
      %s28 = sadd.s32 1, %s24
    $region7: #{transformer_forward.1} parent=1 // loop_footer_branch
      %23 = sbr.rel target = $region3
    $region8: #{transformer_forward.1} parent=1 // loop_exit
      _

</llo_original>
